<compile_context>
chip_gen: v6e
topology: v6e:2x2x1
jax: 0.10.0
libtpu: 0.0.40
codegen_flags: <defaults>
</compile_context>

<pallas_src>
import numpy as np

import jax
import jax.numpy as jnp
from jax import lax
from jax.experimental import pallas as pl
from jax.experimental.pallas import tpu as pltpu

NEG_SLOPE = 0.2   # ReLU(0.2) == LeakyReLU(0.2)
KSIZE = 4


def _leaky(v):
    return jnp.where(v > 0, v, NEG_SLOPE * v)


def _refl(idx, n):
    """Reflection-pad(1) index map: padded index in [0, n+2) -> source index in [0, n)."""
    i = idx - 1
    if i < 0:
        i = -i
    if i > n - 1:
        i = 2 * (n - 1) - i
    return i


def _vmem_spec():
    return pl.BlockSpec(memory_space=pltpu.MemorySpace.VMEM)


# --------------------------------------------------------------------------------
# Single fused Pallas kernel: enc1 -> enc2 -> CAM -> (folded reweight + 1x1) -> conv.
# Everything is (C-or-K in sublanes) x (pixels*batch in lanes); conv windows are
# assembled with lane slices + concatenation only (no masked stores, no scratch).
# --------------------------------------------------------------------------------
def _make_kernel(B, C, Hh, Wh):
    Ho1, Wo1 = Hh - 1, Wh - 1            # encoder stage-1 output spatial dims
    Ho2, Wo2 = Ho1 // 2, Wo1 // 2        # encoder stage-2 output spatial dims
    Ho3, Wo3 = Ho2 - 1, Wo2 - 1          # final conv output spatial dims
    M1, M2, M3 = Ho1 * Wo1 * B, Ho2 * Wo2 * B, Ho3 * Wo3 * B

    def kernel(xp_ref, w1_ref, b1_ref, w2_ref, b2_ref,
               gapw_sn_ref, gapb_ref, gmpw_sn_ref, gmpb_ref,
               gapw_ref, gmpw_ref, w1x1_ref, b1x1_ref, w3_ref, b3_ref,
               out_ref, cam_ref, heat_ref):
        # ---------------- enc1: ReflectionPad(1) + SN-Conv4x4 stride 2 + LeakyReLU --
        # xp_ref[(rh*2+rw)*Hh + p, c, q*B + b] = x_pad[b, 2p+rh, 2q+rw, c]
        # so every stride-2 tap window is a contiguous lane slice of one row plane.
        pieces = [None] * (KSIZE * KSIZE)
        for rh in range(2):
            for rw in range(2):
                base = (rh * 2 + rw) * Hh
                rows = [xp_ref[base + r] for r in range(Hh)]         # (C, Wh*B) f32
                for qh in range(2):
                    for qw in range(2):
                        kh, kw = 2 * qh + rh, 2 * qw + rw
                        pieces[kh * KSIZE + kw] = jnp.concatenate(
                            [rows[qh + i][:, qw * B:(qw + Wo1) * B]
                             for i in range(Ho1)], axis=-1)          # (C, M1)
        col1 = jnp.concatenate(pieces, axis=0).astype(jnp.bfloat16)  # (K, M1)
        a1 = jnp.dot(w1_ref[...], col1, preferred_element_type=jnp.float32)
        a1 = _leaky(a1 + b1_ref[...])                                # (C, M1) f32

        # ---------------- enc2: ReflectionPad(1) + SN-Conv4x4 stride 2 + LeakyReLU --
        # Build reflection-padded rows of a1, column-parity decomposed so each
        # stride-2 tap is again a contiguous lane slice.
        nb1 = Wo1 * B
        prow2 = []
        for r in range(Ho1 + 2):
            row = a1[:, _refl(r, Ho1) * nb1:(_refl(r, Ho1) + 1) * nb1]     # (C, Wo1*B)
            par = []
            for rw in range(2):
                par.append(jnp.concatenate(
                    [row[:, _refl(2 * q + rw, Wo1) * B:_refl(2 * q + rw, Wo1) * B + B]
                     for q in range((Wo1 + 2) // 2)], axis=-1))            # (C, (Wo1+2)//2*B)
            prow2.append(par)
        pieces = [None] * (KSIZE * KSIZE)
        for kh in range(KSIZE):
            for kw in range(KSIZE):
                qw = kw // 2
                pieces[kh * KSIZE + kw] = jnp.concatenate(
                    [prow2[2 * i + kh][kw % 2][:, qw * B:(qw + Wo2) * B]
                     for i in range(Ho2)], axis=-1)                        # (C, M2)
        col2 = jnp.concatenate(pieces, axis=0).astype(jnp.bfloat16)        # (K, M2)
        a2 = jnp.dot(w2_ref[...], col2, preferred_element_type=jnp.float32)
        a2 = _leaky(a2 + b2_ref[...])                                      # (C, M2) f32

        # ---------------- CAM: global avg/max pool + spectral-normed FC logits ------
        gap = a2[:, 0:B]
        gmp = a2[:, 0:B]
        for m in range(1, Ho2 * Wo2):
            blk = a2[:, m * B:(m + 1) * B]                                 # (C, B)
            gap = gap + blk
            gmp = jnp.maximum(gmp, blk)
        gap = gap * (1.0 / (Ho2 * Wo2))                                    # (C, B)
        gap_logit = jnp.sum(gapw_sn_ref[...] * gap, axis=0, keepdims=True) + gapb_ref[...]
        gmp_logit = jnp.sum(gmpw_sn_ref[...] * gmp, axis=0, keepdims=True) + gmpb_ref[...]
        cam_ref[...] = jnp.concatenate([gap_logit, gmp_logit], axis=0)     # (2, B)

        # ---------------- CAM reweight + channel concat + 1x1 conv, folded ----------
        # y = W1[:, :C] @ (gap_w*x) + W1[:, C:] @ (gmp_w*x) + b
        #   = (W1[:, :C]*gap_w + W1[:, C:]*gmp_w) @ x + b
        wcam = (w1x1_ref[:, 0:C] * gapw_ref[...]
                + w1x1_ref[:, C:2 * C] * gmpw_ref[...])                    # (C, C)
        y = jnp.dot(wcam, a2, preferred_element_type=jnp.float32) + b1x1_ref[...]
        y = _leaky(y)                                                      # (C, M2)

        # heatmap = channel sum (sublane reduction; lanes stay dense)
        heat_ref[...] = jnp.sum(y, axis=0, keepdims=True)                  # (1, M2)

        # ---------------- final: ReflectionPad(1) + SN-Conv4x4 stride 1 -------------
        nb2 = Wo2 * B
        prow3 = []
        for r in range(Ho2 + 2):
            row = y[:, _refl(r, Ho2) * nb2:(_refl(r, Ho2) + 1) * nb2]      # (C, Wo2*B)
            prow3.append(jnp.concatenate(
                [row[:, _refl(s, Wo2) * B:_refl(s, Wo2) * B + B]
                 for s in range(Wo2 + 2)], axis=-1))                       # (C, (Wo2+2)*B)
        pieces = [None] * (KSIZE * KSIZE)
        for kh in range(KSIZE):
            for kw in range(KSIZE):
                pieces[kh * KSIZE + kw] = jnp.concatenate(
                    [prow3[i + kh][:, kw * B:(kw + Wo3) * B] for i in range(Ho3)],
                    axis=-1)                                               # (C, M3)
        col3 = jnp.concatenate(pieces, axis=0).astype(jnp.bfloat16)        # (K, M3)
        # Cout = 1: single MXU matmul (1,K) @ (K,M3) instead of a cross-lane reduce.
        out_ref[...] = (jnp.dot(w3_ref[...], col3, preferred_element_type=jnp.float32)
                        + b3_ref[...])                                     # (1, M3)

    return kernel


# --------------------------------- parameters ------------------------------------

def _spectral_normalize(w_mat):
    # Inference-time spectral norm: divide by the exact largest singular value.
    sigma = float(np.linalg.svd(np.asarray(w_mat), compute_uv=False)[0])
    return w_mat / jnp.float32(sigma)


def _conv_param(key, cin, cout, k, spectral):
    kw_, kb_ = jax.random.split(key)
    w = jax.random.normal(kw_, (cout, cin, k, k), jnp.float32) * 0.1       # PyTorch OIHW
    b = jax.random.normal(kb_, (cout,), jnp.float32) * 0.1
    # (Co,Ci,kh,kw) -> (Co, kh, kw, Ci) -> (Co, k*k*Ci): MXU LHS rows = Cout,
    # columns in the same (tap, ci) order as the in-kernel (K, M) col rows.
    w_mat = jnp.transpose(w, (0, 2, 3, 1)).reshape(cout, k * k * cin)
    if spectral:
        w_mat = _spectral_normalize(w_mat)
    return w_mat, b.reshape(cout, 1)


def init_params(key, nch_in=8, nch_ker=8):
    assert nch_in == nch_ker, "module wiring requires nch_in == nch_ker (n_layers == 2)"
    C = nch_ker
    keys = jax.random.split(key, 6)
    p = {}
    p["enc1_w"], p["enc1_b"] = _conv_param(keys[0], nch_in, C, KSIZE, spectral=True)
    p["enc2_w"], p["enc2_b"] = _conv_param(keys[1], nch_in, C, KSIZE, spectral=True)
    # gap_fc / gmp_fc: spectral_norm(Linear(C, 1)); raw weight drives the CAM
    # reweighting (UGATIT semantics), normalized weight drives the logits.
    kw_, kb_ = jax.random.split(keys[2])
    gap_w = jax.random.normal(kw_, (1, C), jnp.float32) * 0.1
    p["gap_w"], p["gap_w_sn"] = gap_w, _spectral_normalize(gap_w)
    p["gap_b"] = (jax.random.normal(kb_, (1,), jnp.float32) * 0.1).reshape(1, 1)
    kw_, kb_ = jax.random.split(keys[3])
    gmp_w = jax.random.normal(kw_, (1, C), jnp.float32) * 0.1
    p["gmp_w"], p["gmp_w_sn"] = gmp_w, _spectral_normalize(gmp_w)
    p["gmp_b"] = (jax.random.normal(kb_, (1,), jnp.float32) * 0.1).reshape(1, 1)
    # conv1x1 (custom Conv2d wrapper == plain conv with bias): stored (Cout, Cin=2C).
    kw_, kb_ = jax.random.split(keys[4])
    p["c1x1_w"] = jax.random.normal(kw_, (C, 2 * C), jnp.float32) * 0.1
    p["c1x1_b"] = (jax.random.normal(kb_, (C,), jnp.float32) * 0.1).reshape(C, 1)
    # final spectral_norm(Conv2d(C, 1, k=4, s=1))
    p["out_w"], p["out_b"] = _conv_param(keys[5], C, 1, KSIZE, spectral=True)
    return p


# ----------------------------------- forward -------------------------------------

def discriminator_forward(params, x_nchw):
    B, Cin, H, W = x_nchw.shape
    C = params["enc1_w"].shape[0]
    assert Cin == C, "module wiring requires nch_in == nch_ker"
    assert H % 4 == 0 and W % 4 == 0 and H >= 8 and W >= 8

    Hh, Wh = (H + 2) // 2, (W + 2) // 2
    Ho1, Wo1 = Hh - 1, Wh - 1
    Ho2, Wo2 = Ho1 // 2, Wo1 // 2
    Ho3, Wo3 = Ho2 - 1, Wo2 - 1
    M1, M2, M3 = Ho1 * Wo1 * B, Ho2 * Wo2 * B, Ho3 * Wo3 * B
    K = KSIZE * KSIZE * C

    # Input prep only: NCHW -> channels-first parity slabs so every stride-2 conv tap
    # is a contiguous lane slice in-kernel.  Lanes hold (column, batch).
    # TODO(synk): at real image sizes fold this pad/parity transform into the kernel
    # (or a producer kernel) to avoid the extra HBM pass over the input.
    x = jnp.transpose(x_nchw, (0, 2, 3, 1)).astype(jnp.float32)            # (B,H,W,C)
    xpad = jnp.pad(x, ((0, 0), (1, 1), (1, 1), (0, 0)), mode="reflect")    # (B,H+2,W+2,C)
    xp = xpad.reshape(B, Hh, 2, Wh, 2, C)
    xp = jnp.transpose(xp, (2, 4, 1, 5, 3, 0))                             # (rh,rw,p,c,q,b)
    xp = xp.reshape(4 * Hh, C, Wh * B)

    kernel = _make_kernel(B, C, Hh, Wh)

    flops = 2 * (C * K * M1 + C * K * M2 + C * C * M2 + K * M3)
    bytes_accessed = int(xp.size * 4 + (2 * C * K + K) * 2 + (2 * C * C + 6 * C + 4) * 4
                         + (M3 + 2 * B + M2) * 4)

    out_flat, cam, heat = pl.pallas_call(
        kernel,
        out_shape=(jax.ShapeDtypeStruct((1, M3), jnp.float32),   # final conv, lanes (ho,wo,b)
                   jax.ShapeDtypeStruct((2, B), jnp.float32),    # [gap;gmp] logits
                   jax.ShapeDtypeStruct((1, M2), jnp.float32)),  # heatmap, lanes (ho,wo,b)
        in_specs=[_vmem_spec() for _ in range(15)],
        out_specs=(_vmem_spec(), _vmem_spec(), _vmem_spec()),
        compiler_params=pltpu.CompilerParams(vmem_limit_bytes=32 * 1024 * 1024),
        cost_estimate=pl.CostEstimate(flops=flops, transcendentals=0,
                                      bytes_accessed=bytes_accessed),
    )(xp,
      params["enc1_w"].astype(jnp.bfloat16), params["enc1_b"],
      params["enc2_w"].astype(jnp.bfloat16), params["enc2_b"],
      params["gap_w_sn"].reshape(C, 1), params["gap_b"],
      params["gmp_w_sn"].reshape(C, 1), params["gmp_b"],
      params["gap_w"], params["gmp_w"],
      params["c1x1_w"], params["c1x1_b"],
      params["out_w"].astype(jnp.bfloat16), params["out_b"])

    # Un-permute the tiny lane-dense outputs (kernel lane order is (ho, wo, b)).
    out = jnp.transpose(out_flat.reshape(Ho3, Wo3, B), (2, 0, 1))[:, None, :, :]
    heatmap = jnp.transpose(heat.reshape(Ho2, Wo2, B), (2, 0, 1))[:, None, :, :]
    cam_logit = jnp.transpose(cam, (1, 0))                                 # (B, 2)
    return out, cam_logit, heatmap


# ------------------------ pure-JAX reference (correctness check) ------------------

def reference_forward(params, x_nchw):
    C = params["enc1_b"].shape[0]

    def conv_refl(x, w_mat, b, stride):
        cout = w_mat.shape[0]
        cin = w_mat.shape[1] // (KSIZE * KSIZE)
        w = jnp.transpose(w_mat.reshape(cout, KSIZE, KSIZE, cin), (0, 3, 1, 2))
        xp = jnp.pad(x, ((0, 0), (0, 0), (1, 1), (1, 1)), mode="reflect")
        y = lax.conv_general_dilated(xp, w, (stride, stride), "VALID",
                                     dimension_numbers=("NCHW", "OIHW", "NCHW"),
                                     precision=lax.Precision.HIGHEST)
        return y + b.reshape(1, cout, 1, 1)

    x = x_nchw.astype(jnp.float32)
    h = _leaky(conv_refl(x, params["enc1_w"], params["enc1_b"], 2))
    h = _leaky(conv_refl(h, params["enc2_w"], params["enc2_b"], 2))
    gap = jnp.mean(h, axis=(2, 3))
    gmp = jnp.max(h, axis=(2, 3))
    gap_logit = gap @ params["gap_w_sn"].T + params["gap_b"]
    gmp_logit = gmp @ params["gmp_w_sn"].T + params["gmp_b"]
    cam_logit = jnp.concatenate([gap_logit, gmp_logit], axis=1)
    z = jnp.concatenate([h * params["gap_w"].reshape(1, C, 1, 1),
                         h * params["gmp_w"].reshape(1, C, 1, 1)], axis=1)
    y = jnp.einsum("bchw,dc->bdhw", z, params["c1x1_w"], precision=lax.Precision.HIGHEST)
    y = _leaky(y + params["c1x1_b"].reshape(1, C, 1, 1))
    heatmap = jnp.sum(y, axis=1, keepdims=True)
    out = conv_refl(y, params["out_w"], params["out_b"], 1)
    return out, cam_logit, heatmap


if __name__ == "__main__":
    key = jax.random.PRNGKey(0)
    pkey, xkey = jax.random.split(key)
    NCH_IN = NCH_KER = 8        # nch_in == nch_ker required by the module's wiring
    B, H, W = 2, 16, 16
    params = init_params(pkey, NCH_IN, NCH_KER)
    x = jax.random.normal(xkey, (B, NCH_IN, H, W), jnp.float32)   # NCHW, like PyTorch

    fwd = jax.jit(discriminator_forward)
    out, cam_logit, heatmap = fwd(params, x)
    jax.block_until_ready((out, cam_logit, heatmap))

    assert out.shape == (B, 1, 3, 3), out.shape
    assert cam_logit.shape == (B, 2), cam_logit.shape
    assert heatmap.shape == (B, 1, 4, 4), heatmap.shape
    assert bool(jnp.all(jnp.isfinite(out)))

    ref_out, ref_cam, ref_heat = jax.jit(reference_forward)(params, x)
    np.testing.assert_allclose(np.asarray(out), np.asarray(ref_out), rtol=2e-2, atol=2e-2)
    np.testing.assert_allclose(np.asarray(cam_logit), np.asarray(ref_cam), rtol=2e-2, atol=2e-2)
    np.testing.assert_allclose(np.asarray(heatmap), np.asarray(ref_heat), rtol=2e-2, atol=2e-2)

    print("KERNEL_OK")
</pallas_src>

<mosaic_0001>
module attributes {stable_mosaic.version = 11 : i64} {
  func.func @kernel(%arg0: memref<36x8x18xf32, #tpu.memory_space<vmem>>, %arg1: memref<8x128xbf16, #tpu.memory_space<vmem>>, %arg2: memref<8x1xf32, #tpu.memory_space<vmem>>, %arg3: memref<8x128xbf16, #tpu.memory_space<vmem>>, %arg4: memref<8x1xf32, #tpu.memory_space<vmem>>, %arg5: memref<8x1xf32, #tpu.memory_space<vmem>>, %arg6: memref<1x1xf32, #tpu.memory_space<vmem>>, %arg7: memref<8x1xf32, #tpu.memory_space<vmem>>, %arg8: memref<1x1xf32, #tpu.memory_space<vmem>>, %arg9: memref<1x8xf32, #tpu.memory_space<vmem>>, %arg10: memref<1x8xf32, #tpu.memory_space<vmem>>, %arg11: memref<8x16xf32, #tpu.memory_space<vmem>>, %arg12: memref<8x1xf32, #tpu.memory_space<vmem>>, %arg13: memref<1x128xbf16, #tpu.memory_space<vmem>>, %arg14: memref<1x1xf32, #tpu.memory_space<vmem>>, %arg15: memref<1x18xf32, #tpu.memory_space<vmem>>, %arg16: memref<2x2xf32, #tpu.memory_space<vmem>>, %arg17: memref<1x32xf32, #tpu.memory_space<vmem>>) attributes {dimension_semantics = [], scalar_prefetch = 0 : i64, scratch_operands = 0 : i64, tpu.core_type = #tpu.core_type<tc>} {
    %c0 = arith.constant 0 : index
    %c0_0 = arith.constant 0 : index
    %c0_1 = arith.constant 0 : index
    %0 = vector.load %arg0[%c0, %c0_0, %c0_1] : memref<36x8x18xf32, #tpu.memory_space<vmem>>, vector<1x8x18xf32>
    %1 = vector.shape_cast %0 : vector<1x8x18xf32> to vector<8x18xf32>
    %c1 = arith.constant 1 : index
    %c0_2 = arith.constant 0 : index
    %c0_3 = arith.constant 0 : index
    %2 = vector.load %arg0[%c1, %c0_2, %c0_3] : memref<36x8x18xf32, #tpu.memory_space<vmem>>, vector<1x8x18xf32>
    %3 = vector.shape_cast %2 : vector<1x8x18xf32> to vector<8x18xf32>
    %c2 = arith.constant 2 : index
    %c0_4 = arith.constant 0 : index
    %c0_5 = arith.constant 0 : index
    %4 = vector.load %arg0[%c2, %c0_4, %c0_5] : memref<36x8x18xf32, #tpu.memory_space<vmem>>, vector<1x8x18xf32>
    %5 = vector.shape_cast %4 : vector<1x8x18xf32> to vector<8x18xf32>
    %c3 = arith.constant 3 : index
    %c0_6 = arith.constant 0 : index
    %c0_7 = arith.constant 0 : index
    %6 = vector.load %arg0[%c3, %c0_6, %c0_7] : memref<36x8x18xf32, #tpu.memory_space<vmem>>, vector<1x8x18xf32>
    %7 = vector.shape_cast %6 : vector<1x8x18xf32> to vector<8x18xf32>
    %c4 = arith.constant 4 : index
    %c0_8 = arith.constant 0 : index
    %c0_9 = arith.constant 0 : index
    %8 = vector.load %arg0[%c4, %c0_8, %c0_9] : memref<36x8x18xf32, #tpu.memory_space<vmem>>, vector<1x8x18xf32>
    %9 = vector.shape_cast %8 : vector<1x8x18xf32> to vector<8x18xf32>
    %c5 = arith.constant 5 : index
    %c0_10 = arith.constant 0 : index
    %c0_11 = arith.constant 0 : index
    %10 = vector.load %arg0[%c5, %c0_10, %c0_11] : memref<36x8x18xf32, #tpu.memory_space<vmem>>, vector<1x8x18xf32>
    %11 = vector.shape_cast %10 : vector<1x8x18xf32> to vector<8x18xf32>
    %c6 = arith.constant 6 : index
    %c0_12 = arith.constant 0 : index
    %c0_13 = arith.constant 0 : index
    %12 = vector.load %arg0[%c6, %c0_12, %c0_13] : memref<36x8x18xf32, #tpu.memory_space<vmem>>, vector<1x8x18xf32>
    %13 = vector.shape_cast %12 : vector<1x8x18xf32> to vector<8x18xf32>
    %c7 = arith.constant 7 : index
    %c0_14 = arith.constant 0 : index
    %c0_15 = arith.constant 0 : index
    %14 = vector.load %arg0[%c7, %c0_14, %c0_15] : memref<36x8x18xf32, #tpu.memory_space<vmem>>, vector<1x8x18xf32>
    %15 = vector.shape_cast %14 : vector<1x8x18xf32> to vector<8x18xf32>
    %c8 = arith.constant 8 : index
    %c0_16 = arith.constant 0 : index
    %c0_17 = arith.constant 0 : index
    %16 = vector.load %arg0[%c8, %c0_16, %c0_17] : memref<36x8x18xf32, #tpu.memory_space<vmem>>, vector<1x8x18xf32>
    %17 = vector.shape_cast %16 : vector<1x8x18xf32> to vector<8x18xf32>
    %18 = vector.extract_strided_slice %1 {offsets = [0, 0], sizes = [8, 16], strides = [1, 1]} : vector<8x18xf32> to vector<8x16xf32>
    %19 = vector.extract_strided_slice %3 {offsets = [0, 0], sizes = [8, 16], strides = [1, 1]} : vector<8x18xf32> to vector<8x16xf32>
    %20 = vector.extract_strided_slice %5 {offsets = [0, 0], sizes = [8, 16], strides = [1, 1]} : vector<8x18xf32> to vector<8x16xf32>
    %21 = vector.extract_strided_slice %7 {offsets = [0, 0], sizes = [8, 16], strides = [1, 1]} : vector<8x18xf32> to vector<8x16xf32>
    %22 = vector.extract_strided_slice %9 {offsets = [0, 0], sizes = [8, 16], strides = [1, 1]} : vector<8x18xf32> to vector<8x16xf32>
    %23 = vector.extract_strided_slice %11 {offsets = [0, 0], sizes = [8, 16], strides = [1, 1]} : vector<8x18xf32> to vector<8x16xf32>
    %24 = vector.extract_strided_slice %13 {offsets = [0, 0], sizes = [8, 16], strides = [1, 1]} : vector<8x18xf32> to vector<8x16xf32>
    %25 = vector.extract_strided_slice %15 {offsets = [0, 0], sizes = [8, 16], strides = [1, 1]} : vector<8x18xf32> to vector<8x16xf32>
    %26 = tpu.concatenate %18, %19, %20, %21, %22, %23, %24, %25 in 1 : vector<8x16xf32>, vector<8x16xf32>, vector<8x16xf32>, vector<8x16xf32>, vector<8x16xf32>, vector<8x16xf32>, vector<8x16xf32>, vector<8x16xf32> -> vector<8x128xf32>
    %27 = vector.extract_strided_slice %1 {offsets = [0, 2], sizes = [8, 16], strides = [1, 1]} : vector<8x18xf32> to vector<8x16xf32>
    %28 = vector.extract_strided_slice %3 {offsets = [0, 2], sizes = [8, 16], strides = [1, 1]} : vector<8x18xf32> to vector<8x16xf32>
    %29 = vector.extract_strided_slice %5 {offsets = [0, 2], sizes = [8, 16], strides = [1, 1]} : vector<8x18xf32> to vector<8x16xf32>
    %30 = vector.extract_strided_slice %7 {offsets = [0, 2], sizes = [8, 16], strides = [1, 1]} : vector<8x18xf32> to vector<8x16xf32>
    %31 = vector.extract_strided_slice %9 {offsets = [0, 2], sizes = [8, 16], strides = [1, 1]} : vector<8x18xf32> to vector<8x16xf32>
    %32 = vector.extract_strided_slice %11 {offsets = [0, 2], sizes = [8, 16], strides = [1, 1]} : vector<8x18xf32> to vector<8x16xf32>
    %33 = vector.extract_strided_slice %13 {offsets = [0, 2], sizes = [8, 16], strides = [1, 1]} : vector<8x18xf32> to vector<8x16xf32>
    %34 = vector.extract_strided_slice %15 {offsets = [0, 2], sizes = [8, 16], strides = [1, 1]} : vector<8x18xf32> to vector<8x16xf32>
    %35 = tpu.concatenate %27, %28, %29, %30, %31, %32, %33, %34 in 1 : vector<8x16xf32>, vector<8x16xf32>, vector<8x16xf32>, vector<8x16xf32>, vector<8x16xf32>, vector<8x16xf32>, vector<8x16xf32>, vector<8x16xf32> -> vector<8x128xf32>
    %36 = vector.extract_strided_slice %3 {offsets = [0, 0], sizes = [8, 16], strides = [1, 1]} : vector<8x18xf32> to vector<8x16xf32>
    %37 = vector.extract_strided_slice %5 {offsets = [0, 0], sizes = [8, 16], strides = [1, 1]} : vector<8x18xf32> to vector<8x16xf32>
    %38 = vector.extract_strided_slice %7 {offsets = [0, 0], sizes = [8, 16], strides = [1, 1]} : vector<8x18xf32> to vector<8x16xf32>
    %39 = vector.extract_strided_slice %9 {offsets = [0, 0], sizes = [8, 16], strides = [1, 1]} : vector<8x18xf32> to vector<8x16xf32>
    %40 = vector.extract_strided_slice %11 {offsets = [0, 0], sizes = [8, 16], strides = [1, 1]} : vector<8x18xf32> to vector<8x16xf32>
    %41 = vector.extract_strided_slice %13 {offsets = [0, 0], sizes = [8, 16], strides = [1, 1]} : vector<8x18xf32> to vector<8x16xf32>
    %42 = vector.extract_strided_slice %15 {offsets = [0, 0], sizes = [8, 16], strides = [1, 1]} : vector<8x18xf32> to vector<8x16xf32>
    %43 = vector.extract_strided_slice %17 {offsets = [0, 0], sizes = [8, 16], strides = [1, 1]} : vector<8x18xf32> to vector<8x16xf32>
    %44 = tpu.concatenate %36, %37, %38, %39, %40, %41, %42, %43 in 1 : vector<8x16xf32>, vector<8x16xf32>, vector<8x16xf32>, vector<8x16xf32>, vector<8x16xf32>, vector<8x16xf32>, vector<8x16xf32>, vector<8x16xf32> -> vector<8x128xf32>
    %45 = vector.extract_strided_slice %3 {offsets = [0, 2], sizes = [8, 16], strides = [1, 1]} : vector<8x18xf32> to vector<8x16xf32>
    %46 = vector.extract_strided_slice %5 {offsets = [0, 2], sizes = [8, 16], strides = [1, 1]} : vector<8x18xf32> to vector<8x16xf32>
    %47 = vector.extract_strided_slice %7 {offsets = [0, 2], sizes = [8, 16], strides = [1, 1]} : vector<8x18xf32> to vector<8x16xf32>
    %48 = vector.extract_strided_slice %9 {offsets = [0, 2], sizes = [8, 16], strides = [1, 1]} : vector<8x18xf32> to vector<8x16xf32>
    %49 = vector.extract_strided_slice %11 {offsets = [0, 2], sizes = [8, 16], strides = [1, 1]} : vector<8x18xf32> to vector<8x16xf32>
    %50 = vector.extract_strided_slice %13 {offsets = [0, 2], sizes = [8, 16], strides = [1, 1]} : vector<8x18xf32> to vector<8x16xf32>
    %51 = vector.extract_strided_slice %15 {offsets = [0, 2], sizes = [8, 16], strides = [1, 1]} : vector<8x18xf32> to vector<8x16xf32>
    %52 = vector.extract_strided_slice %17 {offsets = [0, 2], sizes = [8, 16], strides = [1, 1]} : vector<8x18xf32> to vector<8x16xf32>
    %53 = tpu.concatenate %45, %46, %47, %48, %49, %50, %51, %52 in 1 : vector<8x16xf32>, vector<8x16xf32>, vector<8x16xf32>, vector<8x16xf32>, vector<8x16xf32>, vector<8x16xf32>, vector<8x16xf32>, vector<8x16xf32> -> vector<8x128xf32>
    %c9 = arith.constant 9 : index
    %c0_18 = arith.constant 0 : index
    %c0_19 = arith.constant 0 : index
    %54 = vector.load %arg0[%c9, %c0_18, %c0_19] : memref<36x8x18xf32, #tpu.memory_space<vmem>>, vector<1x8x18xf32>
    %55 = vector.shape_cast %54 : vector<1x8x18xf32> to vector<8x18xf32>
    %c10 = arith.constant 10 : index
    %c0_20 = arith.constant 0 : index
    %c0_21 = arith.constant 0 : index
    %56 = vector.load %arg0[%c10, %c0_20, %c0_21] : memref<36x8x18xf32, #tpu.memory_space<vmem>>, vector<1x8x18xf32>
    %57 = vector.shape_cast %56 : vector<1x8x18xf32> to vector<8x18xf32>
    %c11 = arith.constant 11 : index
    %c0_22 = arith.constant 0 : index
    %c0_23 = arith.constant 0 : index
    %58 = vector.load %arg0[%c11, %c0_22, %c0_23] : memref<36x8x18xf32, #tpu.memory_space<vmem>>, vector<1x8x18xf32>
    %59 = vector.shape_cast %58 : vector<1x8x18xf32> to vector<8x18xf32>
    %c12 = arith.constant 12 : index
    %c0_24 = arith.constant 0 : index
    %c0_25 = arith.constant 0 : index
    %60 = vector.load %arg0[%c12, %c0_24, %c0_25] : memref<36x8x18xf32, #tpu.memory_space<vmem>>, vector<1x8x18xf32>
    %61 = vector.shape_cast %60 : vector<1x8x18xf32> to vector<8x18xf32>
    %c13 = arith.constant 13 : index
    %c0_26 = arith.constant 0 : index
    %c0_27 = arith.constant 0 : index
    %62 = vector.load %arg0[%c13, %c0_26, %c0_27] : memref<36x8x18xf32, #tpu.memory_space<vmem>>, vector<1x8x18xf32>
    %63 = vector.shape_cast %62 : vector<1x8x18xf32> to vector<8x18xf32>
    %c14 = arith.constant 14 : index
    %c0_28 = arith.constant 0 : index
    %c0_29 = arith.constant 0 : index
    %64 = vector.load %arg0[%c14, %c0_28, %c0_29] : memref<36x8x18xf32, #tpu.memory_space<vmem>>, vector<1x8x18xf32>
    %65 = vector.shape_cast %64 : vector<1x8x18xf32> to vector<8x18xf32>
    %c15 = arith.constant 15 : index
    %c0_30 = arith.constant 0 : index
    %c0_31 = arith.constant 0 : index
    %66 = vector.load %arg0[%c15, %c0_30, %c0_31] : memref<36x8x18xf32, #tpu.memory_space<vmem>>, vector<1x8x18xf32>
    %67 = vector.shape_cast %66 : vector<1x8x18xf32> to vector<8x18xf32>
    %c16 = arith.constant 16 : index
    %c0_32 = arith.constant 0 : index
    %c0_33 = arith.constant 0 : index
    %68 = vector.load %arg0[%c16, %c0_32, %c0_33] : memref<36x8x18xf32, #tpu.memory_space<vmem>>, vector<1x8x18xf32>
    %69 = vector.shape_cast %68 : vector<1x8x18xf32> to vector<8x18xf32>
    %c17 = arith.constant 17 : index
    %c0_34 = arith.constant 0 : index
    %c0_35 = arith.constant 0 : index
    %70 = vector.load %arg0[%c17, %c0_34, %c0_35] : memref<36x8x18xf32, #tpu.memory_space<vmem>>, vector<1x8x18xf32>
    %71 = vector.shape_cast %70 : vector<1x8x18xf32> to vector<8x18xf32>
    %72 = vector.extract_strided_slice %55 {offsets = [0, 0], sizes = [8, 16], strides = [1, 1]} : vector<8x18xf32> to vector<8x16xf32>
    %73 = vector.extract_strided_slice %57 {offsets = [0, 0], sizes = [8, 16], strides = [1, 1]} : vector<8x18xf32> to vector<8x16xf32>
    %74 = vector.extract_strided_slice %59 {offsets = [0, 0], sizes = [8, 16], strides = [1, 1]} : vector<8x18xf32> to vector<8x16xf32>
    %75 = vector.extract_strided_slice %61 {offsets = [0, 0], sizes = [8, 16], strides = [1, 1]} : vector<8x18xf32> to vector<8x16xf32>
    %76 = vector.extract_strided_slice %63 {offsets = [0, 0], sizes = [8, 16], strides = [1, 1]} : vector<8x18xf32> to vector<8x16xf32>
    %77 = vector.extract_strided_slice %65 {offsets = [0, 0], sizes = [8, 16], strides = [1, 1]} : vector<8x18xf32> to vector<8x16xf32>
    %78 = vector.extract_strided_slice %67 {offsets = [0, 0], sizes = [8, 16], strides = [1, 1]} : vector<8x18xf32> to vector<8x16xf32>
    %79 = vector.extract_strided_slice %69 {offsets = [0, 0], sizes = [8, 16], strides = [1, 1]} : vector<8x18xf32> to vector<8x16xf32>
    %80 = tpu.concatenate %72, %73, %74, %75, %76, %77, %78, %79 in 1 : vector<8x16xf32>, vector<8x16xf32>, vector<8x16xf32>, vector<8x16xf32>, vector<8x16xf32>, vector<8x16xf32>, vector<8x16xf32>, vector<8x16xf32> -> vector<8x128xf32>
    %81 = vector.extract_strided_slice %55 {offsets = [0, 2], sizes = [8, 16], strides = [1, 1]} : vector<8x18xf32> to vector<8x16xf32>
    %82 = vector.extract_strided_slice %57 {offsets = [0, 2], sizes = [8, 16], strides = [1, 1]} : vector<8x18xf32> to vector<8x16xf32>
    %83 = vector.extract_strided_slice %59 {offsets = [0, 2], sizes = [8, 16], strides = [1, 1]} : vector<8x18xf32> to vector<8x16xf32>
    %84 = vector.extract_strided_slice %61 {offsets = [0, 2], sizes = [8, 16], strides = [1, 1]} : vector<8x18xf32> to vector<8x16xf32>
    %85 = vector.extract_strided_slice %63 {offsets = [0, 2], sizes = [8, 16], strides = [1, 1]} : vector<8x18xf32> to vector<8x16xf32>
    %86 = vector.extract_strided_slice %65 {offsets = [0, 2], sizes = [8, 16], strides = [1, 1]} : vector<8x18xf32> to vector<8x16xf32>
    %87 = vector.extract_strided_slice %67 {offsets = [0, 2], sizes = [8, 16], strides = [1, 1]} : vector<8x18xf32> to vector<8x16xf32>
    %88 = vector.extract_strided_slice %69 {offsets = [0, 2], sizes = [8, 16], strides = [1, 1]} : vector<8x18xf32> to vector<8x16xf32>
    %89 = tpu.concatenate %81, %82, %83, %84, %85, %86, %87, %88 in 1 : vector<8x16xf32>, vector<8x16xf32>, vector<8x16xf32>, vector<8x16xf32>, vector<8x16xf32>, vector<8x16xf32>, vector<8x16xf32>, vector<8x16xf32> -> vector<8x128xf32>
    %90 = vector.extract_strided_slice %57 {offsets = [0, 0], sizes = [8, 16], strides = [1, 1]} : vector<8x18xf32> to vector<8x16xf32>
    %91 = vector.extract_strided_slice %59 {offsets = [0, 0], sizes = [8, 16], strides = [1, 1]} : vector<8x18xf32> to vector<8x16xf32>
    %92 = vector.extract_strided_slice %61 {offsets = [0, 0], sizes = [8, 16], strides = [1, 1]} : vector<8x18xf32> to vector<8x16xf32>
    %93 = vector.extract_strided_slice %63 {offsets = [0, 0], sizes = [8, 16], strides = [1, 1]} : vector<8x18xf32> to vector<8x16xf32>
    %94 = vector.extract_strided_slice %65 {offsets = [0, 0], sizes = [8, 16], strides = [1, 1]} : vector<8x18xf32> to vector<8x16xf32>
    %95 = vector.extract_strided_slice %67 {offsets = [0, 0], sizes = [8, 16], strides = [1, 1]} : vector<8x18xf32> to vector<8x16xf32>
    %96 = vector.extract_strided_slice %69 {offsets = [0, 0], sizes = [8, 16], strides = [1, 1]} : vector<8x18xf32> to vector<8x16xf32>
    %97 = vector.extract_strided_slice %71 {offsets = [0, 0], sizes = [8, 16], strides = [1, 1]} : vector<8x18xf32> to vector<8x16xf32>
    %98 = tpu.concatenate %90, %91, %92, %93, %94, %95, %96, %97 in 1 : vector<8x16xf32>, vector<8x16xf32>, vector<8x16xf32>, vector<8x16xf32>, vector<8x16xf32>, vector<8x16xf32>, vector<8x16xf32>, vector<8x16xf32> -> vector<8x128xf32>
    %99 = vector.extract_strided_slice %57 {offsets = [0, 2], sizes = [8, 16], strides = [1, 1]} : vector<8x18xf32> to vector<8x16xf32>
    %100 = vector.extract_strided_slice %59 {offsets = [0, 2], sizes = [8, 16], strides = [1, 1]} : vector<8x18xf32> to vector<8x16xf32>
    %101 = vector.extract_strided_slice %61 {offsets = [0, 2], sizes = [8, 16], strides = [1, 1]} : vector<8x18xf32> to vector<8x16xf32>
    %102 = vector.extract_strided_slice %63 {offsets = [0, 2], sizes = [8, 16], strides = [1, 1]} : vector<8x18xf32> to vector<8x16xf32>
    %103 = vector.extract_strided_slice %65 {offsets = [0, 2], sizes = [8, 16], strides = [1, 1]} : vector<8x18xf32> to vector<8x16xf32>
    %104 = vector.extract_strided_slice %67 {offsets = [0, 2], sizes = [8, 16], strides = [1, 1]} : vector<8x18xf32> to vector<8x16xf32>
    %105 = vector.extract_strided_slice %69 {offsets = [0, 2], sizes = [8, 16], strides = [1, 1]} : vector<8x18xf32> to vector<8x16xf32>
    %106 = vector.extract_strided_slice %71 {offsets = [0, 2], sizes = [8, 16], strides = [1, 1]} : vector<8x18xf32> to vector<8x16xf32>
    %107 = tpu.concatenate %99, %100, %101, %102, %103, %104, %105, %106 in 1 : vector<8x16xf32>, vector<8x16xf32>, vector<8x16xf32>, vector<8x16xf32>, vector<8x16xf32>, vector<8x16xf32>, vector<8x16xf32>, vector<8x16xf32> -> vector<8x128xf32>
    %c18 = arith.constant 18 : index
    %c0_36 = arith.constant 0 : index
    %c0_37 = arith.constant 0 : index
    %108 = vector.load %arg0[%c18, %c0_36, %c0_37] : memref<36x8x18xf32, #tpu.memory_space<vmem>>, vector<1x8x18xf32>
    %109 = vector.shape_cast %108 : vector<1x8x18xf32> to vector<8x18xf32>
    %c19 = arith.constant 19 : index
    %c0_38 = arith.constant 0 : index
    %c0_39 = arith.constant 0 : index
    %110 = vector.load %arg0[%c19, %c0_38, %c0_39] : memref<36x8x18xf32, #tpu.memory_space<vmem>>, vector<1x8x18xf32>
    %111 = vector.shape_cast %110 : vector<1x8x18xf32> to vector<8x18xf32>
    %c20 = arith.constant 20 : index
    %c0_40 = arith.constant 0 : index
    %c0_41 = arith.constant 0 : index
    %112 = vector.load %arg0[%c20, %c0_40, %c0_41] : memref<36x8x18xf32, #tpu.memory_space<vmem>>, vector<1x8x18xf32>
    %113 = vector.shape_cast %112 : vector<1x8x18xf32> to vector<8x18xf32>
    %c21 = arith.constant 21 : index
    %c0_42 = arith.constant 0 : index
    %c0_43 = arith.constant 0 : index
    %114 = vector.load %arg0[%c21, %c0_42, %c0_43] : memref<36x8x18xf32, #tpu.memory_space<vmem>>, vector<1x8x18xf32>
    %115 = vector.shape_cast %114 : vector<1x8x18xf32> to vector<8x18xf32>
    %c22 = arith.constant 22 : index
    %c0_44 = arith.constant 0 : index
    %c0_45 = arith.constant 0 : index
    %116 = vector.load %arg0[%c22, %c0_44, %c0_45] : memref<36x8x18xf32, #tpu.memory_space<vmem>>, vector<1x8x18xf32>
    %117 = vector.shape_cast %116 : vector<1x8x18xf32> to vector<8x18xf32>
    %c23 = arith.constant 23 : index
    %c0_46 = arith.constant 0 : index
    %c0_47 = arith.constant 0 : index
    %118 = vector.load %arg0[%c23, %c0_46, %c0_47] : memref<36x8x18xf32, #tpu.memory_space<vmem>>, vector<1x8x18xf32>
    %119 = vector.shape_cast %118 : vector<1x8x18xf32> to vector<8x18xf32>
    %c24 = arith.constant 24 : index
    %c0_48 = arith.constant 0 : index
    %c0_49 = arith.constant 0 : index
    %120 = vector.load %arg0[%c24, %c0_48, %c0_49] : memref<36x8x18xf32, #tpu.memory_space<vmem>>, vector<1x8x18xf32>
    %121 = vector.shape_cast %120 : vector<1x8x18xf32> to vector<8x18xf32>
    %c25 = arith.constant 25 : index
    %c0_50 = arith.constant 0 : index
    %c0_51 = arith.constant 0 : index
    %122 = vector.load %arg0[%c25, %c0_50, %c0_51] : memref<36x8x18xf32, #tpu.memory_space<vmem>>, vector<1x8x18xf32>
    %123 = vector.shape_cast %122 : vector<1x8x18xf32> to vector<8x18xf32>
    %c26 = arith.constant 26 : index
    %c0_52 = arith.constant 0 : index
    %c0_53 = arith.constant 0 : index
    %124 = vector.load %arg0[%c26, %c0_52, %c0_53] : memref<36x8x18xf32, #tpu.memory_space<vmem>>, vector<1x8x18xf32>
    %125 = vector.shape_cast %124 : vector<1x8x18xf32> to vector<8x18xf32>
    %126 = vector.extract_strided_slice %109 {offsets = [0, 0], sizes = [8, 16], strides = [1, 1]} : vector<8x18xf32> to vector<8x16xf32>
    %127 = vector.extract_strided_slice %111 {offsets = [0, 0], sizes = [8, 16], strides = [1, 1]} : vector<8x18xf32> to vector<8x16xf32>
    %128 = vector.extract_strided_slice %113 {offsets = [0, 0], sizes = [8, 16], strides = [1, 1]} : vector<8x18xf32> to vector<8x16xf32>
    %129 = vector.extract_strided_slice %115 {offsets = [0, 0], sizes = [8, 16], strides = [1, 1]} : vector<8x18xf32> to vector<8x16xf32>
    %130 = vector.extract_strided_slice %117 {offsets = [0, 0], sizes = [8, 16], strides = [1, 1]} : vector<8x18xf32> to vector<8x16xf32>
    %131 = vector.extract_strided_slice %119 {offsets = [0, 0], sizes = [8, 16], strides = [1, 1]} : vector<8x18xf32> to vector<8x16xf32>
    %132 = vector.extract_strided_slice %121 {offsets = [0, 0], sizes = [8, 16], strides = [1, 1]} : vector<8x18xf32> to vector<8x16xf32>
    %133 = vector.extract_strided_slice %123 {offsets = [0, 0], sizes = [8, 16], strides = [1, 1]} : vector<8x18xf32> to vector<8x16xf32>
    %134 = tpu.concatenate %126, %127, %128, %129, %130, %131, %132, %133 in 1 : vector<8x16xf32>, vector<8x16xf32>, vector<8x16xf32>, vector<8x16xf32>, vector<8x16xf32>, vector<8x16xf32>, vector<8x16xf32>, vector<8x16xf32> -> vector<8x128xf32>
    %135 = vector.extract_strided_slice %109 {offsets = [0, 2], sizes = [8, 16], strides = [1, 1]} : vector<8x18xf32> to vector<8x16xf32>
    %136 = vector.extract_strided_slice %111 {offsets = [0, 2], sizes = [8, 16], strides = [1, 1]} : vector<8x18xf32> to vector<8x16xf32>
    %137 = vector.extract_strided_slice %113 {offsets = [0, 2], sizes = [8, 16], strides = [1, 1]} : vector<8x18xf32> to vector<8x16xf32>
    %138 = vector.extract_strided_slice %115 {offsets = [0, 2], sizes = [8, 16], strides = [1, 1]} : vector<8x18xf32> to vector<8x16xf32>
    %139 = vector.extract_strided_slice %117 {offsets = [0, 2], sizes = [8, 16], strides = [1, 1]} : vector<8x18xf32> to vector<8x16xf32>
    %140 = vector.extract_strided_slice %119 {offsets = [0, 2], sizes = [8, 16], strides = [1, 1]} : vector<8x18xf32> to vector<8x16xf32>
    %141 = vector.extract_strided_slice %121 {offsets = [0, 2], sizes = [8, 16], strides = [1, 1]} : vector<8x18xf32> to vector<8x16xf32>
    %142 = vector.extract_strided_slice %123 {offsets = [0, 2], sizes = [8, 16], strides = [1, 1]} : vector<8x18xf32> to vector<8x16xf32>
    %143 = tpu.concatenate %135, %136, %137, %138, %139, %140, %141, %142 in 1 : vector<8x16xf32>, vector<8x16xf32>, vector<8x16xf32>, vector<8x16xf32>, vector<8x16xf32>, vector<8x16xf32>, vector<8x16xf32>, vector<8x16xf32> -> vector<8x128xf32>
    %144 = vector.extract_strided_slice %111 {offsets = [0, 0], sizes = [8, 16], strides = [1, 1]} : vector<8x18xf32> to vector<8x16xf32>
    %145 = vector.extract_strided_slice %113 {offsets = [0, 0], sizes = [8, 16], strides = [1, 1]} : vector<8x18xf32> to vector<8x16xf32>
    %146 = vector.extract_strided_slice %115 {offsets = [0, 0], sizes = [8, 16], strides = [1, 1]} : vector<8x18xf32> to vector<8x16xf32>
    %147 = vector.extract_strided_slice %117 {offsets = [0, 0], sizes = [8, 16], strides = [1, 1]} : vector<8x18xf32> to vector<8x16xf32>
    %148 = vector.extract_strided_slice %119 {offsets = [0, 0], sizes = [8, 16], strides = [1, 1]} : vector<8x18xf32> to vector<8x16xf32>
    %149 = vector.extract_strided_slice %121 {offsets = [0, 0], sizes = [8, 16], strides = [1, 1]} : vector<8x18xf32> to vector<8x16xf32>
    %150 = vector.extract_strided_slice %123 {offsets = [0, 0], sizes = [8, 16], strides = [1, 1]} : vector<8x18xf32> to vector<8x16xf32>
    %151 = vector.extract_strided_slice %125 {offsets = [0, 0], sizes = [8, 16], strides = [1, 1]} : vector<8x18xf32> to vector<8x16xf32>
    %152 = tpu.concatenate %144, %145, %146, %147, %148, %149, %150, %151 in 1 : vector<8x16xf32>, vector<8x16xf32>, vector<8x16xf32>, vector<8x16xf32>, vector<8x16xf32>, vector<8x16xf32>, vector<8x16xf32>, vector<8x16xf32> -> vector<8x128xf32>
    %153 = vector.extract_strided_slice %111 {offsets = [0, 2], sizes = [8, 16], strides = [1, 1]} : vector<8x18xf32> to vector<8x16xf32>
    %154 = vector.extract_strided_slice %113 {offsets = [0, 2], sizes = [8, 16], strides = [1, 1]} : vector<8x18xf32> to vector<8x16xf32>
    %155 = vector.extract_strided_slice %115 {offsets = [0, 2], sizes = [8, 16], strides = [1, 1]} : vector<8x18xf32> to vector<8x16xf32>
    %156 = vector.extract_strided_slice %117 {offsets = [0, 2], sizes = [8, 16], strides = [1, 1]} : vector<8x18xf32> to vector<8x16xf32>
    %157 = vector.extract_strided_slice %119 {offsets = [0, 2], sizes = [8, 16], strides = [1, 1]} : vector<8x18xf32> to vector<8x16xf32>
    %158 = vector.extract_strided_slice %121 {offsets = [0, 2], sizes = [8, 16], strides = [1, 1]} : vector<8x18xf32> to vector<8x16xf32>
    %159 = vector.extract_strided_slice %123 {offsets = [0, 2], sizes = [8, 16], strides = [1, 1]} : vector<8x18xf32> to vector<8x16xf32>
    %160 = vector.extract_strided_slice %125 {offsets = [0, 2], sizes = [8, 16], strides = [1, 1]} : vector<8x18xf32> to vector<8x16xf32>
    %161 = tpu.concatenate %153, %154, %155, %156, %157, %158, %159, %160 in 1 : vector<8x16xf32>, vector<8x16xf32>, vector<8x16xf32>, vector<8x16xf32>, vector<8x16xf32>, vector<8x16xf32>, vector<8x16xf32>, vector<8x16xf32> -> vector<8x128xf32>
    %c27 = arith.constant 27 : index
    %c0_54 = arith.constant 0 : index
    %c0_55 = arith.constant 0 : index
    %162 = vector.load %arg0[%c27, %c0_54, %c0_55] : memref<36x8x18xf32, #tpu.memory_space<vmem>>, vector<1x8x18xf32>
    %163 = vector.shape_cast %162 : vector<1x8x18xf32> to vector<8x18xf32>
    %c28 = arith.constant 28 : index
    %c0_56 = arith.constant 0 : index
    %c0_57 = arith.constant 0 : index
    %164 = vector.load %arg0[%c28, %c0_56, %c0_57] : memref<36x8x18xf32, #tpu.memory_space<vmem>>, vector<1x8x18xf32>
    %165 = vector.shape_cast %164 : vector<1x8x18xf32> to vector<8x18xf32>
    %c29 = arith.constant 29 : index
    %c0_58 = arith.constant 0 : index
    %c0_59 = arith.constant 0 : index
    %166 = vector.load %arg0[%c29, %c0_58, %c0_59] : memref<36x8x18xf32, #tpu.memory_space<vmem>>, vector<1x8x18xf32>
    %167 = vector.shape_cast %166 : vector<1x8x18xf32> to vector<8x18xf32>
    %c30 = arith.constant 30 : index
    %c0_60 = arith.constant 0 : index
    %c0_61 = arith.constant 0 : index
    %168 = vector.load %arg0[%c30, %c0_60, %c0_61] : memref<36x8x18xf32, #tpu.memory_space<vmem>>, vector<1x8x18xf32>
    %169 = vector.shape_cast %168 : vector<1x8x18xf32> to vector<8x18xf32>
    %c31 = arith.constant 31 : index
    %c0_62 = arith.constant 0 : index
    %c0_63 = arith.constant 0 : index
    %170 = vector.load %arg0[%c31, %c0_62, %c0_63] : memref<36x8x18xf32, #tpu.memory_space<vmem>>, vector<1x8x18xf32>
    %171 = vector.shape_cast %170 : vector<1x8x18xf32> to vector<8x18xf32>
    %c32 = arith.constant 32 : index
    %c0_64 = arith.constant 0 : index
    %c0_65 = arith.constant 0 : index
    %172 = vector.load %arg0[%c32, %c0_64, %c0_65] : memref<36x8x18xf32, #tpu.memory_space<vmem>>, vector<1x8x18xf32>
    %173 = vector.shape_cast %172 : vector<1x8x18xf32> to vector<8x18xf32>
    %c33 = arith.constant 33 : index
    %c0_66 = arith.constant 0 : index
    %c0_67 = arith.constant 0 : index
    %174 = vector.load %arg0[%c33, %c0_66, %c0_67] : memref<36x8x18xf32, #tpu.memory_space<vmem>>, vector<1x8x18xf32>
    %175 = vector.shape_cast %174 : vector<1x8x18xf32> to vector<8x18xf32>
    %c34 = arith.constant 34 : index
    %c0_68 = arith.constant 0 : index
    %c0_69 = arith.constant 0 : index
    %176 = vector.load %arg0[%c34, %c0_68, %c0_69] : memref<36x8x18xf32, #tpu.memory_space<vmem>>, vector<1x8x18xf32>
    %177 = vector.shape_cast %176 : vector<1x8x18xf32> to vector<8x18xf32>
    %c35 = arith.constant 35 : index
    %c0_70 = arith.constant 0 : index
    %c0_71 = arith.constant 0 : index
    %178 = vector.load %arg0[%c35, %c0_70, %c0_71] : memref<36x8x18xf32, #tpu.memory_space<vmem>>, vector<1x8x18xf32>
    %179 = vector.shape_cast %178 : vector<1x8x18xf32> to vector<8x18xf32>
    %180 = vector.extract_strided_slice %163 {offsets = [0, 0], sizes = [8, 16], strides = [1, 1]} : vector<8x18xf32> to vector<8x16xf32>
    %181 = vector.extract_strided_slice %165 {offsets = [0, 0], sizes = [8, 16], strides = [1, 1]} : vector<8x18xf32> to vector<8x16xf32>
    %182 = vector.extract_strided_slice %167 {offsets = [0, 0], sizes = [8, 16], strides = [1, 1]} : vector<8x18xf32> to vector<8x16xf32>
    %183 = vector.extract_strided_slice %169 {offsets = [0, 0], sizes = [8, 16], strides = [1, 1]} : vector<8x18xf32> to vector<8x16xf32>
    %184 = vector.extract_strided_slice %171 {offsets = [0, 0], sizes = [8, 16], strides = [1, 1]} : vector<8x18xf32> to vector<8x16xf32>
    %185 = vector.extract_strided_slice %173 {offsets = [0, 0], sizes = [8, 16], strides = [1, 1]} : vector<8x18xf32> to vector<8x16xf32>
    %186 = vector.extract_strided_slice %175 {offsets = [0, 0], sizes = [8, 16], strides = [1, 1]} : vector<8x18xf32> to vector<8x16xf32>
    %187 = vector.extract_strided_slice %177 {offsets = [0, 0], sizes = [8, 16], strides = [1, 1]} : vector<8x18xf32> to vector<8x16xf32>
    %188 = tpu.concatenate %180, %181, %182, %183, %184, %185, %186, %187 in 1 : vector<8x16xf32>, vector<8x16xf32>, vector<8x16xf32>, vector<8x16xf32>, vector<8x16xf32>, vector<8x16xf32>, vector<8x16xf32>, vector<8x16xf32> -> vector<8x128xf32>
    %189 = vector.extract_strided_slice %163 {offsets = [0, 2], sizes = [8, 16], strides = [1, 1]} : vector<8x18xf32> to vector<8x16xf32>
    %190 = vector.extract_strided_slice %165 {offsets = [0, 2], sizes = [8, 16], strides = [1, 1]} : vector<8x18xf32> to vector<8x16xf32>
    %191 = vector.extract_strided_slice %167 {offsets = [0, 2], sizes = [8, 16], strides = [1, 1]} : vector<8x18xf32> to vector<8x16xf32>
    %192 = vector.extract_strided_slice %169 {offsets = [0, 2], sizes = [8, 16], strides = [1, 1]} : vector<8x18xf32> to vector<8x16xf32>
    %193 = vector.extract_strided_slice %171 {offsets = [0, 2], sizes = [8, 16], strides = [1, 1]} : vector<8x18xf32> to vector<8x16xf32>
    %194 = vector.extract_strided_slice %173 {offsets = [0, 2], sizes = [8, 16], strides = [1, 1]} : vector<8x18xf32> to vector<8x16xf32>
    %195 = vector.extract_strided_slice %175 {offsets = [0, 2], sizes = [8, 16], strides = [1, 1]} : vector<8x18xf32> to vector<8x16xf32>
    %196 = vector.extract_strided_slice %177 {offsets = [0, 2], sizes = [8, 16], strides = [1, 1]} : vector<8x18xf32> to vector<8x16xf32>
    %197 = tpu.concatenate %189, %190, %191, %192, %193, %194, %195, %196 in 1 : vector<8x16xf32>, vector<8x16xf32>, vector<8x16xf32>, vector<8x16xf32>, vector<8x16xf32>, vector<8x16xf32>, vector<8x16xf32>, vector<8x16xf32> -> vector<8x128xf32>
    %198 = vector.extract_strided_slice %165 {offsets = [0, 0], sizes = [8, 16], strides = [1, 1]} : vector<8x18xf32> to vector<8x16xf32>
    %199 = vector.extract_strided_slice %167 {offsets = [0, 0], sizes = [8, 16], strides = [1, 1]} : vector<8x18xf32> to vector<8x16xf32>
    %200 = vector.extract_strided_slice %169 {offsets = [0, 0], sizes = [8, 16], strides = [1, 1]} : vector<8x18xf32> to vector<8x16xf32>
    %201 = vector.extract_strided_slice %171 {offsets = [0, 0], sizes = [8, 16], strides = [1, 1]} : vector<8x18xf32> to vector<8x16xf32>
    %202 = vector.extract_strided_slice %173 {offsets = [0, 0], sizes = [8, 16], strides = [1, 1]} : vector<8x18xf32> to vector<8x16xf32>
    %203 = vector.extract_strided_slice %175 {offsets = [0, 0], sizes = [8, 16], strides = [1, 1]} : vector<8x18xf32> to vector<8x16xf32>
    %204 = vector.extract_strided_slice %177 {offsets = [0, 0], sizes = [8, 16], strides = [1, 1]} : vector<8x18xf32> to vector<8x16xf32>
    %205 = vector.extract_strided_slice %179 {offsets = [0, 0], sizes = [8, 16], strides = [1, 1]} : vector<8x18xf32> to vector<8x16xf32>
    %206 = tpu.concatenate %198, %199, %200, %201, %202, %203, %204, %205 in 1 : vector<8x16xf32>, vector<8x16xf32>, vector<8x16xf32>, vector<8x16xf32>, vector<8x16xf32>, vector<8x16xf32>, vector<8x16xf32>, vector<8x16xf32> -> vector<8x128xf32>
    %207 = vector.extract_strided_slice %165 {offsets = [0, 2], sizes = [8, 16], strides = [1, 1]} : vector<8x18xf32> to vector<8x16xf32>
    %208 = vector.extract_strided_slice %167 {offsets = [0, 2], sizes = [8, 16], strides = [1, 1]} : vector<8x18xf32> to vector<8x16xf32>
    %209 = vector.extract_strided_slice %169 {offsets = [0, 2], sizes = [8, 16], strides = [1, 1]} : vector<8x18xf32> to vector<8x16xf32>
    %210 = vector.extract_strided_slice %171 {offsets = [0, 2], sizes = [8, 16], strides = [1, 1]} : vector<8x18xf32> to vector<8x16xf32>
    %211 = vector.extract_strided_slice %173 {offsets = [0, 2], sizes = [8, 16], strides = [1, 1]} : vector<8x18xf32> to vector<8x16xf32>
    %212 = vector.extract_strided_slice %175 {offsets = [0, 2], sizes = [8, 16], strides = [1, 1]} : vector<8x18xf32> to vector<8x16xf32>
    %213 = vector.extract_strided_slice %177 {offsets = [0, 2], sizes = [8, 16], strides = [1, 1]} : vector<8x18xf32> to vector<8x16xf32>
    %214 = vector.extract_strided_slice %179 {offsets = [0, 2], sizes = [8, 16], strides = [1, 1]} : vector<8x18xf32> to vector<8x16xf32>
    %215 = tpu.concatenate %207, %208, %209, %210, %211, %212, %213, %214 in 1 : vector<8x16xf32>, vector<8x16xf32>, vector<8x16xf32>, vector<8x16xf32>, vector<8x16xf32>, vector<8x16xf32>, vector<8x16xf32>, vector<8x16xf32> -> vector<8x128xf32>
    %216 = tpu.concatenate %26, %80, %35, %89, %134, %188, %143, %197, %44, %98, %53, %107, %152, %206, %161, %215 in 0 : vector<8x128xf32>, vector<8x128xf32>, vector<8x128xf32>, vector<8x128xf32>, vector<8x128xf32>, vector<8x128xf32>, vector<8x128xf32>, vector<8x128xf32>, vector<8x128xf32>, vector<8x128xf32>, vector<8x128xf32>, vector<8x128xf32>, vector<8x128xf32>, vector<8x128xf32>, vector<8x128xf32>, vector<8x128xf32> -> vector<128x128xf32>
    %217 = arith.truncf %216 : vector<128x128xf32> to vector<128x128xbf16>
    %c0_72 = arith.constant 0 : index
    %c0_73 = arith.constant 0 : index
    %218 = vector.load %arg1[%c0_72, %c0_73] : memref<8x128xbf16, #tpu.memory_space<vmem>>, vector<8x128xbf16>
    %cst = arith.constant dense<0.000000e+00> : vector<8x128xf32>
    %219 = tpu.matmul %218, %217, %cst {dimension_numbers = #tpu.dot_dimension_numbers<[1], [0], [0], [1], [0, 0, 1, 1], [], []>} : vector<8x128xbf16>, vector<128x128xbf16>, vector<8x128xf32> -> vector<8x128xf32>
    %c0_74 = arith.constant 0 : index
    %c0_75 = arith.constant 0 : index
    %220 = vector.load %arg2[%c0_74, %c0_75] : memref<8x1xf32, #tpu.memory_space<vmem>>, vector<8x1xf32>
    %221 = vector.broadcast %220 : vector<8x1xf32> to vector<8x128xf32>
    %222 = arith.addf %219, %221 : vector<8x128xf32>
    %cst_76 = arith.constant 0.000000e+00 : f32
    %223 = vector.broadcast %cst_76 : f32 to vector<8x128xf32>
    %224 = arith.cmpf ogt, %222, %223 : vector<8x128xf32>
    %cst_77 = arith.constant 2.000000e-01 : f32
    %225 = vector.broadcast %cst_77 : f32 to vector<8x128xf32>
    %226 = arith.mulf %225, %222 : vector<8x128xf32>
    %227 = arith.select %224, %222, %226 : vector<8x128xi1>, vector<8x128xf32>
    %228 = vector.extract_strided_slice %227 {offsets = [0, 16], sizes = [8, 16], strides = [1, 1]} : vector<8x128xf32> to vector<8x16xf32>
    %229 = vector.extract_strided_slice %228 {offsets = [0, 2], sizes = [8, 2], strides = [1, 1]} : vector<8x16xf32> to vector<8x2xf32>
    %230 = vector.extract_strided_slice %228 {offsets = [0, 2], sizes = [8, 2], strides = [1, 1]} : vector<8x16xf32> to vector<8x2xf32>
    %231 = vector.extract_strided_slice %228 {offsets = [0, 6], sizes = [8, 2], strides = [1, 1]} : vector<8x16xf32> to vector<8x2xf32>
    %232 = vector.extract_strided_slice %228 {offsets = [0, 10], sizes = [8, 2], strides = [1, 1]} : vector<8x16xf32> to vector<8x2xf32>
    %233 = vector.extract_strided_slice %228 {offsets = [0, 14], sizes = [8, 2], strides = [1, 1]} : vector<8x16xf32> to vector<8x2xf32>
    %234 = tpu.concatenate %229, %230, %231, %232, %233 in 1 : vector<8x2xf32>, vector<8x2xf32>, vector<8x2xf32>, vector<8x2xf32>, vector<8x2xf32> -> vector<8x10xf32>
    %235 = vector.extract_strided_slice %228 {offsets = [0, 0], sizes = [8, 2], strides = [1, 1]} : vector<8x16xf32> to vector<8x2xf32>
    %236 = vector.extract_strided_slice %228 {offsets = [0, 4], sizes = [8, 2], strides = [1, 1]} : vector<8x16xf32> to vector<8x2xf32>
    %237 = vector.extract_strided_slice %228 {offsets = [0, 8], sizes = [8, 2], strides = [1, 1]} : vector<8x16xf32> to vector<8x2xf32>
    %238 = vector.extract_strided_slice %228 {offsets = [0, 12], sizes = [8, 2], strides = [1, 1]} : vector<8x16xf32> to vector<8x2xf32>
    %239 = vector.extract_strided_slice %228 {offsets = [0, 12], sizes = [8, 2], strides = [1, 1]} : vector<8x16xf32> to vector<8x2xf32>
    %240 = tpu.concatenate %235, %236, %237, %238, %239 in 1 : vector<8x2xf32>, vector<8x2xf32>, vector<8x2xf32>, vector<8x2xf32>, vector<8x2xf32> -> vector<8x10xf32>
    %241 = vector.extract_strided_slice %227 {offsets = [0, 0], sizes = [8, 16], strides = [1, 1]} : vector<8x128xf32> to vector<8x16xf32>
    %242 = vector.extract_strided_slice %241 {offsets = [0, 2], sizes = [8, 2], strides = [1, 1]} : vector<8x16xf32> to vector<8x2xf32>
    %243 = vector.extract_strided_slice %241 {offsets = [0, 2], sizes = [8, 2], strides = [1, 1]} : vector<8x16xf32> to vector<8x2xf32>
    %244 = vector.extract_strided_slice %241 {offsets = [0, 6], sizes = [8, 2], strides = [1, 1]} : vector<8x16xf32> to vector<8x2xf32>
    %245 = vector.extract_strided_slice %241 {offsets = [0, 10], sizes = [8, 2], strides = [1, 1]} : vector<8x16xf32> to vector<8x2xf32>
    %246 = vector.extract_strided_slice %241 {offsets = [0, 14], sizes = [8, 2], strides = [1, 1]} : vector<8x16xf32> to vector<8x2xf32>
    %247 = tpu.concatenate %242, %243, %244, %245, %246 in 1 : vector<8x2xf32>, vector<8x2xf32>, vector<8x2xf32>, vector<8x2xf32>, vector<8x2xf32> -> vector<8x10xf32>
    %248 = vector.extract_strided_slice %241 {offsets = [0, 0], sizes = [8, 2], strides = [1, 1]} : vector<8x16xf32> to vector<8x2xf32>
    %249 = vector.extract_strided_slice %241 {offsets = [0, 4], sizes = [8, 2], strides = [1, 1]} : vector<8x16xf32> to vector<8x2xf32>
    %250 = vector.extract_strided_slice %241 {offsets = [0, 8], sizes = [8, 2], strides = [1, 1]} : vector<8x16xf32> to vector<8x2xf32>
    %251 = vector.extract_strided_slice %241 {offsets = [0, 12], sizes = [8, 2], strides = [1, 1]} : vector<8x16xf32> to vector<8x2xf32>
    %252 = vector.extract_strided_slice %241 {offsets = [0, 12], sizes = [8, 2], strides = [1, 1]} : vector<8x16xf32> to vector<8x2xf32>
    %253 = tpu.concatenate %248, %249, %250, %251, %252 in 1 : vector<8x2xf32>, vector<8x2xf32>, vector<8x2xf32>, vector<8x2xf32>, vector<8x2xf32> -> vector<8x10xf32>
    %254 = vector.extract_strided_slice %227 {offsets = [0, 16], sizes = [8, 16], strides = [1, 1]} : vector<8x128xf32> to vector<8x16xf32>
    %255 = vector.extract_strided_slice %254 {offsets = [0, 2], sizes = [8, 2], strides = [1, 1]} : vector<8x16xf32> to vector<8x2xf32>
    %256 = vector.extract_strided_slice %254 {offsets = [0, 2], sizes = [8, 2], strides = [1, 1]} : vector<8x16xf32> to vector<8x2xf32>
    %257 = vector.extract_strided_slice %254 {offsets = [0, 6], sizes = [8, 2], strides = [1, 1]} : vector<8x16xf32> to vector<8x2xf32>
    %258 = vector.extract_strided_slice %254 {offsets = [0, 10], sizes = [8, 2], strides = [1, 1]} : vector<8x16xf32> to vector<8x2xf32>
    %259 = vector.extract_strided_slice %254 {offsets = [0, 14], sizes = [8, 2], strides = [1, 1]} : vector<8x16xf32> to vector<8x2xf32>
    %260 = tpu.concatenate %255, %256, %257, %258, %259 in 1 : vector<8x2xf32>, vector<8x2xf32>, vector<8x2xf32>, vector<8x2xf32>, vector<8x2xf32> -> vector<8x10xf32>
    %261 = vector.extract_strided_slice %254 {offsets = [0, 0], sizes = [8, 2], strides = [1, 1]} : vector<8x16xf32> to vector<8x2xf32>
    %262 = vector.extract_strided_slice %254 {offsets = [0, 4], sizes = [8, 2], strides = [1, 1]} : vector<8x16xf32> to vector<8x2xf32>
    %263 = vector.extract_strided_slice %254 {offsets = [0, 8], sizes = [8, 2], strides = [1, 1]} : vector<8x16xf32> to vector<8x2xf32>
    %264 = vector.extract_strided_slice %254 {offsets = [0, 12], sizes = [8, 2], strides = [1, 1]} : vector<8x16xf32> to vector<8x2xf32>
    %265 = vector.extract_strided_slice %254 {offsets = [0, 12], sizes = [8, 2], strides = [1, 1]} : vector<8x16xf32> to vector<8x2xf32>
    %266 = tpu.concatenate %261, %262, %263, %264, %265 in 1 : vector<8x2xf32>, vector<8x2xf32>, vector<8x2xf32>, vector<8x2xf32>, vector<8x2xf32> -> vector<8x10xf32>
    %267 = vector.extract_strided_slice %227 {offsets = [0, 32], sizes = [8, 16], strides = [1, 1]} : vector<8x128xf32> to vector<8x16xf32>
    %268 = vector.extract_strided_slice %267 {offsets = [0, 2], sizes = [8, 2], strides = [1, 1]} : vector<8x16xf32> to vector<8x2xf32>
    %269 = vector.extract_strided_slice %267 {offsets = [0, 2], sizes = [8, 2], strides = [1, 1]} : vector<8x16xf32> to vector<8x2xf32>
    %270 = vector.extract_strided_slice %267 {offsets = [0, 6], sizes = [8, 2], strides = [1, 1]} : vector<8x16xf32> to vector<8x2xf32>
    %271 = vector.extract_strided_slice %267 {offsets = [0, 10], sizes = [8, 2], strides = [1, 1]} : vector<8x16xf32> to vector<8x2xf32>
    %272 = vector.extract_strided_slice %267 {offsets = [0, 14], sizes = [8, 2], strides = [1, 1]} : vector<8x16xf32> to vector<8x2xf32>
    %273 = tpu.concatenate %268, %269, %270, %271, %272 in 1 : vector<8x2xf32>, vector<8x2xf32>, vector<8x2xf32>, vector<8x2xf32>, vector<8x2xf32> -> vector<8x10xf32>
    %274 = vector.extract_strided_slice %267 {offsets = [0, 0], sizes = [8, 2], strides = [1, 1]} : vector<8x16xf32> to vector<8x2xf32>
    %275 = vector.extract_strided_slice %267 {offsets = [0, 4], sizes = [8, 2], strides = [1, 1]} : vector<8x16xf32> to vector<8x2xf32>
    %276 = vector.extract_strided_slice %267 {offsets = [0, 8], sizes = [8, 2], strides = [1, 1]} : vector<8x16xf32> to vector<8x2xf32>
    %277 = vector.extract_strided_slice %267 {offsets = [0, 12], sizes = [8, 2], strides = [1, 1]} : vector<8x16xf32> to vector<8x2xf32>
    %278 = vector.extract_strided_slice %267 {offsets = [0, 12], sizes = [8, 2], strides = [1, 1]} : vector<8x16xf32> to vector<8x2xf32>
    %279 = tpu.concatenate %274, %275, %276, %277, %278 in 1 : vector<8x2xf32>, vector<8x2xf32>, vector<8x2xf32>, vector<8x2xf32>, vector<8x2xf32> -> vector<8x10xf32>
    %280 = vector.extract_strided_slice %227 {offsets = [0, 48], sizes = [8, 16], strides = [1, 1]} : vector<8x128xf32> to vector<8x16xf32>
    %281 = vector.extract_strided_slice %280 {offsets = [0, 2], sizes = [8, 2], strides = [1, 1]} : vector<8x16xf32> to vector<8x2xf32>
    %282 = vector.extract_strided_slice %280 {offsets = [0, 2], sizes = [8, 2], strides = [1, 1]} : vector<8x16xf32> to vector<8x2xf32>
    %283 = vector.extract_strided_slice %280 {offsets = [0, 6], sizes = [8, 2], strides = [1, 1]} : vector<8x16xf32> to vector<8x2xf32>
    %284 = vector.extract_strided_slice %280 {offsets = [0, 10], sizes = [8, 2], strides = [1, 1]} : vector<8x16xf32> to vector<8x2xf32>
    %285 = vector.extract_strided_slice %280 {offsets = [0, 14], sizes = [8, 2], strides = [1, 1]} : vector<8x16xf32> to vector<8x2xf32>
    %286 = tpu.concatenate %281, %282, %283, %284, %285 in 1 : vector<8x2xf32>, vector<8x2xf32>, vector<8x2xf32>, vector<8x2xf32>, vector<8x2xf32> -> vector<8x10xf32>
    %287 = vector.extract_strided_slice %280 {offsets = [0, 0], sizes = [8, 2], strides = [1, 1]} : vector<8x16xf32> to vector<8x2xf32>
    %288 = vector.extract_strided_slice %280 {offsets = [0, 4], sizes = [8, 2], strides = [1, 1]} : vector<8x16xf32> to vector<8x2xf32>
    %289 = vector.extract_strided_slice %280 {offsets = [0, 8], sizes = [8, 2], strides = [1, 1]} : vector<8x16xf32> to vector<8x2xf32>
    %290 = vector.extract_strided_slice %280 {offsets = [0, 12], sizes = [8, 2], strides = [1, 1]} : vector<8x16xf32> to vector<8x2xf32>
    %291 = vector.extract_strided_slice %280 {offsets = [0, 12], sizes = [8, 2], strides = [1, 1]} : vector<8x16xf32> to vector<8x2xf32>
    %292 = tpu.concatenate %287, %288, %289, %290, %291 in 1 : vector<8x2xf32>, vector<8x2xf32>, vector<8x2xf32>, vector<8x2xf32>, vector<8x2xf32> -> vector<8x10xf32>
    %293 = vector.extract_strided_slice %227 {offsets = [0, 64], sizes = [8, 16], strides = [1, 1]} : vector<8x128xf32> to vector<8x16xf32>
    %294 = vector.extract_strided_slice %293 {offsets = [0, 2], sizes = [8, 2], strides = [1, 1]} : vector<8x16xf32> to vector<8x2xf32>
    %295 = vector.extract_strided_slice %293 {offsets = [0, 2], sizes = [8, 2], strides = [1, 1]} : vector<8x16xf32> to vector<8x2xf32>
    %296 = vector.extract_strided_slice %293 {offsets = [0, 6], sizes = [8, 2], strides = [1, 1]} : vector<8x16xf32> to vector<8x2xf32>
    %297 = vector.extract_strided_slice %293 {offsets = [0, 10], sizes = [8, 2], strides = [1, 1]} : vector<8x16xf32> to vector<8x2xf32>
    %298 = vector.extract_strided_slice %293 {offsets = [0, 14], sizes = [8, 2], strides = [1, 1]} : vector<8x16xf32> to vector<8x2xf32>
    %299 = tpu.concatenate %294, %295, %296, %297, %298 in 1 : vector<8x2xf32>, vector<8x2xf32>, vector<8x2xf32>, vector<8x2xf32>, vector<8x2xf32> -> vector<8x10xf32>
    %300 = vector.extract_strided_slice %293 {offsets = [0, 0], sizes = [8, 2], strides = [1, 1]} : vector<8x16xf32> to vector<8x2xf32>
    %301 = vector.extract_strided_slice %293 {offsets = [0, 4], sizes = [8, 2], strides = [1, 1]} : vector<8x16xf32> to vector<8x2xf32>
    %302 = vector.extract_strided_slice %293 {offsets = [0, 8], sizes = [8, 2], strides = [1, 1]} : vector<8x16xf32> to vector<8x2xf32>
    %303 = vector.extract_strided_slice %293 {offsets = [0, 12], sizes = [8, 2], strides = [1, 1]} : vector<8x16xf32> to vector<8x2xf32>
    %304 = vector.extract_strided_slice %293 {offsets = [0, 12], sizes = [8, 2], strides = [1, 1]} : vector<8x16xf32> to vector<8x2xf32>
    %305 = tpu.concatenate %300, %301, %302, %303, %304 in 1 : vector<8x2xf32>, vector<8x2xf32>, vector<8x2xf32>, vector<8x2xf32>, vector<8x2xf32> -> vector<8x10xf32>
    %306 = vector.extract_strided_slice %227 {offsets = [0, 80], sizes = [8, 16], strides = [1, 1]} : vector<8x128xf32> to vector<8x16xf32>
    %307 = vector.extract_strided_slice %306 {offsets = [0, 2], sizes = [8, 2], strides = [1, 1]} : vector<8x16xf32> to vector<8x2xf32>
    %308 = vector.extract_strided_slice %306 {offsets = [0, 2], sizes = [8, 2], strides = [1, 1]} : vector<8x16xf32> to vector<8x2xf32>
    %309 = vector.extract_strided_slice %306 {offsets = [0, 6], sizes = [8, 2], strides = [1, 1]} : vector<8x16xf32> to vector<8x2xf32>
    %310 = vector.extract_strided_slice %306 {offsets = [0, 10], sizes = [8, 2], strides = [1, 1]} : vector<8x16xf32> to vector<8x2xf32>
    %311 = vector.extract_strided_slice %306 {offsets = [0, 14], sizes = [8, 2], strides = [1, 1]} : vector<8x16xf32> to vector<8x2xf32>
    %312 = tpu.concatenate %307, %308, %309, %310, %311 in 1 : vector<8x2xf32>, vector<8x2xf32>, vector<8x2xf32>, vector<8x2xf32>, vector<8x2xf32> -> vector<8x10xf32>
    %313 = vector.extract_strided_slice %306 {offsets = [0, 0], sizes = [8, 2], strides = [1, 1]} : vector<8x16xf32> to vector<8x2xf32>
    %314 = vector.extract_strided_slice %306 {offsets = [0, 4], sizes = [8, 2], strides = [1, 1]} : vector<8x16xf32> to vector<8x2xf32>
    %315 = vector.extract_strided_slice %306 {offsets = [0, 8], sizes = [8, 2], strides = [1, 1]} : vector<8x16xf32> to vector<8x2xf32>
    %316 = vector.extract_strided_slice %306 {offsets = [0, 12], sizes = [8, 2], strides = [1, 1]} : vector<8x16xf32> to vector<8x2xf32>
    %317 = vector.extract_strided_slice %306 {offsets = [0, 12], sizes = [8, 2], strides = [1, 1]} : vector<8x16xf32> to vector<8x2xf32>
    %318 = tpu.concatenate %313, %314, %315, %316, %317 in 1 : vector<8x2xf32>, vector<8x2xf32>, vector<8x2xf32>, vector<8x2xf32>, vector<8x2xf32> -> vector<8x10xf32>
    %319 = vector.extract_strided_slice %227 {offsets = [0, 96], sizes = [8, 16], strides = [1, 1]} : vector<8x128xf32> to vector<8x16xf32>
    %320 = vector.extract_strided_slice %319 {offsets = [0, 2], sizes = [8, 2], strides = [1, 1]} : vector<8x16xf32> to vector<8x2xf32>
    %321 = vector.extract_strided_slice %319 {offsets = [0, 2], sizes = [8, 2], strides = [1, 1]} : vector<8x16xf32> to vector<8x2xf32>
    %322 = vector.extract_strided_slice %319 {offsets = [0, 6], sizes = [8, 2], strides = [1, 1]} : vector<8x16xf32> to vector<8x2xf32>
    %323 = vector.extract_strided_slice %319 {offsets = [0, 10], sizes = [8, 2], strides = [1, 1]} : vector<8x16xf32> to vector<8x2xf32>
    %324 = vector.extract_strided_slice %319 {offsets = [0, 14], sizes = [8, 2], strides = [1, 1]} : vector<8x16xf32> to vector<8x2xf32>
    %325 = tpu.concatenate %320, %321, %322, %323, %324 in 1 : vector<8x2xf32>, vector<8x2xf32>, vector<8x2xf32>, vector<8x2xf32>, vector<8x2xf32> -> vector<8x10xf32>
    %326 = vector.extract_strided_slice %319 {offsets = [0, 0], sizes = [8, 2], strides = [1, 1]} : vector<8x16xf32> to vector<8x2xf32>
    %327 = vector.extract_strided_slice %319 {offsets = [0, 4], sizes = [8, 2], strides = [1, 1]} : vector<8x16xf32> to vector<8x2xf32>
    %328 = vector.extract_strided_slice %319 {offsets = [0, 8], sizes = [8, 2], strides = [1, 1]} : vector<8x16xf32> to vector<8x2xf32>
    %329 = vector.extract_strided_slice %319 {offsets = [0, 12], sizes = [8, 2], strides = [1, 1]} : vector<8x16xf32> to vector<8x2xf32>
    %330 = vector.extract_strided_slice %319 {offsets = [0, 12], sizes = [8, 2], strides = [1, 1]} : vector<8x16xf32> to vector<8x2xf32>
    %331 = tpu.concatenate %326, %327, %328, %329, %330 in 1 : vector<8x2xf32>, vector<8x2xf32>, vector<8x2xf32>, vector<8x2xf32>, vector<8x2xf32> -> vector<8x10xf32>
    %332 = vector.extract_strided_slice %227 {offsets = [0, 112], sizes = [8, 16], strides = [1, 1]} : vector<8x128xf32> to vector<8x16xf32>
    %333 = vector.extract_strided_slice %332 {offsets = [0, 2], sizes = [8, 2], strides = [1, 1]} : vector<8x16xf32> to vector<8x2xf32>
    %334 = vector.extract_strided_slice %332 {offsets = [0, 2], sizes = [8, 2], strides = [1, 1]} : vector<8x16xf32> to vector<8x2xf32>
    %335 = vector.extract_strided_slice %332 {offsets = [0, 6], sizes = [8, 2], strides = [1, 1]} : vector<8x16xf32> to vector<8x2xf32>
    %336 = vector.extract_strided_slice %332 {offsets = [0, 10], sizes = [8, 2], strides = [1, 1]} : vector<8x16xf32> to vector<8x2xf32>
    %337 = vector.extract_strided_slice %332 {offsets = [0, 14], sizes = [8, 2], strides = [1, 1]} : vector<8x16xf32> to vector<8x2xf32>
    %338 = tpu.concatenate %333, %334, %335, %336, %337 in 1 : vector<8x2xf32>, vector<8x2xf32>, vector<8x2xf32>, vector<8x2xf32>, vector<8x2xf32> -> vector<8x10xf32>
    %339 = vector.extract_strided_slice %332 {offsets = [0, 0], sizes = [8, 2], strides = [1, 1]} : vector<8x16xf32> to vector<8x2xf32>
    %340 = vector.extract_strided_slice %332 {offsets = [0, 4], sizes = [8, 2], strides = [1, 1]} : vector<8x16xf32> to vector<8x2xf32>
    %341 = vector.extract_strided_slice %332 {offsets = [0, 8], sizes = [8, 2], strides = [1, 1]} : vector<8x16xf32> to vector<8x2xf32>
    %342 = vector.extract_strided_slice %332 {offsets = [0, 12], sizes = [8, 2], strides = [1, 1]} : vector<8x16xf32> to vector<8x2xf32>
    %343 = vector.extract_strided_slice %332 {offsets = [0, 12], sizes = [8, 2], strides = [1, 1]} : vector<8x16xf32> to vector<8x2xf32>
    %344 = tpu.concatenate %339, %340, %341, %342, %343 in 1 : vector<8x2xf32>, vector<8x2xf32>, vector<8x2xf32>, vector<8x2xf32>, vector<8x2xf32> -> vector<8x10xf32>
    %345 = vector.extract_strided_slice %227 {offsets = [0, 96], sizes = [8, 16], strides = [1, 1]} : vector<8x128xf32> to vector<8x16xf32>
    %346 = vector.extract_strided_slice %345 {offsets = [0, 2], sizes = [8, 2], strides = [1, 1]} : vector<8x16xf32> to vector<8x2xf32>
    %347 = vector.extract_strided_slice %345 {offsets = [0, 2], sizes = [8, 2], strides = [1, 1]} : vector<8x16xf32> to vector<8x2xf32>
    %348 = vector.extract_strided_slice %345 {offsets = [0, 6], sizes = [8, 2], strides = [1, 1]} : vector<8x16xf32> to vector<8x2xf32>
    %349 = vector.extract_strided_slice %345 {offsets = [0, 10], sizes = [8, 2], strides = [1, 1]} : vector<8x16xf32> to vector<8x2xf32>
    %350 = vector.extract_strided_slice %345 {offsets = [0, 14], sizes = [8, 2], strides = [1, 1]} : vector<8x16xf32> to vector<8x2xf32>
    %351 = tpu.concatenate %346, %347, %348, %349, %350 in 1 : vector<8x2xf32>, vector<8x2xf32>, vector<8x2xf32>, vector<8x2xf32>, vector<8x2xf32> -> vector<8x10xf32>
    %352 = vector.extract_strided_slice %345 {offsets = [0, 0], sizes = [8, 2], strides = [1, 1]} : vector<8x16xf32> to vector<8x2xf32>
    %353 = vector.extract_strided_slice %345 {offsets = [0, 4], sizes = [8, 2], strides = [1, 1]} : vector<8x16xf32> to vector<8x2xf32>
    %354 = vector.extract_strided_slice %345 {offsets = [0, 8], sizes = [8, 2], strides = [1, 1]} : vector<8x16xf32> to vector<8x2xf32>
    %355 = vector.extract_strided_slice %345 {offsets = [0, 12], sizes = [8, 2], strides = [1, 1]} : vector<8x16xf32> to vector<8x2xf32>
    %356 = vector.extract_strided_slice %345 {offsets = [0, 12], sizes = [8, 2], strides = [1, 1]} : vector<8x16xf32> to vector<8x2xf32>
    %357 = tpu.concatenate %352, %353, %354, %355, %356 in 1 : vector<8x2xf32>, vector<8x2xf32>, vector<8x2xf32>, vector<8x2xf32>, vector<8x2xf32> -> vector<8x10xf32>
    %358 = vector.extract_strided_slice %234 {offsets = [0, 0], sizes = [8, 8], strides = [1, 1]} : vector<8x10xf32> to vector<8x8xf32>
    %359 = vector.extract_strided_slice %260 {offsets = [0, 0], sizes = [8, 8], strides = [1, 1]} : vector<8x10xf32> to vector<8x8xf32>
    %360 = vector.extract_strided_slice %286 {offsets = [0, 0], sizes = [8, 8], strides = [1, 1]} : vector<8x10xf32> to vector<8x8xf32>
    %361 = vector.extract_strided_slice %312 {offsets = [0, 0], sizes = [8, 8], strides = [1, 1]} : vector<8x10xf32> to vector<8x8xf32>
    %362 = tpu.concatenate %358, %359, %360, %361 in 1 : vector<8x8xf32>, vector<8x8xf32>, vector<8x8xf32>, vector<8x8xf32> -> vector<8x32xf32>
    %363 = vector.extract_strided_slice %240 {offsets = [0, 0], sizes = [8, 8], strides = [1, 1]} : vector<8x10xf32> to vector<8x8xf32>
    %364 = vector.extract_strided_slice %266 {offsets = [0, 0], sizes = [8, 8], strides = [1, 1]} : vector<8x10xf32> to vector<8x8xf32>
    %365 = vector.extract_strided_slice %292 {offsets = [0, 0], sizes = [8, 8], strides = [1, 1]} : vector<8x10xf32> to vector<8x8xf32>
    %366 = vector.extract_strided_slice %318 {offsets = [0, 0], sizes = [8, 8], strides = [1, 1]} : vector<8x10xf32> to vector<8x8xf32>
    %367 = tpu.concatenate %363, %364, %365, %366 in 1 : vector<8x8xf32>, vector<8x8xf32>, vector<8x8xf32>, vector<8x8xf32> -> vector<8x32xf32>
    %368 = vector.extract_strided_slice %234 {offsets = [0, 2], sizes = [8, 8], strides = [1, 1]} : vector<8x10xf32> to vector<8x8xf32>
    %369 = vector.extract_strided_slice %260 {offsets = [0, 2], sizes = [8, 8], strides = [1, 1]} : vector<8x10xf32> to vector<8x8xf32>
    %370 = vector.extract_strided_slice %286 {offsets = [0, 2], sizes = [8, 8], strides = [1, 1]} : vector<8x10xf32> to vector<8x8xf32>
    %371 = vector.extract_strided_slice %312 {offsets = [0, 2], sizes = [8, 8], strides = [1, 1]} : vector<8x10xf32> to vector<8x8xf32>
    %372 = tpu.concatenate %368, %369, %370, %371 in 1 : vector<8x8xf32>, vector<8x8xf32>, vector<8x8xf32>, vector<8x8xf32> -> vector<8x32xf32>
    %373 = vector.extract_strided_slice %240 {offsets = [0, 2], sizes = [8, 8], strides = [1, 1]} : vector<8x10xf32> to vector<8x8xf32>
    %374 = vector.extract_strided_slice %266 {offsets = [0, 2], sizes = [8, 8], strides = [1, 1]} : vector<8x10xf32> to vector<8x8xf32>
    %375 = vector.extract_strided_slice %292 {offsets = [0, 2], sizes = [8, 8], strides = [1, 1]} : vector<8x10xf32> to vector<8x8xf32>
    %376 = vector.extract_strided_slice %318 {offsets = [0, 2], sizes = [8, 8], strides = [1, 1]} : vector<8x10xf32> to vector<8x8xf32>
    %377 = tpu.concatenate %373, %374, %375, %376 in 1 : vector<8x8xf32>, vector<8x8xf32>, vector<8x8xf32>, vector<8x8xf32> -> vector<8x32xf32>
    %378 = vector.extract_strided_slice %247 {offsets = [0, 0], sizes = [8, 8], strides = [1, 1]} : vector<8x10xf32> to vector<8x8xf32>
    %379 = vector.extract_strided_slice %273 {offsets = [0, 0], sizes = [8, 8], strides = [1, 1]} : vector<8x10xf32> to vector<8x8xf32>
    %380 = vector.extract_strided_slice %299 {offsets = [0, 0], sizes = [8, 8], strides = [1, 1]} : vector<8x10xf32> to vector<8x8xf32>
    %381 = vector.extract_strided_slice %325 {offsets = [0, 0], sizes = [8, 8], strides = [1, 1]} : vector<8x10xf32> to vector<8x8xf32>
    %382 = tpu.concatenate %378, %379, %380, %381 in 1 : vector<8x8xf32>, vector<8x8xf32>, vector<8x8xf32>, vector<8x8xf32> -> vector<8x32xf32>
    %383 = vector.extract_strided_slice %253 {offsets = [0, 0], sizes = [8, 8], strides = [1, 1]} : vector<8x10xf32> to vector<8x8xf32>
    %384 = vector.extract_strided_slice %279 {offsets = [0, 0], sizes = [8, 8], strides = [1, 1]} : vector<8x10xf32> to vector<8x8xf32>
    %385 = vector.extract_strided_slice %305 {offsets = [0, 0], sizes = [8, 8], strides = [1, 1]} : vector<8x10xf32> to vector<8x8xf32>
    %386 = vector.extract_strided_slice %331 {offsets = [0, 0], sizes = [8, 8], strides = [1, 1]} : vector<8x10xf32> to vector<8x8xf32>
    %387 = tpu.concatenate %383, %384, %385, %386 in 1 : vector<8x8xf32>, vector<8x8xf32>, vector<8x8xf32>, vector<8x8xf32> -> vector<8x32xf32>
    %388 = vector.extract_strided_slice %247 {offsets = [0, 2], sizes = [8, 8], strides = [1, 1]} : vector<8x10xf32> to vector<8x8xf32>
    %389 = vector.extract_strided_slice %273 {offsets = [0, 2], sizes = [8, 8], strides = [1, 1]} : vector<8x10xf32> to vector<8x8xf32>
    %390 = vector.extract_strided_slice %299 {offsets = [0, 2], sizes = [8, 8], strides = [1, 1]} : vector<8x10xf32> to vector<8x8xf32>
    %391 = vector.extract_strided_slice %325 {offsets = [0, 2], sizes = [8, 8], strides = [1, 1]} : vector<8x10xf32> to vector<8x8xf32>
    %392 = tpu.concatenate %388, %389, %390, %391 in 1 : vector<8x8xf32>, vector<8x8xf32>, vector<8x8xf32>, vector<8x8xf32> -> vector<8x32xf32>
    %393 = vector.extract_strided_slice %253 {offsets = [0, 2], sizes = [8, 8], strides = [1, 1]} : vector<8x10xf32> to vector<8x8xf32>
    %394 = vector.extract_strided_slice %279 {offsets = [0, 2], sizes = [8, 8], strides = [1, 1]} : vector<8x10xf32> to vector<8x8xf32>
    %395 = vector.extract_strided_slice %305 {offsets = [0, 2], sizes = [8, 8], strides = [1, 1]} : vector<8x10xf32> to vector<8x8xf32>
    %396 = vector.extract_strided_slice %331 {offsets = [0, 2], sizes = [8, 8], strides = [1, 1]} : vector<8x10xf32> to vector<8x8xf32>
    %397 = tpu.concatenate %393, %394, %395, %396 in 1 : vector<8x8xf32>, vector<8x8xf32>, vector<8x8xf32>, vector<8x8xf32> -> vector<8x32xf32>
    %398 = vector.extract_strided_slice %260 {offsets = [0, 0], sizes = [8, 8], strides = [1, 1]} : vector<8x10xf32> to vector<8x8xf32>
    %399 = vector.extract_strided_slice %286 {offsets = [0, 0], sizes = [8, 8], strides = [1, 1]} : vector<8x10xf32> to vector<8x8xf32>
    %400 = vector.extract_strided_slice %312 {offsets = [0, 0], sizes = [8, 8], strides = [1, 1]} : vector<8x10xf32> to vector<8x8xf32>
    %401 = vector.extract_strided_slice %338 {offsets = [0, 0], sizes = [8, 8], strides = [1, 1]} : vector<8x10xf32> to vector<8x8xf32>
    %402 = tpu.concatenate %398, %399, %400, %401 in 1 : vector<8x8xf32>, vector<8x8xf32>, vector<8x8xf32>, vector<8x8xf32> -> vector<8x32xf32>
    %403 = vector.extract_strided_slice %266 {offsets = [0, 0], sizes = [8, 8], strides = [1, 1]} : vector<8x10xf32> to vector<8x8xf32>
    %404 = vector.extract_strided_slice %292 {offsets = [0, 0], sizes = [8, 8], strides = [1, 1]} : vector<8x10xf32> to vector<8x8xf32>
    %405 = vector.extract_strided_slice %318 {offsets = [0, 0], sizes = [8, 8], strides = [1, 1]} : vector<8x10xf32> to vector<8x8xf32>
    %406 = vector.extract_strided_slice %344 {offsets = [0, 0], sizes = [8, 8], strides = [1, 1]} : vector<8x10xf32> to vector<8x8xf32>
    %407 = tpu.concatenate %403, %404, %405, %406 in 1 : vector<8x8xf32>, vector<8x8xf32>, vector<8x8xf32>, vector<8x8xf32> -> vector<8x32xf32>
    %408 = vector.extract_strided_slice %260 {offsets = [0, 2], sizes = [8, 8], strides = [1, 1]} : vector<8x10xf32> to vector<8x8xf32>
    %409 = vector.extract_strided_slice %286 {offsets = [0, 2], sizes = [8, 8], strides = [1, 1]} : vector<8x10xf32> to vector<8x8xf32>
    %410 = vector.extract_strided_slice %312 {offsets = [0, 2], sizes = [8, 8], strides = [1, 1]} : vector<8x10xf32> to vector<8x8xf32>
    %411 = vector.extract_strided_slice %338 {offsets = [0, 2], sizes = [8, 8], strides = [1, 1]} : vector<8x10xf32> to vector<8x8xf32>
    %412 = tpu.concatenate %408, %409, %410, %411 in 1 : vector<8x8xf32>, vector<8x8xf32>, vector<8x8xf32>, vector<8x8xf32> -> vector<8x32xf32>
    %413 = vector.extract_strided_slice %266 {offsets = [0, 2], sizes = [8, 8], strides = [1, 1]} : vector<8x10xf32> to vector<8x8xf32>
    %414 = vector.extract_strided_slice %292 {offsets = [0, 2], sizes = [8, 8], strides = [1, 1]} : vector<8x10xf32> to vector<8x8xf32>
    %415 = vector.extract_strided_slice %318 {offsets = [0, 2], sizes = [8, 8], strides = [1, 1]} : vector<8x10xf32> to vector<8x8xf32>
    %416 = vector.extract_strided_slice %344 {offsets = [0, 2], sizes = [8, 8], strides = [1, 1]} : vector<8x10xf32> to vector<8x8xf32>
    %417 = tpu.concatenate %413, %414, %415, %416 in 1 : vector<8x8xf32>, vector<8x8xf32>, vector<8x8xf32>, vector<8x8xf32> -> vector<8x32xf32>
    %418 = vector.extract_strided_slice %273 {offsets = [0, 0], sizes = [8, 8], strides = [1, 1]} : vector<8x10xf32> to vector<8x8xf32>
    %419 = vector.extract_strided_slice %299 {offsets = [0, 0], sizes = [8, 8], strides = [1, 1]} : vector<8x10xf32> to vector<8x8xf32>
    %420 = vector.extract_strided_slice %325 {offsets = [0, 0], sizes = [8, 8], strides = [1, 1]} : vector<8x10xf32> to vector<8x8xf32>
    %421 = vector.extract_strided_slice %351 {offsets = [0, 0], sizes = [8, 8], strides = [1, 1]} : vector<8x10xf32> to vector<8x8xf32>
    %422 = tpu.concatenate %418, %419, %420, %421 in 1 : vector<8x8xf32>, vector<8x8xf32>, vector<8x8xf32>, vector<8x8xf32> -> vector<8x32xf32>
    %423 = vector.extract_strided_slice %279 {offsets = [0, 0], sizes = [8, 8], strides = [1, 1]} : vector<8x10xf32> to vector<8x8xf32>
    %424 = vector.extract_strided_slice %305 {offsets = [0, 0], sizes = [8, 8], strides = [1, 1]} : vector<8x10xf32> to vector<8x8xf32>
    %425 = vector.extract_strided_slice %331 {offsets = [0, 0], sizes = [8, 8], strides = [1, 1]} : vector<8x10xf32> to vector<8x8xf32>
    %426 = vector.extract_strided_slice %357 {offsets = [0, 0], sizes = [8, 8], strides = [1, 1]} : vector<8x10xf32> to vector<8x8xf32>
    %427 = tpu.concatenate %423, %424, %425, %426 in 1 : vector<8x8xf32>, vector<8x8xf32>, vector<8x8xf32>, vector<8x8xf32> -> vector<8x32xf32>
    %428 = vector.extract_strided_slice %273 {offsets = [0, 2], sizes = [8, 8], strides = [1, 1]} : vector<8x10xf32> to vector<8x8xf32>
    %429 = vector.extract_strided_slice %299 {offsets = [0, 2], sizes = [8, 8], strides = [1, 1]} : vector<8x10xf32> to vector<8x8xf32>
    %430 = vector.extract_strided_slice %325 {offsets = [0, 2], sizes = [8, 8], strides = [1, 1]} : vector<8x10xf32> to vector<8x8xf32>
    %431 = vector.extract_strided_slice %351 {offsets = [0, 2], sizes = [8, 8], strides = [1, 1]} : vector<8x10xf32> to vector<8x8xf32>
    %432 = tpu.concatenate %428, %429, %430, %431 in 1 : vector<8x8xf32>, vector<8x8xf32>, vector<8x8xf32>, vector<8x8xf32> -> vector<8x32xf32>
    %433 = vector.extract_strided_slice %279 {offsets = [0, 2], sizes = [8, 8], strides = [1, 1]} : vector<8x10xf32> to vector<8x8xf32>
    %434 = vector.extract_strided_slice %305 {offsets = [0, 2], sizes = [8, 8], strides = [1, 1]} : vector<8x10xf32> to vector<8x8xf32>
    %435 = vector.extract_strided_slice %331 {offsets = [0, 2], sizes = [8, 8], strides = [1, 1]} : vector<8x10xf32> to vector<8x8xf32>
    %436 = vector.extract_strided_slice %357 {offsets = [0, 2], sizes = [8, 8], strides = [1, 1]} : vector<8x10xf32> to vector<8x8xf32>
    %437 = tpu.concatenate %433, %434, %435, %436 in 1 : vector<8x8xf32>, vector<8x8xf32>, vector<8x8xf32>, vector<8x8xf32> -> vector<8x32xf32>
    %438 = tpu.concatenate %362, %367, %372, %377, %382, %387, %392, %397, %402, %407, %412, %417, %422, %427, %432, %437 in 0 : vector<8x32xf32>, vector<8x32xf32>, vector<8x32xf32>, vector<8x32xf32>, vector<8x32xf32>, vector<8x32xf32>, vector<8x32xf32>, vector<8x32xf32>, vector<8x32xf32>, vector<8x32xf32>, vector<8x32xf32>, vector<8x32xf32>, vector<8x32xf32>, vector<8x32xf32>, vector<8x32xf32>, vector<8x32xf32> -> vector<128x32xf32>
    %439 = arith.truncf %438 : vector<128x32xf32> to vector<128x32xbf16>
    %c0_78 = arith.constant 0 : index
    %c0_79 = arith.constant 0 : index
    %440 = vector.load %arg3[%c0_78, %c0_79] : memref<8x128xbf16, #tpu.memory_space<vmem>>, vector<8x128xbf16>
    %cst_80 = arith.constant dense<0.000000e+00> : vector<8x32xf32>
    %441 = tpu.matmul %440, %439, %cst_80 {dimension_numbers = #tpu.dot_dimension_numbers<[1], [0], [0], [1], [0, 0, 1, 1], [], []>} : vector<8x128xbf16>, vector<128x32xbf16>, vector<8x32xf32> -> vector<8x32xf32>
    %c0_81 = arith.constant 0 : index
    %c0_82 = arith.constant 0 : index
    %442 = vector.load %arg4[%c0_81, %c0_82] : memref<8x1xf32, #tpu.memory_space<vmem>>, vector<8x1xf32>
    %443 = vector.broadcast %442 : vector<8x1xf32> to vector<8x32xf32>
    %444 = arith.addf %441, %443 : vector<8x32xf32>
    %cst_83 = arith.constant 0.000000e+00 : f32
    %445 = vector.broadcast %cst_83 : f32 to vector<8x32xf32>
    %446 = arith.cmpf ogt, %444, %445 : vector<8x32xf32>
    %cst_84 = arith.constant 2.000000e-01 : f32
    %447 = vector.broadcast %cst_84 : f32 to vector<8x32xf32>
    %448 = arith.mulf %447, %444 : vector<8x32xf32>
    %449 = arith.select %446, %444, %448 : vector<8x32xi1>, vector<8x32xf32>
    %450 = vector.extract_strided_slice %449 {offsets = [0, 0], sizes = [8, 2], strides = [1, 1]} : vector<8x32xf32> to vector<8x2xf32>
    %451 = vector.extract_strided_slice %449 {offsets = [0, 0], sizes = [8, 2], strides = [1, 1]} : vector<8x32xf32> to vector<8x2xf32>
    %452 = vector.extract_strided_slice %449 {offsets = [0, 2], sizes = [8, 2], strides = [1, 1]} : vector<8x32xf32> to vector<8x2xf32>
    %453 = arith.addf %450, %452 : vector<8x2xf32>
    %454 = arith.maximumf %451, %452 : vector<8x2xf32>
    %455 = vector.extract_strided_slice %449 {offsets = [0, 4], sizes = [8, 2], strides = [1, 1]} : vector<8x32xf32> to vector<8x2xf32>
    %456 = arith.addf %453, %455 : vector<8x2xf32>
    %457 = arith.maximumf %454, %455 : vector<8x2xf32>
    %458 = vector.extract_strided_slice %449 {offsets = [0, 6], sizes = [8, 2], strides = [1, 1]} : vector<8x32xf32> to vector<8x2xf32>
    %459 = arith.addf %456, %458 : vector<8x2xf32>
    %460 = arith.maximumf %457, %458 : vector<8x2xf32>
    %461 = vector.extract_strided_slice %449 {offsets = [0, 8], sizes = [8, 2], strides = [1, 1]} : vector<8x32xf32> to vector<8x2xf32>
    %462 = arith.addf %459, %461 : vector<8x2xf32>
    %463 = arith.maximumf %460, %461 : vector<8x2xf32>
    %464 = vector.extract_strided_slice %449 {offsets = [0, 10], sizes = [8, 2], strides = [1, 1]} : vector<8x32xf32> to vector<8x2xf32>
    %465 = arith.addf %462, %464 : vector<8x2xf32>
    %466 = arith.maximumf %463, %464 : vector<8x2xf32>
    %467 = vector.extract_strided_slice %449 {offsets = [0, 12], sizes = [8, 2], strides = [1, 1]} : vector<8x32xf32> to vector<8x2xf32>
    %468 = arith.addf %465, %467 : vector<8x2xf32>
    %469 = arith.maximumf %466, %467 : vector<8x2xf32>
    %470 = vector.extract_strided_slice %449 {offsets = [0, 14], sizes = [8, 2], strides = [1, 1]} : vector<8x32xf32> to vector<8x2xf32>
    %471 = arith.addf %468, %470 : vector<8x2xf32>
    %472 = arith.maximumf %469, %470 : vector<8x2xf32>
    %473 = vector.extract_strided_slice %449 {offsets = [0, 16], sizes = [8, 2], strides = [1, 1]} : vector<8x32xf32> to vector<8x2xf32>
    %474 = arith.addf %471, %473 : vector<8x2xf32>
    %475 = arith.maximumf %472, %473 : vector<8x2xf32>
    %476 = vector.extract_strided_slice %449 {offsets = [0, 18], sizes = [8, 2], strides = [1, 1]} : vector<8x32xf32> to vector<8x2xf32>
    %477 = arith.addf %474, %476 : vector<8x2xf32>
    %478 = arith.maximumf %475, %476 : vector<8x2xf32>
    %479 = vector.extract_strided_slice %449 {offsets = [0, 20], sizes = [8, 2], strides = [1, 1]} : vector<8x32xf32> to vector<8x2xf32>
    %480 = arith.addf %477, %479 : vector<8x2xf32>
    %481 = arith.maximumf %478, %479 : vector<8x2xf32>
    %482 = vector.extract_strided_slice %449 {offsets = [0, 22], sizes = [8, 2], strides = [1, 1]} : vector<8x32xf32> to vector<8x2xf32>
    %483 = arith.addf %480, %482 : vector<8x2xf32>
    %484 = arith.maximumf %481, %482 : vector<8x2xf32>
    %485 = vector.extract_strided_slice %449 {offsets = [0, 24], sizes = [8, 2], strides = [1, 1]} : vector<8x32xf32> to vector<8x2xf32>
    %486 = arith.addf %483, %485 : vector<8x2xf32>
    %487 = arith.maximumf %484, %485 : vector<8x2xf32>
    %488 = vector.extract_strided_slice %449 {offsets = [0, 26], sizes = [8, 2], strides = [1, 1]} : vector<8x32xf32> to vector<8x2xf32>
    %489 = arith.addf %486, %488 : vector<8x2xf32>
    %490 = arith.maximumf %487, %488 : vector<8x2xf32>
    %491 = vector.extract_strided_slice %449 {offsets = [0, 28], sizes = [8, 2], strides = [1, 1]} : vector<8x32xf32> to vector<8x2xf32>
    %492 = arith.addf %489, %491 : vector<8x2xf32>
    %493 = arith.maximumf %490, %491 : vector<8x2xf32>
    %494 = vector.extract_strided_slice %449 {offsets = [0, 30], sizes = [8, 2], strides = [1, 1]} : vector<8x32xf32> to vector<8x2xf32>
    %495 = arith.addf %492, %494 : vector<8x2xf32>
    %496 = arith.maximumf %493, %494 : vector<8x2xf32>
    %cst_85 = arith.constant 6.250000e-02 : f32
    %497 = vector.broadcast %cst_85 : f32 to vector<8x2xf32>
    %498 = arith.mulf %495, %497 : vector<8x2xf32>
    %c0_86 = arith.constant 0 : index
    %c0_87 = arith.constant 0 : index
    %499 = vector.load %arg5[%c0_86, %c0_87] : memref<8x1xf32, #tpu.memory_space<vmem>>, vector<8x1xf32>
    %500 = vector.broadcast %499 : vector<8x1xf32> to vector<8x2xf32>
    %501 = arith.mulf %500, %498 : vector<8x2xf32>
    %cst_88 = arith.constant dense<0.000000e+00> : vector<2xf32>
    %502 = vector.multi_reduction <add>, %501, %cst_88 [0] : vector<8x2xf32> to vector<2xf32>
    %503 = vector.shape_cast %502 : vector<2xf32> to vector<1x2xf32>
    %c0_89 = arith.constant 0 : index
    %c0_90 = arith.constant 0 : index
    %504 = vector.load %arg6[%c0_89, %c0_90] : memref<1x1xf32, #tpu.memory_space<vmem>>, vector<1x1xf32>
    %505 = vector.broadcast %504 : vector<1x1xf32> to vector<1x2xf32>
    %506 = arith.addf %503, %505 : vector<1x2xf32>
    %c0_91 = arith.constant 0 : index
    %c0_92 = arith.constant 0 : index
    %507 = vector.load %arg7[%c0_91, %c0_92] : memref<8x1xf32, #tpu.memory_space<vmem>>, vector<8x1xf32>
    %508 = vector.broadcast %507 : vector<8x1xf32> to vector<8x2xf32>
    %509 = arith.mulf %508, %496 : vector<8x2xf32>
    %cst_93 = arith.constant dense<0.000000e+00> : vector<2xf32>
    %510 = vector.multi_reduction <add>, %509, %cst_93 [0] : vector<8x2xf32> to vector<2xf32>
    %511 = vector.shape_cast %510 : vector<2xf32> to vector<1x2xf32>
    %c0_94 = arith.constant 0 : index
    %c0_95 = arith.constant 0 : index
    %512 = vector.load %arg8[%c0_94, %c0_95] : memref<1x1xf32, #tpu.memory_space<vmem>>, vector<1x1xf32>
    %513 = vector.broadcast %512 : vector<1x1xf32> to vector<1x2xf32>
    %514 = arith.addf %511, %513 : vector<1x2xf32>
    %515 = tpu.concatenate %506, %514 in 0 : vector<1x2xf32>, vector<1x2xf32> -> vector<2x2xf32>
    %c0_96 = arith.constant 0 : index
    %c0_97 = arith.constant 0 : index
    %516 = vector.load %arg16[%c0_96, %c0_97] : memref<2x2xf32, #tpu.memory_space<vmem>>, vector<2x2xf32>
    tpu.vector_store %arg16[%c0_96, %c0_97], %515 {strides = array<i32>} : memref<2x2xf32, #tpu.memory_space<vmem>>, vector<2x2xf32>,
    %c0_98 = arith.constant 0 : index
    %c0_99 = arith.constant 0 : index
    %517 = vector.load %arg11[%c0_98, %c0_99] : memref<8x16xf32, #tpu.memory_space<vmem>>, vector<8x8xf32>
    %c0_100 = arith.constant 0 : index
    %c0_101 = arith.constant 0 : index
    %518 = vector.load %arg9[%c0_100, %c0_101] : memref<1x8xf32, #tpu.memory_space<vmem>>, vector<1x8xf32>
    %519 = vector.broadcast %518 : vector<1x8xf32> to vector<8x8xf32>
    %520 = arith.mulf %517, %519 : vector<8x8xf32>
    %c0_102 = arith.constant 0 : index
    %c8_103 = arith.constant 8 : index
    %521 = vector.load %arg11[%c0_102, %c8_103] : memref<8x16xf32, #tpu.memory_space<vmem>>, vector<8x8xf32>
    %c0_104 = arith.constant 0 : index
    %c0_105 = arith.constant 0 : index
    %522 = vector.load %arg10[%c0_104, %c0_105] : memref<1x8xf32, #tpu.memory_space<vmem>>, vector<1x8xf32>
    %523 = vector.broadcast %522 : vector<1x8xf32> to vector<8x8xf32>
    %524 = arith.mulf %521, %523 : vector<8x8xf32>
    %525 = arith.addf %520, %524 : vector<8x8xf32>
    %cst_106 = arith.constant dense<0.000000e+00> : vector<8x32xf32>
    %526 = tpu.matmul %525, %449, %cst_106 {dimension_numbers = #tpu.dot_dimension_numbers<[1], [0], [0], [1], [0, 0, 1, 1], [], []>} : vector<8x8xf32>, vector<8x32xf32>, vector<8x32xf32> -> vector<8x32xf32>
    %c0_107 = arith.constant 0 : index
    %c0_108 = arith.constant 0 : index
    %527 = vector.load %arg12[%c0_107, %c0_108] : memref<8x1xf32, #tpu.memory_space<vmem>>, vector<8x1xf32>
    %528 = vector.broadcast %527 : vector<8x1xf32> to vector<8x32xf32>
    %529 = arith.addf %526, %528 : vector<8x32xf32>
    %cst_109 = arith.constant 0.000000e+00 : f32
    %530 = vector.broadcast %cst_109 : f32 to vector<8x32xf32>
    %531 = arith.cmpf ogt, %529, %530 : vector<8x32xf32>
    %cst_110 = arith.constant 2.000000e-01 : f32
    %532 = vector.broadcast %cst_110 : f32 to vector<8x32xf32>
    %533 = arith.mulf %532, %529 : vector<8x32xf32>
    %534 = arith.select %531, %529, %533 : vector<8x32xi1>, vector<8x32xf32>
    %cst_111 = arith.constant dense<0.000000e+00> : vector<32xf32>
    %535 = vector.multi_reduction <add>, %534, %cst_111 [0] : vector<8x32xf32> to vector<32xf32>
    %536 = vector.shape_cast %535 : vector<32xf32> to vector<1x32xf32>
    %c0_112 = arith.constant 0 : index
    %c0_113 = arith.constant 0 : index
    %537 = vector.load %arg17[%c0_112, %c0_113] : memref<1x32xf32, #tpu.memory_space<vmem>>, vector<1x32xf32>
    tpu.vector_store %arg17[%c0_112, %c0_113], %536 {strides = array<i32>} : memref<1x32xf32, #tpu.memory_space<vmem>>, vector<1x32xf32>,
    %538 = vector.extract_strided_slice %534 {offsets = [0, 8], sizes = [8, 8], strides = [1, 1]} : vector<8x32xf32> to vector<8x8xf32>
    %539 = vector.extract_strided_slice %538 {offsets = [0, 2], sizes = [8, 2], strides = [1, 1]} : vector<8x8xf32> to vector<8x2xf32>
    %540 = vector.extract_strided_slice %538 {offsets = [0, 0], sizes = [8, 2], strides = [1, 1]} : vector<8x8xf32> to vector<8x2xf32>
    %541 = vector.extract_strided_slice %538 {offsets = [0, 2], sizes = [8, 2], strides = [1, 1]} : vector<8x8xf32> to vector<8x2xf32>
    %542 = vector.extract_strided_slice %538 {offsets = [0, 4], sizes = [8, 2], strides = [1, 1]} : vector<8x8xf32> to vector<8x2xf32>
    %543 = vector.extract_strided_slice %538 {offsets = [0, 6], sizes = [8, 2], strides = [1, 1]} : vector<8x8xf32> to vector<8x2xf32>
    %544 = vector.extract_strided_slice %538 {offsets = [0, 4], sizes = [8, 2], strides = [1, 1]} : vector<8x8xf32> to vector<8x2xf32>
    %545 = tpu.concatenate %539, %540, %541, %542, %543, %544 in 1 : vector<8x2xf32>, vector<8x2xf32>, vector<8x2xf32>, vector<8x2xf32>, vector<8x2xf32>, vector<8x2xf32> -> vector<8x12xf32>
    %546 = vector.extract_strided_slice %534 {offsets = [0, 0], sizes = [8, 8], strides = [1, 1]} : vector<8x32xf32> to vector<8x8xf32>
    %547 = vector.extract_strided_slice %546 {offsets = [0, 2], sizes = [8, 2], strides = [1, 1]} : vector<8x8xf32> to vector<8x2xf32>
    %548 = vector.extract_strided_slice %546 {offsets = [0, 0], sizes = [8, 2], strides = [1, 1]} : vector<8x8xf32> to vector<8x2xf32>
    %549 = vector.extract_strided_slice %546 {offsets = [0, 2], sizes = [8, 2], strides = [1, 1]} : vector<8x8xf32> to vector<8x2xf32>
    %550 = vector.extract_strided_slice %546 {offsets = [0, 4], sizes = [8, 2], strides = [1, 1]} : vector<8x8xf32> to vector<8x2xf32>
    %551 = vector.extract_strided_slice %546 {offsets = [0, 6], sizes = [8, 2], strides = [1, 1]} : vector<8x8xf32> to vector<8x2xf32>
    %552 = vector.extract_strided_slice %546 {offsets = [0, 4], sizes = [8, 2], strides = [1, 1]} : vector<8x8xf32> to vector<8x2xf32>
    %553 = tpu.concatenate %547, %548, %549, %550, %551, %552 in 1 : vector<8x2xf32>, vector<8x2xf32>, vector<8x2xf32>, vector<8x2xf32>, vector<8x2xf32>, vector<8x2xf32> -> vector<8x12xf32>
    %554 = vector.extract_strided_slice %534 {offsets = [0, 8], sizes = [8, 8], strides = [1, 1]} : vector<8x32xf32> to vector<8x8xf32>
    %555 = vector.extract_strided_slice %554 {offsets = [0, 2], sizes = [8, 2], strides = [1, 1]} : vector<8x8xf32> to vector<8x2xf32>
    %556 = vector.extract_strided_slice %554 {offsets = [0, 0], sizes = [8, 2], strides = [1, 1]} : vector<8x8xf32> to vector<8x2xf32>
    %557 = vector.extract_strided_slice %554 {offsets = [0, 2], sizes = [8, 2], strides = [1, 1]} : vector<8x8xf32> to vector<8x2xf32>
    %558 = vector.extract_strided_slice %554 {offsets = [0, 4], sizes = [8, 2], strides = [1, 1]} : vector<8x8xf32> to vector<8x2xf32>
    %559 = vector.extract_strided_slice %554 {offsets = [0, 6], sizes = [8, 2], strides = [1, 1]} : vector<8x8xf32> to vector<8x2xf32>
    %560 = vector.extract_strided_slice %554 {offsets = [0, 4], sizes = [8, 2], strides = [1, 1]} : vector<8x8xf32> to vector<8x2xf32>
    %561 = tpu.concatenate %555, %556, %557, %558, %559, %560 in 1 : vector<8x2xf32>, vector<8x2xf32>, vector<8x2xf32>, vector<8x2xf32>, vector<8x2xf32>, vector<8x2xf32> -> vector<8x12xf32>
    %562 = vector.extract_strided_slice %534 {offsets = [0, 16], sizes = [8, 8], strides = [1, 1]} : vector<8x32xf32> to vector<8x8xf32>
    %563 = vector.extract_strided_slice %562 {offsets = [0, 2], sizes = [8, 2], strides = [1, 1]} : vector<8x8xf32> to vector<8x2xf32>
    %564 = vector.extract_strided_slice %562 {offsets = [0, 0], sizes = [8, 2], strides = [1, 1]} : vector<8x8xf32> to vector<8x2xf32>
    %565 = vector.extract_strided_slice %562 {offsets = [0, 2], sizes = [8, 2], strides = [1, 1]} : vector<8x8xf32> to vector<8x2xf32>
    %566 = vector.extract_strided_slice %562 {offsets = [0, 4], sizes = [8, 2], strides = [1, 1]} : vector<8x8xf32> to vector<8x2xf32>
    %567 = vector.extract_strided_slice %562 {offsets = [0, 6], sizes = [8, 2], strides = [1, 1]} : vector<8x8xf32> to vector<8x2xf32>
    %568 = vector.extract_strided_slice %562 {offsets = [0, 4], sizes = [8, 2], strides = [1, 1]} : vector<8x8xf32> to vector<8x2xf32>
    %569 = tpu.concatenate %563, %564, %565, %566, %567, %568 in 1 : vector<8x2xf32>, vector<8x2xf32>, vector<8x2xf32>, vector<8x2xf32>, vector<8x2xf32>, vector<8x2xf32> -> vector<8x12xf32>
    %570 = vector.extract_strided_slice %534 {offsets = [0, 24], sizes = [8, 8], strides = [1, 1]} : vector<8x32xf32> to vector<8x8xf32>
    %571 = vector.extract_strided_slice %570 {offsets = [0, 2], sizes = [8, 2], strides = [1, 1]} : vector<8x8xf32> to vector<8x2xf32>
    %572 = vector.extract_strided_slice %570 {offsets = [0, 0], sizes = [8, 2], strides = [1, 1]} : vector<8x8xf32> to vector<8x2xf32>
    %573 = vector.extract_strided_slice %570 {offsets = [0, 2], sizes = [8, 2], strides = [1, 1]} : vector<8x8xf32> to vector<8x2xf32>
    %574 = vector.extract_strided_slice %570 {offsets = [0, 4], sizes = [8, 2], strides = [1, 1]} : vector<8x8xf32> to vector<8x2xf32>
    %575 = vector.extract_strided_slice %570 {offsets = [0, 6], sizes = [8, 2], strides = [1, 1]} : vector<8x8xf32> to vector<8x2xf32>
    %576 = vector.extract_strided_slice %570 {offsets = [0, 4], sizes = [8, 2], strides = [1, 1]} : vector<8x8xf32> to vector<8x2xf32>
    %577 = tpu.concatenate %571, %572, %573, %574, %575, %576 in 1 : vector<8x2xf32>, vector<8x2xf32>, vector<8x2xf32>, vector<8x2xf32>, vector<8x2xf32>, vector<8x2xf32> -> vector<8x12xf32>
    %578 = vector.extract_strided_slice %534 {offsets = [0, 16], sizes = [8, 8], strides = [1, 1]} : vector<8x32xf32> to vector<8x8xf32>
    %579 = vector.extract_strided_slice %578 {offsets = [0, 2], sizes = [8, 2], strides = [1, 1]} : vector<8x8xf32> to vector<8x2xf32>
    %580 = vector.extract_strided_slice %578 {offsets = [0, 0], sizes = [8, 2], strides = [1, 1]} : vector<8x8xf32> to vector<8x2xf32>
    %581 = vector.extract_strided_slice %578 {offsets = [0, 2], sizes = [8, 2], strides = [1, 1]} : vector<8x8xf32> to vector<8x2xf32>
    %582 = vector.extract_strided_slice %578 {offsets = [0, 4], sizes = [8, 2], strides = [1, 1]} : vector<8x8xf32> to vector<8x2xf32>
    %583 = vector.extract_strided_slice %578 {offsets = [0, 6], sizes = [8, 2], strides = [1, 1]} : vector<8x8xf32> to vector<8x2xf32>
    %584 = vector.extract_strided_slice %578 {offsets = [0, 4], sizes = [8, 2], strides = [1, 1]} : vector<8x8xf32> to vector<8x2xf32>
    %585 = tpu.concatenate %579, %580, %581, %582, %583, %584 in 1 : vector<8x2xf32>, vector<8x2xf32>, vector<8x2xf32>, vector<8x2xf32>, vector<8x2xf32>, vector<8x2xf32> -> vector<8x12xf32>
    %586 = vector.extract_strided_slice %545 {offsets = [0, 0], sizes = [8, 6], strides = [1, 1]} : vector<8x12xf32> to vector<8x6xf32>
    %587 = vector.extract_strided_slice %553 {offsets = [0, 0], sizes = [8, 6], strides = [1, 1]} : vector<8x12xf32> to vector<8x6xf32>
    %588 = vector.extract_strided_slice %561 {offsets = [0, 0], sizes = [8, 6], strides = [1, 1]} : vector<8x12xf32> to vector<8x6xf32>
    %589 = tpu.concatenate %586, %587, %588 in 1 : vector<8x6xf32>, vector<8x6xf32>, vector<8x6xf32> -> vector<8x18xf32>
    %590 = vector.extract_strided_slice %545 {offsets = [0, 2], sizes = [8, 6], strides = [1, 1]} : vector<8x12xf32> to vector<8x6xf32>
    %591 = vector.extract_strided_slice %553 {offsets = [0, 2], sizes = [8, 6], strides = [1, 1]} : vector<8x12xf32> to vector<8x6xf32>
    %592 = vector.extract_strided_slice %561 {offsets = [0, 2], sizes = [8, 6], strides = [1, 1]} : vector<8x12xf32> to vector<8x6xf32>
    %593 = tpu.concatenate %590, %591, %592 in 1 : vector<8x6xf32>, vector<8x6xf32>, vector<8x6xf32> -> vector<8x18xf32>
    %594 = vector.extract_strided_slice %545 {offsets = [0, 4], sizes = [8, 6], strides = [1, 1]} : vector<8x12xf32> to vector<8x6xf32>
    %595 = vector.extract_strided_slice %553 {offsets = [0, 4], sizes = [8, 6], strides = [1, 1]} : vector<8x12xf32> to vector<8x6xf32>
    %596 = vector.extract_strided_slice %561 {offsets = [0, 4], sizes = [8, 6], strides = [1, 1]} : vector<8x12xf32> to vector<8x6xf32>
    %597 = tpu.concatenate %594, %595, %596 in 1 : vector<8x6xf32>, vector<8x6xf32>, vector<8x6xf32> -> vector<8x18xf32>
    %598 = vector.extract_strided_slice %545 {offsets = [0, 6], sizes = [8, 6], strides = [1, 1]} : vector<8x12xf32> to vector<8x6xf32>
    %599 = vector.extract_strided_slice %553 {offsets = [0, 6], sizes = [8, 6], strides = [1, 1]} : vector<8x12xf32> to vector<8x6xf32>
    %600 = vector.extract_strided_slice %561 {offsets = [0, 6], sizes = [8, 6], strides = [1, 1]} : vector<8x12xf32> to vector<8x6xf32>
    %601 = tpu.concatenate %598, %599, %600 in 1 : vector<8x6xf32>, vector<8x6xf32>, vector<8x6xf32> -> vector<8x18xf32>
    %602 = vector.extract_strided_slice %553 {offsets = [0, 0], sizes = [8, 6], strides = [1, 1]} : vector<8x12xf32> to vector<8x6xf32>
    %603 = vector.extract_strided_slice %561 {offsets = [0, 0], sizes = [8, 6], strides = [1, 1]} : vector<8x12xf32> to vector<8x6xf32>
    %604 = vector.extract_strided_slice %569 {offsets = [0, 0], sizes = [8, 6], strides = [1, 1]} : vector<8x12xf32> to vector<8x6xf32>
    %605 = tpu.concatenate %602, %603, %604 in 1 : vector<8x6xf32>, vector<8x6xf32>, vector<8x6xf32> -> vector<8x18xf32>
    %606 = vector.extract_strided_slice %553 {offsets = [0, 2], sizes = [8, 6], strides = [1, 1]} : vector<8x12xf32> to vector<8x6xf32>
    %607 = vector.extract_strided_slice %561 {offsets = [0, 2], sizes = [8, 6], strides = [1, 1]} : vector<8x12xf32> to vector<8x6xf32>
    %608 = vector.extract_strided_slice %569 {offsets = [0, 2], sizes = [8, 6], strides = [1, 1]} : vector<8x12xf32> to vector<8x6xf32>
    %609 = tpu.concatenate %606, %607, %608 in 1 : vector<8x6xf32>, vector<8x6xf32>, vector<8x6xf32> -> vector<8x18xf32>
    %610 = vector.extract_strided_slice %553 {offsets = [0, 4], sizes = [8, 6], strides = [1, 1]} : vector<8x12xf32> to vector<8x6xf32>
    %611 = vector.extract_strided_slice %561 {offsets = [0, 4], sizes = [8, 6], strides = [1, 1]} : vector<8x12xf32> to vector<8x6xf32>
    %612 = vector.extract_strided_slice %569 {offsets = [0, 4], sizes = [8, 6], strides = [1, 1]} : vector<8x12xf32> to vector<8x6xf32>
    %613 = tpu.concatenate %610, %611, %612 in 1 : vector<8x6xf32>, vector<8x6xf32>, vector<8x6xf32> -> vector<8x18xf32>
    %614 = vector.extract_strided_slice %553 {offsets = [0, 6], sizes = [8, 6], strides = [1, 1]} : vector<8x12xf32> to vector<8x6xf32>
    %615 = vector.extract_strided_slice %561 {offsets = [0, 6], sizes = [8, 6], strides = [1, 1]} : vector<8x12xf32> to vector<8x6xf32>
    %616 = vector.extract_strided_slice %569 {offsets = [0, 6], sizes = [8, 6], strides = [1, 1]} : vector<8x12xf32> to vector<8x6xf32>
    %617 = tpu.concatenate %614, %615, %616 in 1 : vector<8x6xf32>, vector<8x6xf32>, vector<8x6xf32> -> vector<8x18xf32>
    %618 = vector.extract_strided_slice %561 {offsets = [0, 0], sizes = [8, 6], strides = [1, 1]} : vector<8x12xf32> to vector<8x6xf32>
    %619 = vector.extract_strided_slice %569 {offsets = [0, 0], sizes = [8, 6], strides = [1, 1]} : vector<8x12xf32> to vector<8x6xf32>
    %620 = vector.extract_strided_slice %577 {offsets = [0, 0], sizes = [8, 6], strides = [1, 1]} : vector<8x12xf32> to vector<8x6xf32>
    %621 = tpu.concatenate %618, %619, %620 in 1 : vector<8x6xf32>, vector<8x6xf32>, vector<8x6xf32> -> vector<8x18xf32>
    %622 = vector.extract_strided_slice %561 {offsets = [0, 2], sizes = [8, 6], strides = [1, 1]} : vector<8x12xf32> to vector<8x6xf32>
    %623 = vector.extract_strided_slice %569 {offsets = [0, 2], sizes = [8, 6], strides = [1, 1]} : vector<8x12xf32> to vector<8x6xf32>
    %624 = vector.extract_strided_slice %577 {offsets = [0, 2], sizes = [8, 6], strides = [1, 1]} : vector<8x12xf32> to vector<8x6xf32>
    %625 = tpu.concatenate %622, %623, %624 in 1 : vector<8x6xf32>, vector<8x6xf32>, vector<8x6xf32> -> vector<8x18xf32>
    %626 = vector.extract_strided_slice %561 {offsets = [0, 4], sizes = [8, 6], strides = [1, 1]} : vector<8x12xf32> to vector<8x6xf32>
    %627 = vector.extract_strided_slice %569 {offsets = [0, 4], sizes = [8, 6], strides = [1, 1]} : vector<8x12xf32> to vector<8x6xf32>
    %628 = vector.extract_strided_slice %577 {offsets = [0, 4], sizes = [8, 6], strides = [1, 1]} : vector<8x12xf32> to vector<8x6xf32>
    %629 = tpu.concatenate %626, %627, %628 in 1 : vector<8x6xf32>, vector<8x6xf32>, vector<8x6xf32> -> vector<8x18xf32>
    %630 = vector.extract_strided_slice %561 {offsets = [0, 6], sizes = [8, 6], strides = [1, 1]} : vector<8x12xf32> to vector<8x6xf32>
    %631 = vector.extract_strided_slice %569 {offsets = [0, 6], sizes = [8, 6], strides = [1, 1]} : vector<8x12xf32> to vector<8x6xf32>
    %632 = vector.extract_strided_slice %577 {offsets = [0, 6], sizes = [8, 6], strides = [1, 1]} : vector<8x12xf32> to vector<8x6xf32>
    %633 = tpu.concatenate %630, %631, %632 in 1 : vector<8x6xf32>, vector<8x6xf32>, vector<8x6xf32> -> vector<8x18xf32>
    %634 = vector.extract_strided_slice %569 {offsets = [0, 0], sizes = [8, 6], strides = [1, 1]} : vector<8x12xf32> to vector<8x6xf32>
    %635 = vector.extract_strided_slice %577 {offsets = [0, 0], sizes = [8, 6], strides = [1, 1]} : vector<8x12xf32> to vector<8x6xf32>
    %636 = vector.extract_strided_slice %585 {offsets = [0, 0], sizes = [8, 6], strides = [1, 1]} : vector<8x12xf32> to vector<8x6xf32>
    %637 = tpu.concatenate %634, %635, %636 in 1 : vector<8x6xf32>, vector<8x6xf32>, vector<8x6xf32> -> vector<8x18xf32>
    %638 = vector.extract_strided_slice %569 {offsets = [0, 2], sizes = [8, 6], strides = [1, 1]} : vector<8x12xf32> to vector<8x6xf32>
    %639 = vector.extract_strided_slice %577 {offsets = [0, 2], sizes = [8, 6], strides = [1, 1]} : vector<8x12xf32> to vector<8x6xf32>
    %640 = vector.extract_strided_slice %585 {offsets = [0, 2], sizes = [8, 6], strides = [1, 1]} : vector<8x12xf32> to vector<8x6xf32>
    %641 = tpu.concatenate %638, %639, %640 in 1 : vector<8x6xf32>, vector<8x6xf32>, vector<8x6xf32> -> vector<8x18xf32>
    %642 = vector.extract_strided_slice %569 {offsets = [0, 4], sizes = [8, 6], strides = [1, 1]} : vector<8x12xf32> to vector<8x6xf32>
    %643 = vector.extract_strided_slice %577 {offsets = [0, 4], sizes = [8, 6], strides = [1, 1]} : vector<8x12xf32> to vector<8x6xf32>
    %644 = vector.extract_strided_slice %585 {offsets = [0, 4], sizes = [8, 6], strides = [1, 1]} : vector<8x12xf32> to vector<8x6xf32>
    %645 = tpu.concatenate %642, %643, %644 in 1 : vector<8x6xf32>, vector<8x6xf32>, vector<8x6xf32> -> vector<8x18xf32>
    %646 = vector.extract_strided_slice %569 {offsets = [0, 6], sizes = [8, 6], strides = [1, 1]} : vector<8x12xf32> to vector<8x6xf32>
    %647 = vector.extract_strided_slice %577 {offsets = [0, 6], sizes = [8, 6], strides = [1, 1]} : vector<8x12xf32> to vector<8x6xf32>
    %648 = vector.extract_strided_slice %585 {offsets = [0, 6], sizes = [8, 6], strides = [1, 1]} : vector<8x12xf32> to vector<8x6xf32>
    %649 = tpu.concatenate %646, %647, %648 in 1 : vector<8x6xf32>, vector<8x6xf32>, vector<8x6xf32> -> vector<8x18xf32>
    %650 = tpu.concatenate %589, %593, %597, %601, %605, %609, %613, %617, %621, %625, %629, %633, %637, %641, %645, %649 in 0 : vector<8x18xf32>, vector<8x18xf32>, vector<8x18xf32>, vector<8x18xf32>, vector<8x18xf32>, vector<8x18xf32>, vector<8x18xf32>, vector<8x18xf32>, vector<8x18xf32>, vector<8x18xf32>, vector<8x18xf32>, vector<8x18xf32>, vector<8x18xf32>, vector<8x18xf32>, vector<8x18xf32>, vector<8x18xf32> -> vector<128x18xf32>
    %651 = arith.truncf %650 : vector<128x18xf32> to vector<128x18xbf16>
    %c0_114 = arith.constant 0 : index
    %c0_115 = arith.constant 0 : index
    %652 = vector.load %arg13[%c0_114, %c0_115] : memref<1x128xbf16, #tpu.memory_space<vmem>>, vector<1x128xbf16>
    %cst_116 = arith.constant dense<0.000000e+00> : vector<1x18xf32>
    %653 = tpu.matmul %652, %651, %cst_116 {dimension_numbers = #tpu.dot_dimension_numbers<[1], [0], [0], [1], [0, 0, 1, 1], [], []>} : vector<1x128xbf16>, vector<128x18xbf16>, vector<1x18xf32> -> vector<1x18xf32>
    %c0_117 = arith.constant 0 : index
    %c0_118 = arith.constant 0 : index
    %654 = vector.load %arg14[%c0_117, %c0_118] : memref<1x1xf32, #tpu.memory_space<vmem>>, vector<1x1xf32>
    %655 = vector.broadcast %654 : vector<1x1xf32> to vector<1x18xf32>
    %656 = arith.addf %653, %655 : vector<1x18xf32>
    %c0_119 = arith.constant 0 : index
    %c0_120 = arith.constant 0 : index
    %657 = vector.load %arg15[%c0_119, %c0_120] : memref<1x18xf32, #tpu.memory_space<vmem>>, vector<1x18xf32>
    tpu.vector_store %arg15[%c0_119, %c0_120], %656 {strides = array<i32>} : memref<1x18xf32, #tpu.memory_space<vmem>>, vector<1x18xf32>,
    return
  }
}

</mosaic_0001>

<llo_original>
// kernel: discriminator_forward.1
$region0: #{discriminator_forward.1}
  #allocation0 [shape = 'u32[]', space=smem, size = 0x4, offset = 0x4, fixed_abs, tag = 'smem constant byte address 0x4 - core index']
  #allocation1 [shape = 'u32[144,128]{1,0:T(1,128)}', space=vmem, size = 0x12000, scoped, tag = 'internal scratch']
  #allocation2 [shape = 'f32[1,1]{1,0:T(1,128)S(1)}', space=vmem, size = 0x200, scoped, tag = 'scoped memory for discriminator_forward.1']
  #allocation3 [shape = 'f32[1,1]{1,0:T(1,128)S(1)}', space=vmem, size = 0x200, scoped, tag = 'scoped memory for discriminator_forward.1']
  #allocation4 [shape = 'f32[1,1]{1,0:T(1,128)S(1)}', space=vmem, size = 0x200, scoped, tag = 'scoped memory for discriminator_forward.1']
  %s0 = inlined_call_operand.vmem [shape: f32[36,8,18], index: 0, kind: input, shape index: {}]
  %s1 = inlined_call_operand.vmem [shape: bf16[8,128], index: 1, kind: input, shape index: {}]
  %s2 = inlined_call_operand.vmem [shape: f32[8,1], index: 2, kind: input, shape index: {}]
  %s3 = inlined_call_operand.vmem [shape: bf16[8,128], index: 3, kind: input, shape index: {}]
  %s4 = inlined_call_operand.vmem [shape: f32[8,1], index: 4, kind: input, shape index: {}]
  %s5 = inlined_call_operand.vmem [shape: f32[8,1], index: 5, kind: input, shape index: {}]
  %s6 = inlined_call_operand.<no memory space> [shape: f32[1,1], index: 6, kind: input, shape index: {}]
  %s7 = inlined_call_operand.vmem [shape: f32[8,1], index: 7, kind: input, shape index: {}]
  %s8 = inlined_call_operand.<no memory space> [shape: f32[1,1], index: 8, kind: input, shape index: {}]
  %s9 = inlined_call_operand.vmem [shape: f32[1,8], index: 9, kind: input, shape index: {}]
  %s10 = inlined_call_operand.vmem [shape: f32[1,8], index: 10, kind: input, shape index: {}]
  %s11 = inlined_call_operand.vmem [shape: f32[8,16], index: 11, kind: input, shape index: {}]
  %s12 = inlined_call_operand.vmem [shape: f32[8,1], index: 12, kind: input, shape index: {}]
  %s13 = inlined_call_operand.vmem [shape: bf16[1,128], index: 13, kind: input, shape index: {}]
  %s14 = inlined_call_operand.<no memory space> [shape: f32[1,1], index: 14, kind: input, shape index: {}]
  %s15 = inlined_call_operand.vmem [shape: f32[1,18], index: 15, kind: output, shape index: {0}]
  %s16 = inlined_call_operand.vmem [shape: f32[2,2], index: 16, kind: output, shape index: {1}]
  %s17 = inlined_call_operand.vmem [shape: f32[1,32], index: 17, kind: output, shape index: {2}]
  %18 = xla_tuple %s15, %s16, %s17
  %s19 = sld [smem:[#allocation0]]
  $region86: #{discriminator_forward.1} parent=0
    _
  %s21 = ssub.s32 1, %s19
  %s22 = scalar_select 0, %s21, %s19
  %v23 = vstv %s6
  %24 = vst [vmem:[#allocation2] sm:$0x1] %v23
  %v25 = vstv %s8
  %26 = vst [vmem:[#allocation3] sm:$0x1] %v25
  %v27 = vstv %s14
  %28 = vst [vmem:[#allocation4] sm:$0x1] %v27
  // Predicated region
  $region2: #{discriminator_forward.1} parent=0 // pred_check
    _
  $region3: #{discriminator_forward.1} parent=0 // pred_check_branch
    %30 = sbr.rel (0) target = $region5
  $region4: #{discriminator_forward.1} parent=0 // pred_region
    _
  $region5: #{discriminator_forward.1} parent=0 // pred_fallthru
    _
  // Predicated region
  $region6: #{discriminator_forward.1} parent=0 // pred_check
    _
  $region7: #{discriminator_forward.1} parent=0 // pred_check_branch
    %32 = sbr.rel (0) target = $region9
  $region8: #{discriminator_forward.1} parent=0 // pred_region
    _
  $region9: #{discriminator_forward.1} parent=0 // pred_fallthru
    _
  // Predicated region
  $region10: #{discriminator_forward.1} parent=0 // pred_check
    _
  $region11: #{discriminator_forward.1} parent=0 // pred_check_branch
    %34 = sbr.rel (0) target = $region13
  $region12: #{discriminator_forward.1} parent=0 // pred_region
    _
  $region13: #{discriminator_forward.1} parent=0 // pred_fallthru
    _
  // Predicated region
  $region14: #{discriminator_forward.1} parent=0 // pred_check
    _
  $region15: #{discriminator_forward.1} parent=0 // pred_check_branch
    %36 = sbr.rel (0) target = $region17
  $region16: #{discriminator_forward.1} parent=0 // pred_region
    _
  $region17: #{discriminator_forward.1} parent=0 // pred_fallthru
    _
  // Predicated region
  $region18: #{discriminator_forward.1} parent=0 // pred_check
    _
  $region19: #{discriminator_forward.1} parent=0 // pred_check_branch
    %38 = sbr.rel (0) target = $region21
  $region20: #{discriminator_forward.1} parent=0 // pred_region
    _
  $region21: #{discriminator_forward.1} parent=0 // pred_fallthru
    _
  // Predicated region
  $region22: #{discriminator_forward.1} parent=0 // pred_check
    _
  $region23: #{discriminator_forward.1} parent=0 // pred_check_branch
    %40 = sbr.rel (0) target = $region25
  $region24: #{discriminator_forward.1} parent=0 // pred_region
    _
  $region25: #{discriminator_forward.1} parent=0 // pred_fallthru
    _
  // Predicated region
  $region26: #{discriminator_forward.1} parent=0 // pred_check
    _
  $region27: #{discriminator_forward.1} parent=0 // pred_check_branch
    %42 = sbr.rel (0) target = $region29
  $region28: #{discriminator_forward.1} parent=0 // pred_region
    _
  $region29: #{discriminator_forward.1} parent=0 // pred_fallthru
    _
  // Predicated region
  $region30: #{discriminator_forward.1} parent=0 // pred_check
    _
  $region31: #{discriminator_forward.1} parent=0 // pred_check_branch
    %44 = sbr.rel (0) target = $region33
  $region32: #{discriminator_forward.1} parent=0 // pred_region
    _
  $region33: #{discriminator_forward.1} parent=0 // pred_fallthru
    _
  // Predicated region
  $region34: #{discriminator_forward.1} parent=0 // pred_check
    _
  $region35: #{discriminator_forward.1} parent=0 // pred_check_branch
    %46 = sbr.rel (0) target = $region37
  $region36: #{discriminator_forward.1} parent=0 // pred_region
    _
  $region37: #{discriminator_forward.1} parent=0 // pred_fallthru
    _
  // Predicated region
  $region38: #{discriminator_forward.1} parent=0 // pred_check
    _
  $region39: #{discriminator_forward.1} parent=0 // pred_check_branch
    %48 = sbr.rel (0) target = $region41
  $region40: #{discriminator_forward.1} parent=0 // pred_region
    _
  $region41: #{discriminator_forward.1} parent=0 // pred_fallthru
    _
  // Predicated region
  $region42: #{discriminator_forward.1} parent=0 // pred_check
    _
  $region43: #{discriminator_forward.1} parent=0 // pred_check_branch
    %50 = sbr.rel (0) target = $region45
  $region44: #{discriminator_forward.1} parent=0 // pred_region
    _
  $region45: #{discriminator_forward.1} parent=0 // pred_fallthru
    _
  // Predicated region
  $region46: #{discriminator_forward.1} parent=0 // pred_check
    _
  $region47: #{discriminator_forward.1} parent=0 // pred_check_branch
    %52 = sbr.rel (0) target = $region49
  $region48: #{discriminator_forward.1} parent=0 // pred_region
    _
  $region49: #{discriminator_forward.1} parent=0 // pred_fallthru
    _
  // Predicated region
  $region50: #{discriminator_forward.1} parent=0 // pred_check
    _
  $region51: #{discriminator_forward.1} parent=0 // pred_check_branch
    %54 = sbr.rel (0) target = $region53
  $region52: #{discriminator_forward.1} parent=0 // pred_region
    _
  $region53: #{discriminator_forward.1} parent=0 // pred_fallthru
    _
  // Predicated region
  $region54: #{discriminator_forward.1} parent=0 // pred_check
    _
  $region55: #{discriminator_forward.1} parent=0 // pred_check_branch
    %56 = sbr.rel (0) target = $region57
  $region56: #{discriminator_forward.1} parent=0 // pred_region
    _
  $region57: #{discriminator_forward.1} parent=0 // pred_fallthru
    _
  // Predicated region
  $region58: #{discriminator_forward.1} parent=0 // pred_check
    _
  $region59: #{discriminator_forward.1} parent=0 // pred_check_branch
    %58 = sbr.rel (0) target = $region61
  $region60: #{discriminator_forward.1} parent=0 // pred_region
    _
  $region61: #{discriminator_forward.1} parent=0 // pred_fallthru
    _
  %v60 = vld [vmem:[%s0] sm:$0xff]
  %s61 = scalar_lea.vmem %s0, 8
  %v62 = vld [vmem:[%s61] sm:$0xff]
  %s63 = scalar_lea.vmem %s0, 16
  %v64 = vld [vmem:[%s63] sm:$0xff]
  %s65 = scalar_lea.vmem %s0, 24
  %v66 = vld [vmem:[%s65] sm:$0xff]
  %s67 = scalar_lea.vmem %s0, 32
  %v68 = vld [vmem:[%s67] sm:$0xff]
  %s69 = scalar_lea.vmem %s0, 40
  %v70 = vld [vmem:[%s69] sm:$0xff]
  %s71 = scalar_lea.vmem %s0, 48
  %v72 = vld [vmem:[%s71] sm:$0xff]
  %s73 = scalar_lea.vmem %s0, 56
  %v74 = vld [vmem:[%s73] sm:$0xff]
  %s75 = scalar_lea.vmem %s0, 64
  %v76 = vld [vmem:[%s75] sm:$0xff]
  %78 = vrot.lane.b32.xlu0 %v62, 16
  %v79 = vpop.permute.xlu0 %78
  %82 = vrot.lane.b32.xlu0 %v64, 32
  %v83 = vpop.permute.xlu0 %82
  %86 = vrot.lane.b32.xlu0 %v66, 48
  %v87 = vpop.permute.xlu0 %86
  %90 = vrot.lane.b32.xlu0 %v68, 64
  %v91 = vpop.permute.xlu0 %90
  %94 = vrot.lane.b32.xlu0 %v70, 80
  %v95 = vpop.permute.xlu0 %94
  %98 = vrot.lane.b32.xlu0 %v72, 96
  %v99 = vpop.permute.xlu0 %98
  %102 = vrot.lane.b32.xlu0 %v74, 112
  %v103 = vpop.permute.xlu0 %102
  %vm105 = vcmask 130048
  %v106 = vsel %vm105, %v60, %v79
  %vm107 = vcmask 261120
  %v108 = vsel %vm107, %v106, %v83
  %vm109 = vcmask 392192
  %v110 = vsel %vm109, %v108, %v87
  %vm111 = vcmask 523264
  %v112 = vsel %vm111, %v110, %v91
  %vm113 = vcmask 654336
  %v114 = vsel %vm113, %v112, %v95
  %vm115 = vcmask 785408
  %v116 = vsel %vm115, %v114, %v99
  %vm117 = vcmask 916480
  %v118 = vsel %vm117, %v116, %v103
  %120 = vrot.lane.b32.xlu0 %v60, 126
  %v121 = vpop.permute.xlu0 %120
  %123 = vrot.lane.b32.xlu0 %v62, 14
  %v124 = vpop.permute.xlu0 %123
  %126 = vrot.lane.b32.xlu0 %v64, 30
  %v127 = vpop.permute.xlu0 %126
  %129 = vrot.lane.b32.xlu0 %v66, 46
  %v130 = vpop.permute.xlu0 %129
  %132 = vrot.lane.b32.xlu0 %v68, 62
  %v133 = vpop.permute.xlu0 %132
  %135 = vrot.lane.b32.xlu0 %v70, 78
  %v136 = vpop.permute.xlu0 %135
  %138 = vrot.lane.b32.xlu0 %v72, 94
  %v139 = vpop.permute.xlu0 %138
  %141 = vrot.lane.b32.xlu0 %v74, 110
  %v142 = vpop.permute.xlu0 %141
  %v144 = vsel %vm105, %v121, %v124
  %v145 = vsel %vm107, %v144, %v127
  %v146 = vsel %vm109, %v145, %v130
  %v147 = vsel %vm111, %v146, %v133
  %v148 = vsel %vm113, %v147, %v136
  %v149 = vsel %vm115, %v148, %v139
  %v150 = vsel %vm117, %v149, %v142
  %151 = vrot.lane.b32.xlu0 %v64, 16
  %v152 = vpop.permute.xlu0 %151
  %154 = vrot.lane.b32.xlu0 %v66, 32
  %v155 = vpop.permute.xlu0 %154
  %157 = vrot.lane.b32.xlu0 %v68, 48
  %v158 = vpop.permute.xlu0 %157
  %160 = vrot.lane.b32.xlu0 %v70, 64
  %v161 = vpop.permute.xlu0 %160
  %163 = vrot.lane.b32.xlu0 %v72, 80
  %v164 = vpop.permute.xlu0 %163
  %166 = vrot.lane.b32.xlu0 %v74, 96
  %v167 = vpop.permute.xlu0 %166
  %170 = vrot.lane.b32.xlu0 %v76, 112
  %v171 = vpop.permute.xlu0 %170
  %v173 = vsel %vm105, %v62, %v152
  %v174 = vsel %vm107, %v173, %v155
  %v175 = vsel %vm109, %v174, %v158
  %v176 = vsel %vm111, %v175, %v161
  %v177 = vsel %vm113, %v176, %v164
  %v178 = vsel %vm115, %v177, %v167
  %v179 = vsel %vm117, %v178, %v171
  %180 = vrot.lane.b32.xlu0 %v62, 126
  %v181 = vpop.permute.xlu0 %180
  %183 = vrot.lane.b32.xlu0 %v64, 14
  %v184 = vpop.permute.xlu0 %183
  %186 = vrot.lane.b32.xlu0 %v66, 30
  %v187 = vpop.permute.xlu0 %186
  %189 = vrot.lane.b32.xlu0 %v68, 46
  %v190 = vpop.permute.xlu0 %189
  %192 = vrot.lane.b32.xlu0 %v70, 62
  %v193 = vpop.permute.xlu0 %192
  %195 = vrot.lane.b32.xlu0 %v72, 78
  %v196 = vpop.permute.xlu0 %195
  %198 = vrot.lane.b32.xlu0 %v74, 94
  %v199 = vpop.permute.xlu0 %198
  %201 = vrot.lane.b32.xlu0 %v76, 110
  %v202 = vpop.permute.xlu0 %201
  %v204 = vsel %vm105, %v181, %v184
  %v205 = vsel %vm107, %v204, %v187
  %v206 = vsel %vm109, %v205, %v190
  %v207 = vsel %vm111, %v206, %v193
  %v208 = vsel %vm113, %v207, %v196
  %v209 = vsel %vm115, %v208, %v199
  %v210 = vsel %vm117, %v209, %v202
  %s211 = scalar_lea.vmem %s0, 72
  %v212 = vld [vmem:[%s211] sm:$0xff]
  %s213 = scalar_lea.vmem %s0, 80
  %v214 = vld [vmem:[%s213] sm:$0xff]
  %s215 = scalar_lea.vmem %s0, 88
  %v216 = vld [vmem:[%s215] sm:$0xff]
  %s217 = scalar_lea.vmem %s0, 96
  %v218 = vld [vmem:[%s217] sm:$0xff]
  %s219 = scalar_lea.vmem %s0, 104
  %v220 = vld [vmem:[%s219] sm:$0xff]
  %s221 = scalar_lea.vmem %s0, 112
  %v222 = vld [vmem:[%s221] sm:$0xff]
  %s223 = scalar_lea.vmem %s0, 120
  %v224 = vld [vmem:[%s223] sm:$0xff]
  %s225 = scalar_lea.vmem %s0, 128
  %v226 = vld [vmem:[%s225] sm:$0xff]
  %s227 = scalar_lea.vmem %s0, 136
  %v228 = vld [vmem:[%s227] sm:$0xff]
  %230 = vrot.lane.b32.xlu0 %v214, 16
  %v231 = vpop.permute.xlu0 %230
  %234 = vrot.lane.b32.xlu0 %v216, 32
  %v235 = vpop.permute.xlu0 %234
  %238 = vrot.lane.b32.xlu0 %v218, 48
  %v239 = vpop.permute.xlu0 %238
  %242 = vrot.lane.b32.xlu0 %v220, 64
  %v243 = vpop.permute.xlu0 %242
  %246 = vrot.lane.b32.xlu0 %v222, 80
  %v247 = vpop.permute.xlu0 %246
  %250 = vrot.lane.b32.xlu0 %v224, 96
  %v251 = vpop.permute.xlu0 %250
  %254 = vrot.lane.b32.xlu0 %v226, 112
  %v255 = vpop.permute.xlu0 %254
  %v257 = vsel %vm105, %v212, %v231
  %v258 = vsel %vm107, %v257, %v235
  %v259 = vsel %vm109, %v258, %v239
  %v260 = vsel %vm111, %v259, %v243
  %v261 = vsel %vm113, %v260, %v247
  %v262 = vsel %vm115, %v261, %v251
  %v263 = vsel %vm117, %v262, %v255
  %265 = vrot.lane.b32.xlu0 %v212, 126
  %v266 = vpop.permute.xlu0 %265
  %268 = vrot.lane.b32.xlu0 %v214, 14
  %v269 = vpop.permute.xlu0 %268
  %271 = vrot.lane.b32.xlu0 %v216, 30
  %v272 = vpop.permute.xlu0 %271
  %274 = vrot.lane.b32.xlu0 %v218, 46
  %v275 = vpop.permute.xlu0 %274
  %277 = vrot.lane.b32.xlu0 %v220, 62
  %v278 = vpop.permute.xlu0 %277
  %280 = vrot.lane.b32.xlu0 %v222, 78
  %v281 = vpop.permute.xlu0 %280
  %283 = vrot.lane.b32.xlu0 %v224, 94
  %v284 = vpop.permute.xlu0 %283
  %286 = vrot.lane.b32.xlu0 %v226, 110
  %v287 = vpop.permute.xlu0 %286
  %v289 = vsel %vm105, %v266, %v269
  %v290 = vsel %vm107, %v289, %v272
  %v291 = vsel %vm109, %v290, %v275
  %v292 = vsel %vm111, %v291, %v278
  %v293 = vsel %vm113, %v292, %v281
  %v294 = vsel %vm115, %v293, %v284
  %v295 = vsel %vm117, %v294, %v287
  %296 = vrot.lane.b32.xlu0 %v216, 16
  %v297 = vpop.permute.xlu0 %296
  %299 = vrot.lane.b32.xlu0 %v218, 32
  %v300 = vpop.permute.xlu0 %299
  %302 = vrot.lane.b32.xlu0 %v220, 48
  %v303 = vpop.permute.xlu0 %302
  %305 = vrot.lane.b32.xlu0 %v222, 64
  %v306 = vpop.permute.xlu0 %305
  %308 = vrot.lane.b32.xlu0 %v224, 80
  %v309 = vpop.permute.xlu0 %308
  %311 = vrot.lane.b32.xlu0 %v226, 96
  %v312 = vpop.permute.xlu0 %311
  %315 = vrot.lane.b32.xlu0 %v228, 112
  %v316 = vpop.permute.xlu0 %315
  %v318 = vsel %vm105, %v214, %v297
  %v319 = vsel %vm107, %v318, %v300
  %v320 = vsel %vm109, %v319, %v303
  %v321 = vsel %vm111, %v320, %v306
  %v322 = vsel %vm113, %v321, %v309
  %v323 = vsel %vm115, %v322, %v312
  %v324 = vsel %vm117, %v323, %v316
  %325 = vrot.lane.b32.xlu0 %v214, 126
  %v326 = vpop.permute.xlu0 %325
  %328 = vrot.lane.b32.xlu0 %v216, 14
  %v329 = vpop.permute.xlu0 %328
  %331 = vrot.lane.b32.xlu0 %v218, 30
  %v332 = vpop.permute.xlu0 %331
  %334 = vrot.lane.b32.xlu0 %v220, 46
  %v335 = vpop.permute.xlu0 %334
  %337 = vrot.lane.b32.xlu0 %v222, 62
  %v338 = vpop.permute.xlu0 %337
  %340 = vrot.lane.b32.xlu0 %v224, 78
  %v341 = vpop.permute.xlu0 %340
  %343 = vrot.lane.b32.xlu0 %v226, 94
  %v344 = vpop.permute.xlu0 %343
  %346 = vrot.lane.b32.xlu0 %v228, 110
  %v347 = vpop.permute.xlu0 %346
  %v349 = vsel %vm105, %v326, %v329
  %v350 = vsel %vm107, %v349, %v332
  %v351 = vsel %vm109, %v350, %v335
  %v352 = vsel %vm111, %v351, %v338
  %v353 = vsel %vm113, %v352, %v341
  %v354 = vsel %vm115, %v353, %v344
  %v355 = vsel %vm117, %v354, %v347
  %s356 = scalar_lea.vmem %s0, 144
  %v357 = vld [vmem:[%s356] sm:$0xff]
  %s358 = scalar_lea.vmem %s0, 152
  %v359 = vld [vmem:[%s358] sm:$0xff]
  %s360 = scalar_lea.vmem %s0, 160
  %v361 = vld [vmem:[%s360] sm:$0xff]
  %s362 = scalar_lea.vmem %s0, 168
  %v363 = vld [vmem:[%s362] sm:$0xff]
  %s364 = scalar_lea.vmem %s0, 176
  %v365 = vld [vmem:[%s364] sm:$0xff]
  %s366 = scalar_lea.vmem %s0, 184
  %v367 = vld [vmem:[%s366] sm:$0xff]
  %s368 = scalar_lea.vmem %s0, 192
  %v369 = vld [vmem:[%s368] sm:$0xff]
  %s370 = scalar_lea.vmem %s0, 200
  %v371 = vld [vmem:[%s370] sm:$0xff]
  %s372 = scalar_lea.vmem %s0, 208
  %v373 = vld [vmem:[%s372] sm:$0xff]
  %375 = vrot.lane.b32.xlu0 %v359, 16
  %v376 = vpop.permute.xlu0 %375
  %379 = vrot.lane.b32.xlu0 %v361, 32
  %v380 = vpop.permute.xlu0 %379
  %383 = vrot.lane.b32.xlu0 %v363, 48
  %v384 = vpop.permute.xlu0 %383
  %387 = vrot.lane.b32.xlu0 %v365, 64
  %v388 = vpop.permute.xlu0 %387
  %391 = vrot.lane.b32.xlu0 %v367, 80
  %v392 = vpop.permute.xlu0 %391
  %395 = vrot.lane.b32.xlu0 %v369, 96
  %v396 = vpop.permute.xlu0 %395
  %399 = vrot.lane.b32.xlu0 %v371, 112
  %v400 = vpop.permute.xlu0 %399
  %v402 = vsel %vm105, %v357, %v376
  %v403 = vsel %vm107, %v402, %v380
  %v404 = vsel %vm109, %v403, %v384
  %v405 = vsel %vm111, %v404, %v388
  %v406 = vsel %vm113, %v405, %v392
  %v407 = vsel %vm115, %v406, %v396
  %v408 = vsel %vm117, %v407, %v400
  %410 = vrot.lane.b32.xlu0 %v357, 126
  %v411 = vpop.permute.xlu0 %410
  %413 = vrot.lane.b32.xlu0 %v359, 14
  %v414 = vpop.permute.xlu0 %413
  %416 = vrot.lane.b32.xlu0 %v361, 30
  %v417 = vpop.permute.xlu0 %416
  %419 = vrot.lane.b32.xlu0 %v363, 46
  %v420 = vpop.permute.xlu0 %419
  %422 = vrot.lane.b32.xlu0 %v365, 62
  %v423 = vpop.permute.xlu0 %422
  %425 = vrot.lane.b32.xlu0 %v367, 78
  %v426 = vpop.permute.xlu0 %425
  %428 = vrot.lane.b32.xlu0 %v369, 94
  %v429 = vpop.permute.xlu0 %428
  %431 = vrot.lane.b32.xlu0 %v371, 110
  %v432 = vpop.permute.xlu0 %431
  %v434 = vsel %vm105, %v411, %v414
  %v435 = vsel %vm107, %v434, %v417
  %v436 = vsel %vm109, %v435, %v420
  %v437 = vsel %vm111, %v436, %v423
  %v438 = vsel %vm113, %v437, %v426
  %v439 = vsel %vm115, %v438, %v429
  %v440 = vsel %vm117, %v439, %v432
  %441 = vrot.lane.b32.xlu0 %v361, 16
  %v442 = vpop.permute.xlu0 %441
  %444 = vrot.lane.b32.xlu0 %v363, 32
  %v445 = vpop.permute.xlu0 %444
  %447 = vrot.lane.b32.xlu0 %v365, 48
  %v448 = vpop.permute.xlu0 %447
  %450 = vrot.lane.b32.xlu0 %v367, 64
  %v451 = vpop.permute.xlu0 %450
  %453 = vrot.lane.b32.xlu0 %v369, 80
  %v454 = vpop.permute.xlu0 %453
  %456 = vrot.lane.b32.xlu0 %v371, 96
  %v457 = vpop.permute.xlu0 %456
  %460 = vrot.lane.b32.xlu0 %v373, 112
  %v461 = vpop.permute.xlu0 %460
  %v463 = vsel %vm105, %v359, %v442
  %v464 = vsel %vm107, %v463, %v445
  %v465 = vsel %vm109, %v464, %v448
  %v466 = vsel %vm111, %v465, %v451
  %v467 = vsel %vm113, %v466, %v454
  %v468 = vsel %vm115, %v467, %v457
  %v469 = vsel %vm117, %v468, %v461
  %470 = vrot.lane.b32.xlu0 %v359, 126
  %v471 = vpop.permute.xlu0 %470
  %473 = vrot.lane.b32.xlu0 %v361, 14
  %v474 = vpop.permute.xlu0 %473
  %476 = vrot.lane.b32.xlu0 %v363, 30
  %v477 = vpop.permute.xlu0 %476
  %479 = vrot.lane.b32.xlu0 %v365, 46
  %v480 = vpop.permute.xlu0 %479
  %482 = vrot.lane.b32.xlu0 %v367, 62
  %v483 = vpop.permute.xlu0 %482
  %485 = vrot.lane.b32.xlu0 %v369, 78
  %v486 = vpop.permute.xlu0 %485
  %488 = vrot.lane.b32.xlu0 %v371, 94
  %v489 = vpop.permute.xlu0 %488
  %491 = vrot.lane.b32.xlu0 %v373, 110
  %v492 = vpop.permute.xlu0 %491
  %v494 = vsel %vm105, %v471, %v474
  %v495 = vsel %vm107, %v494, %v477
  %v496 = vsel %vm109, %v495, %v480
  %v497 = vsel %vm111, %v496, %v483
  %v498 = vsel %vm113, %v497, %v486
  %v499 = vsel %vm115, %v498, %v489
  %v500 = vsel %vm117, %v499, %v492
  %s501 = scalar_lea.vmem %s0, 216
  %v502 = vld [vmem:[%s501] sm:$0xff]
  %s503 = scalar_lea.vmem %s0, 224
  %v504 = vld [vmem:[%s503] sm:$0xff]
  %s505 = scalar_lea.vmem %s0, 232
  %v506 = vld [vmem:[%s505] sm:$0xff]
  %s507 = scalar_lea.vmem %s0, 240
  %v508 = vld [vmem:[%s507] sm:$0xff]
  %s509 = scalar_lea.vmem %s0, 248
  %v510 = vld [vmem:[%s509] sm:$0xff]
  %s511 = scalar_lea.vmem %s0, 256
  %v512 = vld [vmem:[%s511] sm:$0xff]
  %s513 = scalar_lea.vmem %s0, 264
  %v514 = vld [vmem:[%s513] sm:$0xff]
  %s515 = scalar_lea.vmem %s0, 272
  %v516 = vld [vmem:[%s515] sm:$0xff]
  %s517 = scalar_lea.vmem %s0, 280
  %v518 = vld [vmem:[%s517] sm:$0xff]
  %520 = vrot.lane.b32.xlu0 %v504, 16
  %v521 = vpop.permute.xlu0 %520
  %524 = vrot.lane.b32.xlu0 %v506, 32
  %v525 = vpop.permute.xlu0 %524
  %528 = vrot.lane.b32.xlu0 %v508, 48
  %v529 = vpop.permute.xlu0 %528
  %532 = vrot.lane.b32.xlu0 %v510, 64
  %v533 = vpop.permute.xlu0 %532
  %536 = vrot.lane.b32.xlu0 %v512, 80
  %v537 = vpop.permute.xlu0 %536
  %540 = vrot.lane.b32.xlu0 %v514, 96
  %v541 = vpop.permute.xlu0 %540
  %544 = vrot.lane.b32.xlu0 %v516, 112
  %v545 = vpop.permute.xlu0 %544
  %v547 = vsel %vm105, %v502, %v521
  %v548 = vsel %vm107, %v547, %v525
  %v549 = vsel %vm109, %v548, %v529
  %v550 = vsel %vm111, %v549, %v533
  %v551 = vsel %vm113, %v550, %v537
  %v552 = vsel %vm115, %v551, %v541
  %v553 = vsel %vm117, %v552, %v545
  %555 = vrot.lane.b32.xlu0 %v502, 126
  %v556 = vpop.permute.xlu0 %555
  %558 = vrot.lane.b32.xlu0 %v504, 14
  %v559 = vpop.permute.xlu0 %558
  %561 = vrot.lane.b32.xlu0 %v506, 30
  %v562 = vpop.permute.xlu0 %561
  %564 = vrot.lane.b32.xlu0 %v508, 46
  %v565 = vpop.permute.xlu0 %564
  %567 = vrot.lane.b32.xlu0 %v510, 62
  %v568 = vpop.permute.xlu0 %567
  %570 = vrot.lane.b32.xlu0 %v512, 78
  %v571 = vpop.permute.xlu0 %570
  %573 = vrot.lane.b32.xlu0 %v514, 94
  %v574 = vpop.permute.xlu0 %573
  %576 = vrot.lane.b32.xlu0 %v516, 110
  %v577 = vpop.permute.xlu0 %576
  %v579 = vsel %vm105, %v556, %v559
  %v580 = vsel %vm107, %v579, %v562
  %v581 = vsel %vm109, %v580, %v565
  %v582 = vsel %vm111, %v581, %v568
  %v583 = vsel %vm113, %v582, %v571
  %v584 = vsel %vm115, %v583, %v574
  %v585 = vsel %vm117, %v584, %v577
  %586 = vrot.lane.b32.xlu0 %v506, 16
  %v587 = vpop.permute.xlu0 %586
  %589 = vrot.lane.b32.xlu0 %v508, 32
  %v590 = vpop.permute.xlu0 %589
  %592 = vrot.lane.b32.xlu0 %v510, 48
  %v593 = vpop.permute.xlu0 %592
  %595 = vrot.lane.b32.xlu0 %v512, 64
  %v596 = vpop.permute.xlu0 %595
  %598 = vrot.lane.b32.xlu0 %v514, 80
  %v599 = vpop.permute.xlu0 %598
  %601 = vrot.lane.b32.xlu0 %v516, 96
  %v602 = vpop.permute.xlu0 %601
  %605 = vrot.lane.b32.xlu0 %v518, 112
  %v606 = vpop.permute.xlu0 %605
  %v608 = vsel %vm105, %v504, %v587
  %v609 = vsel %vm107, %v608, %v590
  %v610 = vsel %vm109, %v609, %v593
  %v611 = vsel %vm111, %v610, %v596
  %v612 = vsel %vm113, %v611, %v599
  %v613 = vsel %vm115, %v612, %v602
  %v614 = vsel %vm117, %v613, %v606
  %615 = vrot.lane.b32.xlu0 %v504, 126
  %v616 = vpop.permute.xlu0 %615
  %618 = vrot.lane.b32.xlu0 %v506, 14
  %v619 = vpop.permute.xlu0 %618
  %621 = vrot.lane.b32.xlu0 %v508, 30
  %v622 = vpop.permute.xlu0 %621
  %624 = vrot.lane.b32.xlu0 %v510, 46
  %v625 = vpop.permute.xlu0 %624
  %627 = vrot.lane.b32.xlu0 %v512, 62
  %v628 = vpop.permute.xlu0 %627
  %630 = vrot.lane.b32.xlu0 %v514, 78
  %v631 = vpop.permute.xlu0 %630
  %633 = vrot.lane.b32.xlu0 %v516, 94
  %v634 = vpop.permute.xlu0 %633
  %636 = vrot.lane.b32.xlu0 %v518, 110
  %v637 = vpop.permute.xlu0 %636
  %v639 = vsel %vm105, %v616, %v619
  %v640 = vsel %vm107, %v639, %v622
  %v641 = vsel %vm109, %v640, %v625
  %v642 = vsel %vm111, %v641, %v628
  %v643 = vsel %vm113, %v642, %v631
  %v644 = vsel %vm115, %v643, %v634
  %v645 = vsel %vm117, %v644, %v637
  %v646 = vpack.c.bf16 %v263, %v118
  %v647 = vpack.c.bf16 %v295, %v150
  %v648 = vpack.c.bf16 %v553, %v408
  %v649 = vpack.c.bf16 %v585, %v440
  %v650 = vpack.c.bf16 %v324, %v179
  %v651 = vpack.c.bf16 %v355, %v210
  %v652 = vpack.c.bf16 %v614, %v469
  %v653 = vpack.c.bf16 %v645, %v500
  %v654 = vld [vmem:[%s1] sm:$0xf]
  %v655 = vld [vmem:[%s2] sm:$0xff]
  %657 = vset.pattern.permute.xlu0 0
  %658 = vperm.xlu0 %657, %v655
  %v659 = vpop.permute.xlu0 %658
  %661 = vmatprep.subr.bf16.mxu0 0
  %662 = vmatpush1.bf16.msra.mxu0 %v653
  %663 = vmatprep.subr.bf16.mxu0 0
  %664 = vmatpush1.bf16.msra.mxu0 %v652
  %665 = vmatprep.subr.bf16.mxu0 0
  %666 = vmatpush1.bf16.msra.mxu0 %v651
  %667 = vmatprep.subr.bf16.mxu0 0
  %668 = vmatpush1.bf16.msra.mxu0 %v650
  %669 = vmatprep.subr.bf16.mxu0 0
  %670 = vmatpush1.bf16.msra.mxu0 %v649
  %671 = vmatprep.subr.bf16.mxu0 0
  %672 = vmatpush1.bf16.msra.mxu0 %v648
  %673 = vmatprep.subr.bf16.mxu0 0
  %674 = vmatpush1.bf16.msra.mxu0 %v647
  %675 = vmatprep.subr.bf16.mxu0 0
  %676 = vmatpush1.bf16.msra.mxu0 %v646
  %677 = vmatprep.subr.bf16.mxu0 0
  %678 = vmatpush2.bf16.msra.mxu0 0
  %679 = vmatprep.subr.bf16.mxu0 0
  %680 = vmatpush2.bf16.msra.mxu0 0
  %681 = vmatprep.subr.bf16.mxu0 0
  %682 = vmatpush2.bf16.msra.mxu0 0
  %683 = vmatprep.subr.bf16.mxu0 0
  %684 = vmatpush2.bf16.msra.mxu0 0
  %685 = vmatprep.subr.bf16.mxu0 0
  %686 = vmatpush2.bf16.msra.mxu0 0
  %687 = vmatprep.subr.bf16.mxu0 0
  %688 = vmatpush2.bf16.msra.mxu0 0
  %689 = vmatprep.subr.bf16.mxu0 0
  %690 = vmatpush2.bf16.msra.mxu0 0
  %691 = vmatprep.subr.bf16.mxu0 0
  %692 = vmatpush2.bf16.msra.mxu0 0
  %693 = vmatprep.mubr.bf16.mxu0 0
  %694 = vmatmul.mubr.bf16.gmra.mxu0 %v654
  %v695 = vpop.f32.mrf.mxu0
  %v696 = vadd.f32 %v659, %v695
  %v697 = vpop.f32.mrf.mxu0
  %v698 = vpop.f32.mrf.mxu0
  %v699 = vpop.f32.mrf.mxu0
  %700 = vdwg.mxu0
  %vm701 = vcmp.gt.f32.partialorder %v696, 0.0
  %v702 = vmul.f32 %v696, 0.2
  %v703 = vsel %vm701, %v696, %v702
  %705 = vrot.lane.b32.xlu0 %v703, 110
  %v706 = vpop.permute.xlu0 %705
  %708 = vrot.lane.b32.xlu0 %v703, 112
  %v709 = vpop.permute.xlu0 %708
  %711 = vrot.lane.b32.xlu0 %v703, 108
  %v712 = vpop.permute.xlu0 %711
  %714 = vrot.lane.b32.xlu0 %v703, 106
  %v715 = vpop.permute.xlu0 %714
  %vm717 = vcmask 15360
  %v718 = vsel %vm717, %v706, %v709
  %vm719 = vcmask 31744
  %v720 = vsel %vm719, %v718, %v706
  %vm721 = vcmask 48128
  %v722 = vsel %vm721, %v720, %v712
  %vm723 = vcmask 64512
  %v724 = vsel %vm723, %v722, %v715
  %v725 = vsel %vm717, %v709, %v706
  %v726 = vsel %vm719, %v725, %v712
  %v727 = vsel %vm721, %v726, %v715
  %v728 = vsel %vm723, %v727, %v712
  %729 = vrot.lane.b32.xlu0 %v703, 126
  %v730 = vpop.permute.xlu0 %729
  %732 = vrot.lane.b32.xlu0 %v703, 124
  %v733 = vpop.permute.xlu0 %732
  %735 = vrot.lane.b32.xlu0 %v703, 122
  %v736 = vpop.permute.xlu0 %735
  %v738 = vsel %vm717, %v730, %v703
  %v739 = vsel %vm719, %v738, %v730
  %v740 = vsel %vm721, %v739, %v733
  %v741 = vsel %vm723, %v740, %v736
  %v742 = vsel %vm717, %v703, %v730
  %v743 = vsel %vm719, %v742, %v733
  %v744 = vsel %vm721, %v743, %v736
  %v745 = vsel %vm723, %v744, %v733
  %746 = vrot.lane.b32.xlu0 %v703, 94
  %v747 = vpop.permute.xlu0 %746
  %749 = vrot.lane.b32.xlu0 %v703, 96
  %v750 = vpop.permute.xlu0 %749
  %752 = vrot.lane.b32.xlu0 %v703, 92
  %v753 = vpop.permute.xlu0 %752
  %755 = vrot.lane.b32.xlu0 %v703, 90
  %v756 = vpop.permute.xlu0 %755
  %v758 = vsel %vm717, %v747, %v750
  %v759 = vsel %vm719, %v758, %v747
  %v760 = vsel %vm721, %v759, %v753
  %v761 = vsel %vm723, %v760, %v756
  %v762 = vsel %vm717, %v750, %v747
  %v763 = vsel %vm719, %v762, %v753
  %v764 = vsel %vm721, %v763, %v756
  %v765 = vsel %vm723, %v764, %v753
  %766 = vrot.lane.b32.xlu0 %v703, 78
  %v767 = vpop.permute.xlu0 %766
  %769 = vrot.lane.b32.xlu0 %v703, 80
  %v770 = vpop.permute.xlu0 %769
  %772 = vrot.lane.b32.xlu0 %v703, 76
  %v773 = vpop.permute.xlu0 %772
  %775 = vrot.lane.b32.xlu0 %v703, 74
  %v776 = vpop.permute.xlu0 %775
  %v778 = vsel %vm717, %v767, %v770
  %v779 = vsel %vm719, %v778, %v767
  %v780 = vsel %vm721, %v779, %v773
  %v781 = vsel %vm723, %v780, %v776
  %v782 = vsel %vm717, %v770, %v767
  %v783 = vsel %vm719, %v782, %v773
  %v784 = vsel %vm721, %v783, %v776
  %v785 = vsel %vm723, %v784, %v773
  %786 = vrot.lane.b32.xlu0 %v703, 62
  %v787 = vpop.permute.xlu0 %786
  %789 = vrot.lane.b32.xlu0 %v703, 64
  %v790 = vpop.permute.xlu0 %789
  %792 = vrot.lane.b32.xlu0 %v703, 60
  %v793 = vpop.permute.xlu0 %792
  %795 = vrot.lane.b32.xlu0 %v703, 58
  %v796 = vpop.permute.xlu0 %795
  %v798 = vsel %vm717, %v787, %v790
  %v799 = vsel %vm719, %v798, %v787
  %v800 = vsel %vm721, %v799, %v793
  %v801 = vsel %vm723, %v800, %v796
  %v802 = vsel %vm717, %v790, %v787
  %v803 = vsel %vm719, %v802, %v793
  %v804 = vsel %vm721, %v803, %v796
  %v805 = vsel %vm723, %v804, %v793
  %806 = vrot.lane.b32.xlu0 %v703, 46
  %v807 = vpop.permute.xlu0 %806
  %809 = vrot.lane.b32.xlu0 %v703, 48
  %v810 = vpop.permute.xlu0 %809
  %812 = vrot.lane.b32.xlu0 %v703, 44
  %v813 = vpop.permute.xlu0 %812
  %815 = vrot.lane.b32.xlu0 %v703, 42
  %v816 = vpop.permute.xlu0 %815
  %v818 = vsel %vm717, %v807, %v810
  %v819 = vsel %vm719, %v818, %v807
  %v820 = vsel %vm721, %v819, %v813
  %v821 = vsel %vm723, %v820, %v816
  %v822 = vsel %vm717, %v810, %v807
  %v823 = vsel %vm719, %v822, %v813
  %v824 = vsel %vm721, %v823, %v816
  %v825 = vsel %vm723, %v824, %v813
  %826 = vrot.lane.b32.xlu0 %v703, 30
  %v827 = vpop.permute.xlu0 %826
  %829 = vrot.lane.b32.xlu0 %v703, 32
  %v830 = vpop.permute.xlu0 %829
  %832 = vrot.lane.b32.xlu0 %v703, 28
  %v833 = vpop.permute.xlu0 %832
  %835 = vrot.lane.b32.xlu0 %v703, 26
  %v836 = vpop.permute.xlu0 %835
  %v838 = vsel %vm717, %v827, %v830
  %v839 = vsel %vm719, %v838, %v827
  %v840 = vsel %vm721, %v839, %v833
  %v841 = vsel %vm723, %v840, %v836
  %v842 = vsel %vm717, %v830, %v827
  %v843 = vsel %vm719, %v842, %v833
  %v844 = vsel %vm721, %v843, %v836
  %v845 = vsel %vm723, %v844, %v833
  %846 = vrot.lane.b32.xlu0 %v703, 14
  %v847 = vpop.permute.xlu0 %846
  %849 = vrot.lane.b32.xlu0 %v703, 16
  %v850 = vpop.permute.xlu0 %849
  %852 = vrot.lane.b32.xlu0 %v703, 12
  %v853 = vpop.permute.xlu0 %852
  %855 = vrot.lane.b32.xlu0 %v703, 10
  %v856 = vpop.permute.xlu0 %855
  %v858 = vsel %vm717, %v847, %v850
  %v859 = vsel %vm719, %v858, %v847
  %v860 = vsel %vm721, %v859, %v853
  %v861 = vsel %vm723, %v860, %v856
  %v862 = vsel %vm717, %v850, %v847
  %v863 = vsel %vm719, %v862, %v853
  %v864 = vsel %vm721, %v863, %v856
  %v865 = vsel %vm723, %v864, %v853
  %867 = vrot.lane.b32.xlu0 %v724, 8
  %v868 = vpop.permute.xlu0 %867
  %871 = vrot.lane.b32.xlu0 %v781, 16
  %v872 = vpop.permute.xlu0 %871
  %875 = vrot.lane.b32.xlu0 %v821, 24
  %v876 = vpop.permute.xlu0 %875
  %v878 = vsel %vm723, %v724, %v868
  %v879 = vsel %vm105, %v878, %v872
  %vm880 = vcmask 195584
  %v881 = vsel %vm880, %v879, %v876
  %883 = vrot.lane.b32.xlu0 %v728, 8
  %v884 = vpop.permute.xlu0 %883
  %887 = vrot.lane.b32.xlu0 %v785, 16
  %v888 = vpop.permute.xlu0 %887
  %891 = vrot.lane.b32.xlu0 %v825, 24
  %v892 = vpop.permute.xlu0 %891
  %v894 = vsel %vm723, %v728, %v884
  %v895 = vsel %vm105, %v894, %v888
  %v896 = vsel %vm880, %v895, %v892
  %897 = vrot.lane.b32.xlu0 %v724, 126
  %v898 = vpop.permute.xlu0 %897
  %900 = vrot.lane.b32.xlu0 %v724, 6
  %v901 = vpop.permute.xlu0 %900
  %903 = vrot.lane.b32.xlu0 %v781, 14
  %v904 = vpop.permute.xlu0 %903
  %906 = vrot.lane.b32.xlu0 %v821, 22
  %v907 = vpop.permute.xlu0 %906
  %v909 = vsel %vm723, %v898, %v901
  %v910 = vsel %vm105, %v909, %v904
  %v911 = vsel %vm880, %v910, %v907
  %912 = vrot.lane.b32.xlu0 %v728, 126
  %v913 = vpop.permute.xlu0 %912
  %915 = vrot.lane.b32.xlu0 %v728, 6
  %v916 = vpop.permute.xlu0 %915
  %918 = vrot.lane.b32.xlu0 %v785, 14
  %v919 = vpop.permute.xlu0 %918
  %921 = vrot.lane.b32.xlu0 %v825, 22
  %v922 = vpop.permute.xlu0 %921
  %v924 = vsel %vm723, %v913, %v916
  %v925 = vsel %vm105, %v924, %v919
  %v926 = vsel %vm880, %v925, %v922
  %928 = vrot.lane.b32.xlu0 %v761, 8
  %v929 = vpop.permute.xlu0 %928
  %932 = vrot.lane.b32.xlu0 %v801, 16
  %v933 = vpop.permute.xlu0 %932
  %936 = vrot.lane.b32.xlu0 %v841, 24
  %v937 = vpop.permute.xlu0 %936
  %v939 = vsel %vm723, %v741, %v929
  %v940 = vsel %vm105, %v939, %v933
  %v941 = vsel %vm880, %v940, %v937
  %943 = vrot.lane.b32.xlu0 %v765, 8
  %v944 = vpop.permute.xlu0 %943
  %947 = vrot.lane.b32.xlu0 %v805, 16
  %v948 = vpop.permute.xlu0 %947
  %951 = vrot.lane.b32.xlu0 %v845, 24
  %v952 = vpop.permute.xlu0 %951
  %v954 = vsel %vm723, %v745, %v944
  %v955 = vsel %vm105, %v954, %v948
  %v956 = vsel %vm880, %v955, %v952
  %958 = vrot.lane.b32.xlu0 %v741, 126
  %v959 = vpop.permute.xlu0 %958
  %961 = vrot.lane.b32.xlu0 %v761, 6
  %v962 = vpop.permute.xlu0 %961
  %964 = vrot.lane.b32.xlu0 %v801, 14
  %v965 = vpop.permute.xlu0 %964
  %967 = vrot.lane.b32.xlu0 %v841, 22
  %v968 = vpop.permute.xlu0 %967
  %v970 = vsel %vm723, %v959, %v962
  %v971 = vsel %vm105, %v970, %v965
  %v972 = vsel %vm880, %v971, %v968
  %974 = vrot.lane.b32.xlu0 %v745, 126
  %v975 = vpop.permute.xlu0 %974
  %977 = vrot.lane.b32.xlu0 %v765, 6
  %v978 = vpop.permute.xlu0 %977
  %980 = vrot.lane.b32.xlu0 %v805, 14
  %v981 = vpop.permute.xlu0 %980
  %983 = vrot.lane.b32.xlu0 %v845, 22
  %v984 = vpop.permute.xlu0 %983
  %v986 = vsel %vm723, %v975, %v978
  %v987 = vsel %vm105, %v986, %v981
  %v988 = vsel %vm880, %v987, %v984
  %989 = vrot.lane.b32.xlu0 %v781, 8
  %v990 = vpop.permute.xlu0 %989
  %992 = vrot.lane.b32.xlu0 %v821, 16
  %v993 = vpop.permute.xlu0 %992
  %996 = vrot.lane.b32.xlu0 %v861, 24
  %v997 = vpop.permute.xlu0 %996
  %v999 = vsel %vm723, %v724, %v990
  %v1000 = vsel %vm105, %v999, %v993
  %v1001 = vsel %vm880, %v1000, %v997
  %1002 = vrot.lane.b32.xlu0 %v785, 8
  %v1003 = vpop.permute.xlu0 %1002
  %1005 = vrot.lane.b32.xlu0 %v825, 16
  %v1006 = vpop.permute.xlu0 %1005
  %1009 = vrot.lane.b32.xlu0 %v865, 24
  %v1010 = vpop.permute.xlu0 %1009
  %v1012 = vsel %vm723, %v728, %v1003
  %v1013 = vsel %vm105, %v1012, %v1006
  %v1014 = vsel %vm880, %v1013, %v1010
  %1015 = vrot.lane.b32.xlu0 %v781, 6
  %v1016 = vpop.permute.xlu0 %1015
  %1018 = vrot.lane.b32.xlu0 %v821, 14
  %v1019 = vpop.permute.xlu0 %1018
  %1021 = vrot.lane.b32.xlu0 %v861, 22
  %v1022 = vpop.permute.xlu0 %1021
  %v1024 = vsel %vm723, %v898, %v1016
  %v1025 = vsel %vm105, %v1024, %v1019
  %v1026 = vsel %vm880, %v1025, %v1022
  %1027 = vrot.lane.b32.xlu0 %v785, 6
  %v1028 = vpop.permute.xlu0 %1027
  %1030 = vrot.lane.b32.xlu0 %v825, 14
  %v1031 = vpop.permute.xlu0 %1030
  %1033 = vrot.lane.b32.xlu0 %v865, 22
  %v1034 = vpop.permute.xlu0 %1033
  %v1036 = vsel %vm723, %v913, %v1028
  %v1037 = vsel %vm105, %v1036, %v1031
  %v1038 = vsel %vm880, %v1037, %v1034
  %1039 = vrot.lane.b32.xlu0 %v801, 8
  %v1040 = vpop.permute.xlu0 %1039
  %1042 = vrot.lane.b32.xlu0 %v841, 16
  %v1043 = vpop.permute.xlu0 %1042
  %v1045 = vsel %vm723, %v761, %v1040
  %v1046 = vsel %vm105, %v1045, %v1043
  %v1047 = vsel %vm880, %v1046, %v937
  %1048 = vrot.lane.b32.xlu0 %v805, 8
  %v1049 = vpop.permute.xlu0 %1048
  %1051 = vrot.lane.b32.xlu0 %v845, 16
  %v1052 = vpop.permute.xlu0 %1051
  %v1054 = vsel %vm723, %v765, %v1049
  %v1055 = vsel %vm105, %v1054, %v1052
  %v1056 = vsel %vm880, %v1055, %v952
  %1057 = vrot.lane.b32.xlu0 %v761, 126
  %v1058 = vpop.permute.xlu0 %1057
  %1060 = vrot.lane.b32.xlu0 %v801, 6
  %v1061 = vpop.permute.xlu0 %1060
  %1063 = vrot.lane.b32.xlu0 %v841, 14
  %v1064 = vpop.permute.xlu0 %1063
  %v1066 = vsel %vm723, %v1058, %v1061
  %v1067 = vsel %vm105, %v1066, %v1064
  %v1068 = vsel %vm880, %v1067, %v968
  %1069 = vrot.lane.b32.xlu0 %v765, 126
  %v1070 = vpop.permute.xlu0 %1069
  %1072 = vrot.lane.b32.xlu0 %v805, 6
  %v1073 = vpop.permute.xlu0 %1072
  %1075 = vrot.lane.b32.xlu0 %v845, 14
  %v1076 = vpop.permute.xlu0 %1075
  %v1078 = vsel %vm723, %v1070, %v1073
  %v1079 = vsel %vm105, %v1078, %v1076
  %v1080 = vsel %vm880, %v1079, %v984
  %v1081 = vpack.c.bf16 %v896, %v881
  %v1082 = vpack.c.bf16 %v926, %v911
  %v1083 = vpack.c.bf16 %v956, %v941
  %v1084 = vpack.c.bf16 %v988, %v972
  %v1085 = vpack.c.bf16 %v1014, %v1001
  %v1086 = vpack.c.bf16 %v1038, %v1026
  %v1087 = vpack.c.bf16 %v1056, %v1047
  %v1088 = vpack.c.bf16 %v1080, %v1068
  %v1089 = vld [vmem:[%s3] sm:$0xf]
  %v1090 = vld [vmem:[%s4] sm:$0xff]
  %1092 = vset.pattern.permute.xlu0 0
  %1093 = vperm.xlu0 %1092, %v1090
  %v1094 = vpop.permute.xlu0 %1093
  %1096 = vmatprep.subr.bf16.mxu0 0
  %1097 = vmatpush1.bf16.msra.mxu0 %v1088
  %1098 = vmatprep.subr.bf16.mxu0 0
  %1099 = vmatpush1.bf16.msra.mxu0 %v1087
  %1100 = vmatprep.subr.bf16.mxu0 0
  %1101 = vmatpush1.bf16.msra.mxu0 %v1086
  %1102 = vmatprep.subr.bf16.mxu0 0
  %1103 = vmatpush1.bf16.msra.mxu0 %v1085
  %1104 = vmatprep.subr.bf16.mxu0 0
  %1105 = vmatpush1.bf16.msra.mxu0 %v1084
  %1106 = vmatprep.subr.bf16.mxu0 0
  %1107 = vmatpush1.bf16.msra.mxu0 %v1083
  %1108 = vmatprep.subr.bf16.mxu0 0
  %1109 = vmatpush1.bf16.msra.mxu0 %v1082
  %1110 = vmatprep.subr.bf16.mxu0 0
  %1111 = vmatpush1.bf16.msra.mxu0 %v1081
  %1112 = vmatprep.subr.bf16.mxu0 0
  %1113 = vmatpush2.bf16.msra.mxu0 0
  %1114 = vmatprep.subr.bf16.mxu0 0
  %1115 = vmatpush2.bf16.msra.mxu0 0
  %1116 = vmatprep.subr.bf16.mxu0 0
  %1117 = vmatpush2.bf16.msra.mxu0 0
  %1118 = vmatprep.subr.bf16.mxu0 0
  %1119 = vmatpush2.bf16.msra.mxu0 0
  %1120 = vmatprep.subr.bf16.mxu0 0
  %1121 = vmatpush2.bf16.msra.mxu0 0
  %1122 = vmatprep.subr.bf16.mxu0 0
  %1123 = vmatpush2.bf16.msra.mxu0 0
  %1124 = vmatprep.subr.bf16.mxu0 0
  %1125 = vmatpush2.bf16.msra.mxu0 0
  %1126 = vmatprep.subr.bf16.mxu0 0
  %1127 = vmatpush2.bf16.msra.mxu0 0
  %1128 = vmatprep.mubr.bf16.mxu0 0
  %1129 = vmatmul.mubr.bf16.gmra.mxu0 %v1089
  %v1130 = vpop.f32.mrf.mxu0
  %v1131 = vadd.f32 %v1094, %v1130
  %v1132 = vpop.f32.mrf.mxu0
  %v1133 = vpop.f32.mrf.mxu0
  %v1134 = vpop.f32.mrf.mxu0
  %1135 = vdwg.mxu0
  %vm1136 = vcmp.gt.f32.partialorder %v1131, 0.0
  %v1137 = vmul.f32 %v1131, 0.2
  %v1138 = vsel %vm1136, %v1131, %v1137
  %1140 = vrot.lane.b32.xlu0 %v1138, 126
  %v1141 = vpop.permute.xlu0 %1140
  %v1143 = vadd.f32 %v1138, %v1141
  %v1144 = vmax.f32 %v1138, %v1141
  %1145 = vrot.lane.b32.xlu0 %v1138, 124
  %v1146 = vpop.permute.xlu0 %1145
  %v1148 = vadd.f32 %v1143, %v1146
  %v1149 = vmax.f32 %v1144, %v1146
  %1150 = vrot.lane.b32.xlu0 %v1138, 122
  %v1151 = vpop.permute.xlu0 %1150
  %v1153 = vadd.f32 %v1148, %v1151
  %v1154 = vmax.f32 %v1149, %v1151
  %1155 = vrot.lane.b32.xlu0 %v1138, 120
  %v1156 = vpop.permute.xlu0 %1155
  %v1158 = vadd.f32 %v1153, %v1156
  %v1159 = vmax.f32 %v1154, %v1156
  %1160 = vrot.lane.b32.xlu0 %v1138, 118
  %v1161 = vpop.permute.xlu0 %1160
  %v1163 = vadd.f32 %v1158, %v1161
  %v1164 = vmax.f32 %v1159, %v1161
  %1165 = vrot.lane.b32.xlu0 %v1138, 116
  %v1166 = vpop.permute.xlu0 %1165
  %v1168 = vadd.f32 %v1163, %v1166
  %v1169 = vmax.f32 %v1164, %v1166
  %1170 = vrot.lane.b32.xlu0 %v1138, 114
  %v1171 = vpop.permute.xlu0 %1170
  %v1173 = vadd.f32 %v1168, %v1171
  %v1174 = vmax.f32 %v1169, %v1171
  %1175 = vrot.lane.b32.xlu0 %v1138, 112
  %v1176 = vpop.permute.xlu0 %1175
  %v1178 = vadd.f32 %v1173, %v1176
  %v1179 = vmax.f32 %v1174, %v1176
  %1180 = vrot.lane.b32.xlu0 %v1138, 110
  %v1181 = vpop.permute.xlu0 %1180
  %v1183 = vadd.f32 %v1178, %v1181
  %v1184 = vmax.f32 %v1179, %v1181
  %1185 = vrot.lane.b32.xlu0 %v1138, 108
  %v1186 = vpop.permute.xlu0 %1185
  %v1188 = vadd.f32 %v1183, %v1186
  %v1189 = vmax.f32 %v1184, %v1186
  %1190 = vrot.lane.b32.xlu0 %v1138, 106
  %v1191 = vpop.permute.xlu0 %1190
  %v1193 = vadd.f32 %v1188, %v1191
  %v1194 = vmax.f32 %v1189, %v1191
  %1195 = vrot.lane.b32.xlu0 %v1138, 104
  %v1196 = vpop.permute.xlu0 %1195
  %v1198 = vadd.f32 %v1193, %v1196
  %v1199 = vmax.f32 %v1194, %v1196
  %1200 = vrot.lane.b32.xlu0 %v1138, 102
  %v1201 = vpop.permute.xlu0 %1200
  %v1203 = vadd.f32 %v1198, %v1201
  %v1204 = vmax.f32 %v1199, %v1201
  %1205 = vrot.lane.b32.xlu0 %v1138, 100
  %v1206 = vpop.permute.xlu0 %1205
  %v1208 = vadd.f32 %v1203, %v1206
  %v1209 = vmax.f32 %v1204, %v1206
  %1210 = vrot.lane.b32.xlu0 %v1138, 98
  %v1211 = vpop.permute.xlu0 %1210
  %v1213 = vadd.f32 %v1208, %v1211
  %v1214 = vmax.f32 %v1209, %v1211
  %v1215 = vmul.f32 %v1213, 0.0625
  %v1216 = vld [vmem:[%s5] sm:$0xff]
  %1218 = vset.pattern.permute.xlu0 0
  %1219 = vperm.xlu0 %1218, %v1216
  %v1220 = vpop.permute.xlu0 %1219
  %v1222 = vmul.f32 %v1220, %v1215
  %v1223 = vsel %vm717, %v1222, 0.0
  %v1224 = vrot.slane %v1223, 4
  %v1225 = vadd.f32 %v1223, %v1224
  %v1226 = vrot.slane %v1225, 2
  %v1227 = vadd.f32 %v1225, %v1226
  %v1228 = vrot.slane %v1227, 1
  %v1229 = vadd.f32 %v1227, %v1228
  %v1230 = vld [vmem:[#allocation2] sm:$0x1]
  %1232 = vset.pattern.permute.xlu0 0
  %1233 = vperm.xlu0 %1232, %v1230
  %v1234 = vpop.permute.xlu0 %1233
  %v1236 = vlaneseq
  %v1237 = vshrl.u32 %v1236, 7
  %v1238 = vsub.s32 0, %v1237
  %v1239 = vrot.slane %v1234, %v1238
  %v1240 = vadd.f32 %v1229, %v1239
  %v1241 = vld [vmem:[%s7] sm:$0xff]
  %1243 = vset.pattern.permute.xlu0 0
  %1244 = vperm.xlu0 %1243, %v1241
  %v1245 = vpop.permute.xlu0 %1244
  %v1247 = vmul.f32 %v1245, %v1214
  %v1248 = vsel %vm717, %v1247, 0.0
  %v1249 = vrot.slane %v1248, 4
  %v1250 = vadd.f32 %v1248, %v1249
  %v1251 = vrot.slane %v1250, 2
  %v1252 = vadd.f32 %v1250, %v1251
  %v1253 = vrot.slane %v1252, 1
  %v1254 = vadd.f32 %v1252, %v1253
  %v1255 = vld [vmem:[#allocation3] sm:$0x1]
  %1257 = vset.pattern.permute.xlu0 0
  %1258 = vperm.xlu0 %1257, %v1255
  %v1259 = vpop.permute.xlu0 %1258
  %v1261 = vlaneseq
  %v1262 = vshrl.u32 %v1261, 7
  %v1263 = vsub.s32 0, %v1262
  %v1264 = vrot.slane %v1259, %v1263
  %v1265 = vadd.f32 %v1254, %v1264
  %vm1266 = vcmask 1040384
  %v1267 = vsel %vm1266, %v1240, %v1265
  %vm1268 = vcmask 9216
  %1269 = vst.msk [vmem:[%s16] sm:$0x3] %vm1268, %v1267
  %v1270 = vld [vmem:[%s11] sm:$0xff]
  %v1271 = vld [vmem:[%s9] sm:$0x1]
  %v1273 = vlaneseq
  %v1274 = vshrl.u32 %v1273, 7
  %v1275 = vsub.s32 0, %v1274
  %v1276 = vrot.slane %v1271, %v1275
  %v1278 = vmul.f32 %v1270, %v1276
  %v1279 = vld [vmem:[%s10] sm:$0x1]
  %v1281 = vlaneseq
  %v1282 = vshrl.u32 %v1281, 7
  %v1283 = vsub.s32 0, %v1282
  %v1284 = vrot.slane %v1279, %v1283
  %1285 = vrot.lane.b32.xlu0 %v1284, 8
  %v1286 = vpop.permute.xlu0 %1285
  %v1288 = vmul.f32 %v1270, %v1286
  %1290 = vrot.lane.b32.xlu0 %v1288, 120
  %v1291 = vpop.permute.xlu0 %1290
  %v1293 = vadd.f32 %v1278, %v1291
  %v1294 = vld [vmem:[%s12] sm:$0xff]
  %1296 = vset.pattern.permute.xlu0 0
  %1297 = vperm.xlu0 %1296, %v1294
  %v1298 = vpop.permute.xlu0 %1297
  %v1301 = vsel %vm723, %v1293, 0
  %1303 = vmatprep.subr.mxu0 0.0
  %1304 = vmatpush1.msra.mxu0 0.0
  %1305 = vmatprep.subr.mxu0 0.0
  %1306 = vmatpush1.msra.mxu0 0.0
  %1307 = vmatprep.subr.mxu0 0.0
  %1308 = vmatpush1.msra.mxu0 0.0
  %1309 = vmatprep.subr.mxu0 0.0
  %1310 = vmatpush1.msra.mxu0 0.0
  %1311 = vmatprep.subr.mxu0 0.0
  %1312 = vmatpush1.msra.mxu0 0.0
  %1313 = vmatprep.subr.mxu0 0.0
  %1314 = vmatpush1.msra.mxu0 0.0
  %1315 = vmatprep.subr.mxu0 0.0
  %1316 = vmatpush1.msra.mxu0 0.0
  %1317 = vmatprep.subr.mxu0 0.0
  %1318 = vmatpush1.msra.mxu0 0.0
  %1319 = vmatprep.subr.mxu0 0.0
  %1320 = vmatpush1.msra.mxu0 0.0
  %1321 = vmatprep.subr.mxu0 0.0
  %1322 = vmatpush1.msra.mxu0 0.0
  %1323 = vmatprep.subr.mxu0 0.0
  %1324 = vmatpush1.msra.mxu0 0.0
  %1325 = vmatprep.subr.mxu0 0.0
  %1326 = vmatpush1.msra.mxu0 0.0
  %1327 = vmatprep.subr.mxu0 0.0
  %1328 = vmatpush1.msra.mxu0 0.0
  %1329 = vmatprep.subr.mxu0 0.0
  %1330 = vmatpush1.msra.mxu0 0.0
  %1331 = vmatprep.subr.mxu0 0.0
  %1332 = vmatpush1.msra.mxu0 0.0
  %1333 = vmatprep.subr.mxu0 0.0
  %1334 = vmatpush1.msra.mxu0 %v1138
  %1335 = vmatprep.subr.mxu0 0.0
  %1336 = vmatpush2.msra.mxu0 0.0
  %1337 = vmatprep.subr.mxu0 0.0
  %1338 = vmatpush2.msra.mxu0 0.0
  %1339 = vmatprep.subr.mxu0 0.0
  %1340 = vmatpush2.msra.mxu0 0.0
  %1341 = vmatprep.subr.mxu0 0.0
  %1342 = vmatpush2.msra.mxu0 0.0
  %1343 = vmatprep.subr.mxu0 0.0
  %1344 = vmatpush2.msra.mxu0 0.0
  %1345 = vmatprep.subr.mxu0 0.0
  %1346 = vmatpush2.msra.mxu0 0.0
  %1347 = vmatprep.subr.mxu0 0.0
  %1348 = vmatpush2.msra.mxu0 0.0
  %1349 = vmatprep.subr.mxu0 0.0
  %1350 = vmatpush2.msra.mxu0 0.0
  %1351 = vmatprep.subr.mxu0 0.0
  %1352 = vmatpush2.msra.mxu0 0.0
  %1353 = vmatprep.subr.mxu0 0.0
  %1354 = vmatpush2.msra.mxu0 0.0
  %1355 = vmatprep.subr.mxu0 0.0
  %1356 = vmatpush2.msra.mxu0 0.0
  %1357 = vmatprep.subr.mxu0 0.0
  %1358 = vmatpush2.msra.mxu0 0.0
  %1359 = vmatprep.subr.mxu0 0.0
  %1360 = vmatpush2.msra.mxu0 0.0
  %1361 = vmatprep.subr.mxu0 0.0
  %1362 = vmatpush2.msra.mxu0 0.0
  %1363 = vmatprep.subr.mxu0 0.0
  %1364 = vmatpush2.msra.mxu0 0.0
  %1365 = vmatprep.subr.mxu0 0.0
  %1366 = vmatpush2.msra.mxu0 0.0
  %1367 = vmatprep.mubr.f32.mxu0 0.0
  %1368 = vmatmul.mubr.f32.gmra.mxu0 %v1301
  %v1369 = vpop.f32.mrf.mxu0
  %v1370 = vadd.f32 %v1298, %v1369
  %v1371 = vpop.f32.mrf.mxu0
  %1372 = vdwg.mxu0
  %vm1373 = vcmp.gt.f32.partialorder %v1370, 0.0
  %v1374 = vmul.f32 %v1370, 0.2
  %v1375 = vsel %vm1373, %v1370, %v1374
  %v1376 = vsel %vm107, %v1375, 0.0
  %v1377 = vrot.slane %v1376, 4
  %v1378 = vadd.f32 %v1376, %v1377
  %v1379 = vrot.slane %v1378, 2
  %v1380 = vadd.f32 %v1378, %v1379
  %v1381 = vrot.slane %v1380, 1
  %v1382 = vadd.f32 %v1380, %v1381
  %vm1383 = vcmask 253952
  %1384 = vst.msk [vmem:[%s17] sm:$0x1] %vm1383, %v1382
  %1386 = vrot.lane.b32.xlu0 %v1375, 118
  %v1387 = vpop.permute.xlu0 %1386
  %1389 = vrot.lane.b32.xlu0 %v1375, 122
  %v1390 = vpop.permute.xlu0 %1389
  %1392 = vrot.lane.b32.xlu0 %v1375, 126
  %v1393 = vpop.permute.xlu0 %1392
  %v1395 = vsel %vm717, %v1387, %v1390
  %v1396 = vsel %vm719, %v1395, %v1390
  %v1397 = vsel %vm721, %v1396, %v1390
  %v1398 = vsel %vm723, %v1397, %v1390
  %vm1399 = vcmask 80896
  %v1400 = vsel %vm1399, %v1398, %v1393
  %1401 = vrot.lane.b32.xlu0 %v1375, 2
  %v1402 = vpop.permute.xlu0 %1401
  %1404 = vrot.lane.b32.xlu0 %v1375, 6
  %v1405 = vpop.permute.xlu0 %1404
  %v1407 = vsel %vm717, %v1393, %v1402
  %v1408 = vsel %vm719, %v1407, %v1402
  %v1409 = vsel %vm721, %v1408, %v1402
  %v1410 = vsel %vm723, %v1409, %v1402
  %v1411 = vsel %vm1399, %v1410, %v1405
  %1412 = vrot.lane.b32.xlu0 %v1375, 110
  %v1413 = vpop.permute.xlu0 %1412
  %1415 = vrot.lane.b32.xlu0 %v1375, 114
  %v1416 = vpop.permute.xlu0 %1415
  %v1418 = vsel %vm717, %v1413, %v1416
  %v1419 = vsel %vm719, %v1418, %v1416
  %v1420 = vsel %vm721, %v1419, %v1416
  %v1421 = vsel %vm723, %v1420, %v1416
  %v1422 = vsel %vm1399, %v1421, %v1387
  %1423 = vrot.lane.b32.xlu0 %v1375, 102
  %v1424 = vpop.permute.xlu0 %1423
  %1426 = vrot.lane.b32.xlu0 %v1375, 106
  %v1427 = vpop.permute.xlu0 %1426
  %v1429 = vsel %vm717, %v1424, %v1427
  %v1430 = vsel %vm719, %v1429, %v1427
  %v1431 = vsel %vm721, %v1430, %v1427
  %v1432 = vsel %vm723, %v1431, %v1427
  %v1433 = vsel %vm1399, %v1432, %v1413
  %1435 = vrot.lane.b32.xlu0 %v1411, 6
  %v1436 = vpop.permute.xlu0 %1435
  %1439 = vrot.lane.b32.xlu0 %v1400, 12
  %v1440 = vpop.permute.xlu0 %1439
  %v1442 = vsel %vm721, %v1400, %v1436
  %vm1443 = vcmask 97280
  %v1444 = vsel %vm1443, %v1442, %v1440
  %1445 = vrot.lane.b32.xlu0 %v1400, 126
  %v1446 = vpop.permute.xlu0 %1445
  %1448 = vrot.lane.b32.xlu0 %v1411, 4
  %v1449 = vpop.permute.xlu0 %1448
  %1451 = vrot.lane.b32.xlu0 %v1400, 10
  %v1452 = vpop.permute.xlu0 %1451
  %v1454 = vsel %vm721, %v1446, %v1449
  %v1455 = vsel %vm1443, %v1454, %v1452
  %1456 = vrot.lane.b32.xlu0 %v1400, 124
  %v1457 = vpop.permute.xlu0 %1456
  %1459 = vrot.lane.b32.xlu0 %v1411, 2
  %v1460 = vpop.permute.xlu0 %1459
  %1462 = vrot.lane.b32.xlu0 %v1400, 8
  %v1463 = vpop.permute.xlu0 %1462
  %v1465 = vsel %vm721, %v1457, %v1460
  %v1466 = vsel %vm1443, %v1465, %v1463
  %1467 = vrot.lane.b32.xlu0 %v1400, 122
  %v1468 = vpop.permute.xlu0 %1467
  %1470 = vrot.lane.b32.xlu0 %v1400, 6
  %v1471 = vpop.permute.xlu0 %1470
  %v1473 = vsel %vm721, %v1468, %v1411
  %v1474 = vsel %vm1443, %v1473, %v1471
  %1476 = vrot.lane.b32.xlu0 %v1422, 12
  %v1477 = vpop.permute.xlu0 %1476
  %v1479 = vsel %vm721, %v1411, %v1471
  %v1480 = vsel %vm1443, %v1479, %v1477
  %1481 = vrot.lane.b32.xlu0 %v1411, 126
  %v1482 = vpop.permute.xlu0 %1481
  %1484 = vrot.lane.b32.xlu0 %v1400, 4
  %v1485 = vpop.permute.xlu0 %1484
  %1487 = vrot.lane.b32.xlu0 %v1422, 10
  %v1488 = vpop.permute.xlu0 %1487
  %v1490 = vsel %vm721, %v1482, %v1485
  %v1491 = vsel %vm1443, %v1490, %v1488
  %1492 = vrot.lane.b32.xlu0 %v1411, 124
  %v1493 = vpop.permute.xlu0 %1492
  %1495 = vrot.lane.b32.xlu0 %v1400, 2
  %v1496 = vpop.permute.xlu0 %1495
  %1498 = vrot.lane.b32.xlu0 %v1422, 8
  %v1499 = vpop.permute.xlu0 %1498
  %v1501 = vsel %vm721, %v1493, %v1496
  %v1502 = vsel %vm1443, %v1501, %v1499
  %1503 = vrot.lane.b32.xlu0 %v1411, 122
  %v1504 = vpop.permute.xlu0 %1503
  %1506 = vrot.lane.b32.xlu0 %v1422, 6
  %v1507 = vpop.permute.xlu0 %1506
  %v1509 = vsel %vm721, %v1504, %v1400
  %v1510 = vsel %vm1443, %v1509, %v1507
  %1512 = vrot.lane.b32.xlu0 %v1433, 12
  %v1513 = vpop.permute.xlu0 %1512
  %v1515 = vsel %vm721, %v1400, %v1507
  %v1516 = vsel %vm1443, %v1515, %v1513
  %1517 = vrot.lane.b32.xlu0 %v1422, 4
  %v1518 = vpop.permute.xlu0 %1517
  %1520 = vrot.lane.b32.xlu0 %v1433, 10
  %v1521 = vpop.permute.xlu0 %1520
  %v1523 = vsel %vm721, %v1446, %v1518
  %v1524 = vsel %vm1443, %v1523, %v1521
  %1525 = vrot.lane.b32.xlu0 %v1422, 2
  %v1526 = vpop.permute.xlu0 %1525
  %1528 = vrot.lane.b32.xlu0 %v1433, 8
  %v1529 = vpop.permute.xlu0 %1528
  %v1531 = vsel %vm721, %v1457, %v1526
  %v1532 = vsel %vm1443, %v1531, %v1529
  %1533 = vrot.lane.b32.xlu0 %v1433, 6
  %v1534 = vpop.permute.xlu0 %1533
  %v1536 = vsel %vm721, %v1468, %v1422
  %v1537 = vsel %vm1443, %v1536, %v1534
  %v1538 = vsel %vm721, %v1422, %v1534
  %v1539 = vsel %vm1443, %v1538, %v1477
  %1540 = vrot.lane.b32.xlu0 %v1422, 126
  %v1541 = vpop.permute.xlu0 %1540
  %1543 = vrot.lane.b32.xlu0 %v1433, 4
  %v1544 = vpop.permute.xlu0 %1543
  %v1546 = vsel %vm721, %v1541, %v1544
  %v1547 = vsel %vm1443, %v1546, %v1488
  %1548 = vrot.lane.b32.xlu0 %v1422, 124
  %v1549 = vpop.permute.xlu0 %1548
  %1551 = vrot.lane.b32.xlu0 %v1433, 2
  %v1552 = vpop.permute.xlu0 %1551
  %v1554 = vsel %vm721, %v1549, %v1552
  %v1555 = vsel %vm1443, %v1554, %v1499
  %1556 = vrot.lane.b32.xlu0 %v1422, 122
  %v1557 = vpop.permute.xlu0 %1556
  %v1559 = vsel %vm721, %v1557, %v1433
  %v1560 = vsel %vm1443, %v1559, %v1507
  %v1561 = vpack.c.bf16 %v1455, %v1444
  %v1562 = vpack.c.bf16 %v1474, %v1466
  %v1563 = vpack.c.bf16 %v1491, %v1480
  %v1564 = vpack.c.bf16 %v1510, %v1502
  %v1565 = vpack.c.bf16 %v1524, %v1516
  %v1566 = vpack.c.bf16 %v1537, %v1532
  %v1567 = vpack.c.bf16 %v1547, %v1539
  %v1568 = vpack.c.bf16 %v1560, %v1555
  %v1569 = vld [vmem:[%s13] sm:$0x1]
  %v1570 = vld [vmem:[#allocation4] sm:$0x1]
  %1572 = vset.pattern.permute.xlu0 0
  %1573 = vperm.xlu0 %1572, %v1570
  %v1574 = vpop.permute.xlu0 %1573
  %v1576 = vlaneseq
  %v1577 = vshrl.u32 %v1576, 7
  %v1578 = vsub.s32 0, %v1577
  %v1579 = vrot.slane %v1574, %v1578
  %1580 = vmatprep.subr.bf16.mxu0 0
  %1581 = vmatpush1.bf16.msra.mxu0 %v1568
  %1582 = vmatprep.subr.bf16.mxu0 0
  %1583 = vmatpush1.bf16.msra.mxu0 %v1567
  %1584 = vmatprep.subr.bf16.mxu0 0
  %1585 = vmatpush1.bf16.msra.mxu0 %v1566
  %1586 = vmatprep.subr.bf16.mxu0 0
  %1587 = vmatpush1.bf16.msra.mxu0 %v1565
  %1588 = vmatprep.subr.bf16.mxu0 0
  %1589 = vmatpush1.bf16.msra.mxu0 %v1564
  %1590 = vmatprep.subr.bf16.mxu0 0
  %1591 = vmatpush1.bf16.msra.mxu0 %v1563
  %1592 = vmatprep.subr.bf16.mxu0 0
  %1593 = vmatpush1.bf16.msra.mxu0 %v1562
  %1594 = vmatprep.subr.bf16.mxu0 0
  %1595 = vmatpush1.bf16.msra.mxu0 %v1561
  %1596 = vmatprep.subr.bf16.mxu0 0
  %1597 = vmatpush2.bf16.msra.mxu0 0
  %1598 = vmatprep.subr.bf16.mxu0 0
  %1599 = vmatpush2.bf16.msra.mxu0 0
  %1600 = vmatprep.subr.bf16.mxu0 0
  %1601 = vmatpush2.bf16.msra.mxu0 0
  %1602 = vmatprep.subr.bf16.mxu0 0
  %1603 = vmatpush2.bf16.msra.mxu0 0
  %1604 = vmatprep.subr.bf16.mxu0 0
  %1605 = vmatpush2.bf16.msra.mxu0 0
  %1606 = vmatprep.subr.bf16.mxu0 0
  %1607 = vmatpush2.bf16.msra.mxu0 0
  %1608 = vmatprep.subr.bf16.mxu0 0
  %1609 = vmatpush2.bf16.msra.mxu0 0
  %1610 = vmatprep.subr.bf16.mxu0 0
  %1611 = vmatpush2.bf16.msra.mxu0 0
  %1612 = vmatprep.mubr.bf16.mxu0 0
  %1613 = vmatmul.mubr.bf16.gmra.mxu0 %v1569
  %v1614 = vpop.f32.mrf.mxu0
  %v1615 = vadd.f32 %v1579, %v1614
  %v1616 = vpop.f32.mrf.mxu0
  %v1617 = vpop.f32.mrf.mxu0
  %v1618 = vpop.f32.mrf.mxu0
  %1619 = vdwg.mxu0
  %vm1620 = vcmask 139264
  %1621 = vst.msk [vmem:[%s15] sm:$0x1] %vm1620, %v1615
  // Predicated region
  $region62: #{discriminator_forward.1} parent=0 // pred_check
    _
  $region63: #{discriminator_forward.1} parent=0 // pred_check_branch
    %1623 = sbr.rel (0) target = $region65
  $region64: #{discriminator_forward.1} parent=0 // pred_region
    _
  $region65: #{discriminator_forward.1} parent=0 // pred_fallthru
    _
  // Predicated region
  $region66: #{discriminator_forward.1} parent=0 // pred_check
    _
  $region67: #{discriminator_forward.1} parent=0 // pred_check_branch
    %1625 = sbr.rel (0) target = $region69
  $region68: #{discriminator_forward.1} parent=0 // pred_region
    _
  $region69: #{discriminator_forward.1} parent=0 // pred_fallthru
    _
  // Predicated region
  $region70: #{discriminator_forward.1} parent=0 // pred_check
    _
  $region71: #{discriminator_forward.1} parent=0 // pred_check_branch
    %1627 = sbr.rel (0) target = $region73
  $region72: #{discriminator_forward.1} parent=0 // pred_region
    _
  $region73: #{discriminator_forward.1} parent=0 // pred_fallthru
    _
  // Predicated region
  $region74: #{discriminator_forward.1} parent=0 // pred_check
    _
  $region75: #{discriminator_forward.1} parent=0 // pred_check_branch
    %1629 = sbr.rel (0) target = $region77
  $region76: #{discriminator_forward.1} parent=0 // pred_region
    _
  $region77: #{discriminator_forward.1} parent=0 // pred_fallthru
    _
  // Predicated region
  $region78: #{discriminator_forward.1} parent=0 // pred_check
    _
  $region79: #{discriminator_forward.1} parent=0 // pred_check_branch
    %1631 = sbr.rel (0) target = $region81
  $region80: #{discriminator_forward.1} parent=0 // pred_region
    _
  $region81: #{discriminator_forward.1} parent=0 // pred_fallthru
    _
  // Predicated region
  $region82: #{discriminator_forward.1} parent=0 // pred_check
    _
  $region83: #{discriminator_forward.1} parent=0 // pred_check_branch
    %1633 = sbr.rel (0) target = $region85
  $region84: #{discriminator_forward.1} parent=0 // pred_region
    _
  $region85: #{discriminator_forward.1} parent=0 // pred_fallthru
    _

</llo_original>
